<compile_context>
chip_gen: v6e
topology: v6e:2x2x1
jax: 0.10.0
libtpu: 0.0.40
codegen_flags: <defaults>
</compile_context>

<pallas_src>
import functools

import jax
import jax.numpy as jnp
import numpy as np
from jax.experimental import pallas as pl
from jax.experimental.pallas import tpu as pltpu

# ---- hyperparameters (small but consistent with the module) ----
NUM_CLASSES = 6
MAX_PERSONS = 5
HIDDEN = 32                        # LSTM hidden size (small-shape stand-in)
NUM_LAYERS = 2
INPUT_SIZE = MAX_PERSONS * 17 * 2  # 170
EMB1 = 256                         # keypoint_embed hidden dim (hardcoded in module)
EMB2 = 128                         # keypoint_embed output dim / LSTM input size
CLS_HID = 64                       # classifier hidden dim (hardcoded in module)
BP = 8                             # batch padded to one sublane tile (8 rows)
KPAD = 256                         # feature dim 170 zero-padded to a lane-dense 256
G = 4 * HIDDEN                     # 128 (gate block width per direction)

# ---- packed-weight blob layout (all row offsets are multiples of 8 sublanes) ----
WA = 256                           # blob A lane width
A_EMB_W1 = 0                       # (KPAD, 256)  emb_w1, rows 170:256 zero
A_EMB_B1 = A_EMB_W1 + KPAD         # (1, 256)
A_WIH0   = A_EMB_B1 + 8            # (128, 256)   [l0 fwd i f g o | l0 rev i f g o]
A_B0     = A_WIH0 + EMB2           # (1, 256)
A_WIH1T  = A_B0 + 8                # (32, 256)    l1 w_ih rows for the fwd half of layer-0 out
A_WIH1B  = A_WIH1T + HIDDEN        # (32, 256)    l1 w_ih rows for the rev half of layer-0 out
A_B1     = A_WIH1B + HIDDEN        # (1, 256)
ROWS_A   = A_B1 + 8                # 472 rows  (~472 KiB)

WB = 128                           # blob B lane width
B_EMB_W2 = 0                       # (256, 128)
B_EMB_B2 = B_EMB_W2 + EMB1         # (1, 128)
B_WHH0F  = B_EMB_B2 + 8            # (32, 128)
B_WHH0R  = B_WHH0F + HIDDEN        # (32, 128)
B_WHH1F  = B_WHH0R + HIDDEN        # (32, 128)
B_CLS_W1 = B_WHH1F + HIDDEN        # (64, 64 -> 128 cols, zero-padded)
B_CLS_B1 = B_CLS_W1 + 2 * HIDDEN   # (1, 64 -> 128 cols)
B_CLS_W2 = B_CLS_B1 + 8            # (64 -> 128 rows, 6 -> 128 cols, zero-padded)
B_CLS_B2 = B_CLS_W2 + WB           # (1, 6 -> 128 cols)
ROWS_B   = B_CLS_B2 + 8            # 568 rows  (~284 KiB)


# ---------------- fused Pallas kernel ----------------

def _lstm_cell(gates, c_prev, H):
    """PyTorch gate order (i, f, g, o). `gates` is (BP, 4H) pre-activation.

    Activations are done full-vreg (2 EUP passes) then lane-sliced; the 32-lane gate
    slices cost a few XLU lane-rotates per cell on the serial c/h chain.
    # TODO(synk): audit vrot count on the chain with a bundle dump and re-order gate lanes
    # if >2 rotates per cell survive.
    """
    sg = jax.nn.sigmoid(gates)
    th = jnp.tanh(gates)
    i = sg[:, 0 * H:1 * H]
    f = sg[:, 1 * H:2 * H]
    g = th[:, 2 * H:3 * H]
    o = sg[:, 3 * H:4 * H]
    c = f * c_prev + i * g
    h = o * jnp.tanh(c)
    return h, c


def _fused_forward_kernel(T, x_ref, wa_ref, wb_ref, out_ref, f0_ref, r0_ref):
    f32 = jnp.float32
    H = HIDDEN

    # ---- keypoint_embed: Linear(170,256)+ReLU, Linear(256,128)+ReLU (K lane-dense) ----
    x = x_ref[...]                                                            # (T*BP, 256)
    eh = jnp.maximum(
        jnp.dot(x, wa_ref[A_EMB_W1:A_EMB_W1 + KPAD, :], preferred_element_type=f32)
        + wa_ref[A_EMB_B1:A_EMB_B1 + 1, :], 0.0)                              # (T*BP, 256)
    emb = jnp.maximum(
        jnp.dot(eh, wb_ref[B_EMB_W2:B_EMB_W2 + EMB1, :], preferred_element_type=f32)
        + wb_ref[B_EMB_B2:B_EMB_B2 + 1, :], 0.0)                              # (T*BP, 128)

    # ---- LSTM layer 0: input-side gates, both directions, all timesteps, one matmul ----
    # column layout: [fwd i f g o (0:G) | rev i f g o (G:2G)]
    gi0 = (jnp.dot(emb, wa_ref[A_WIH0:A_WIH0 + EMB2, :], preferred_element_type=f32)
           + wa_ref[A_B0:A_B0 + 1, :])                                        # (T*BP, 256)

    whh0f = wb_ref[B_WHH0F:B_WHH0F + H, :]
    whh0r = wb_ref[B_WHH0R:B_WHH0R + H, :]
    zeros = jnp.zeros((BP, H), f32)
    hf, cf = zeros, zeros
    hr, cr = zeros, zeros
    for s in range(T):                       # fully unrolled; static tile-aligned slices only
        rf = s * BP                          # forward direction processes time s
        rr = (T - 1 - s) * BP                # reverse direction processes time T-1-s
        gf = gi0[rf:rf + BP, 0:G] + jnp.dot(hf, whh0f, preferred_element_type=f32)
        gr = gi0[rr:rr + BP, G:2 * G] + jnp.dot(hr, whh0r, preferred_element_type=f32)
        hf, cf = _lstm_cell(gf, cf, H)
        hr, cr = _lstm_cell(gr, cr, H)
        f0_ref[rf:rf + BP, :] = hf           # layer-0 fwd output, stored in time order
        r0_ref[rr:rr + BP, :] = hr           # layer-0 rev output, stored in time order

    # ---- LSTM layer 1 input-side gates for ALL timesteps, batched OUT of the recurrence ----
    # (keeps the serial layer-1 chain down to one recurrent dot per step; matters on the
    #  in-order MRF result path of v5e/v6e)
    gi1 = (jnp.dot(f0_ref[...], wa_ref[A_WIH1T:A_WIH1T + H, :], preferred_element_type=f32)
           + jnp.dot(r0_ref[...], wa_ref[A_WIH1B:A_WIH1B + H, :], preferred_element_type=f32)
           + wa_ref[A_B1:A_B1 + 1, :])                                        # (T*BP, 256)

    # forward direction: full scan, only the final hidden state is needed
    whh1f = wb_ref[B_WHH1F:B_WHH1F + H, :]
    h1f, c1f = zeros, zeros
    for t in range(T):
        g1 = gi1[t * BP:(t + 1) * BP, 0:G] + jnp.dot(h1f, whh1f, preferred_element_type=f32)
        h1f, c1f = _lstm_cell(g1, c1f, H)

    # reverse direction: the model only consumes lstm_out[:, -1], which for the reverse scan
    # is its FIRST step (time T-1) starting from the zero state -> single cell evaluation,
    # no recurrent matmul.  NOTE: this shortcut is invalid if the full layer-1 output
    # sequence were ever needed.
    g1r = gi1[(T - 1) * BP:T * BP, G:2 * G]
    h1r, _ = _lstm_cell(g1r, zeros, H)

    # ---- classifier: Linear(2H,64)+ReLU, Linear(64,num_classes) ----
    # avoid a lane-concat of [h1f | h1r]: the first classifier weight is split by rows.
    hc = jnp.maximum(
        jnp.dot(h1f, wb_ref[B_CLS_W1:B_CLS_W1 + H, :], preferred_element_type=f32)
        + jnp.dot(h1r, wb_ref[B_CLS_W1 + H:B_CLS_W1 + 2 * H, :], preferred_element_type=f32)
        + wb_ref[B_CLS_B1:B_CLS_B1 + 1, :], 0.0)             # (BP, 128); cols 64: are zero
    # cls_w2 is zero-padded to (128, 128) so no lane slicing is needed; output cols
    # NUM_CLASSES: are exactly zero.
    out_ref[...] = (jnp.dot(hc, wb_ref[B_CLS_W2:B_CLS_W2 + WB, :], preferred_element_type=f32)
                    + wb_ref[B_CLS_B2:B_CLS_B2 + 1, :])


# ---------------- one-time parameter packing (NOT in the jitted per-call path) ----------------

def pack_params(p):
    """Pack all weights into two contiguous lane-dense f32 blobs (done once at load time)."""
    H = HIDDEN
    wa = np.zeros((ROWS_A, WA), np.float32)
    wb = np.zeros((ROWS_B, WB), np.float32)

    wa[A_EMB_W1:A_EMB_W1 + INPUT_SIZE, :] = np.asarray(p["emb_w1"])   # rows 170:256 stay 0
    wa[A_EMB_B1, :] = np.asarray(p["emb_b1"])[0]
    wa[A_WIH0:A_WIH0 + EMB2, 0:G] = np.asarray(p["l0_wih_f"])
    wa[A_WIH0:A_WIH0 + EMB2, G:2 * G] = np.asarray(p["l0_wih_r"])
    wa[A_B0, 0:G] = np.asarray(p["l0_b_f"])[0]
    wa[A_B0, G:2 * G] = np.asarray(p["l0_b_r"])[0]
    wa[A_WIH1T:A_WIH1T + H, 0:G] = np.asarray(p["l1_wih_f"])[:H]
    wa[A_WIH1T:A_WIH1T + H, G:2 * G] = np.asarray(p["l1_wih_r"])[:H]
    wa[A_WIH1B:A_WIH1B + H, 0:G] = np.asarray(p["l1_wih_f"])[H:]
    wa[A_WIH1B:A_WIH1B + H, G:2 * G] = np.asarray(p["l1_wih_r"])[H:]
    wa[A_B1, 0:G] = np.asarray(p["l1_b_f"])[0]
    wa[A_B1, G:2 * G] = np.asarray(p["l1_b_r"])[0]
    # note: l1_whh_r is not packed -- the layer-1 reverse output at t=T-1 starts from h=0.

    wb[B_EMB_W2:B_EMB_W2 + EMB1, :] = np.asarray(p["emb_w2"])
    wb[B_EMB_B2, :] = np.asarray(p["emb_b2"])[0]
    wb[B_WHH0F:B_WHH0F + H, :] = np.asarray(p["l0_whh_f"])
    wb[B_WHH0R:B_WHH0R + H, :] = np.asarray(p["l0_whh_r"])
    wb[B_WHH1F:B_WHH1F + H, :] = np.asarray(p["l1_whh_f"])
    wb[B_CLS_W1:B_CLS_W1 + 2 * H, 0:CLS_HID] = np.asarray(p["cls_w1"])
    wb[B_CLS_B1, 0:CLS_HID] = np.asarray(p["cls_b1"])[0]
    wb[B_CLS_W2:B_CLS_W2 + CLS_HID, 0:NUM_CLASSES] = np.asarray(p["cls_w2"])
    wb[B_CLS_B2, 0:NUM_CLASSES] = np.asarray(p["cls_b2"])[0]

    return {"wa": jnp.asarray(wa), "wb": jnp.asarray(wb)}


# ---------------- wrapper: one fused pallas_call ----------------

@jax.jit
def keypoint_lstm_forward(x, packed):
    """x: (B, T, P, 17, 2) float32 -> logits (B, NUM_CLASSES)."""
    B, T = x.shape[:2]
    assert B <= BP, "this small-shape kernel packs the batch into a single sublane tile"

    feat = x.reshape(B, T, INPUT_SIZE).astype(jnp.float32)   # matches x.view(batch, seq, -1)
    feat = jnp.transpose(feat, (1, 0, 2))                    # time-major (T, B, 170)
    feat = jnp.pad(feat, ((0, 0), (0, BP - B), (0, KPAD - INPUT_SIZE)))  # pad batch & K
    feat = feat.reshape(T * BP, KPAD)

    vmem = pl.BlockSpec(memory_space=pltpu.MemorySpace.VMEM)
    out = pl.pallas_call(
        functools.partial(_fused_forward_kernel, T),
        out_shape=jax.ShapeDtypeStruct((BP, WB), jnp.float32),
        in_specs=[vmem, vmem, vmem],
        out_specs=vmem,
        scratch_shapes=[pltpu.VMEM((T * BP, HIDDEN), jnp.float32),   # layer-0 fwd outputs
                        pltpu.VMEM((T * BP, HIDDEN), jnp.float32)],  # layer-0 rev outputs
        compiler_params=pltpu.CompilerParams(vmem_limit_bytes=32 * 1024 * 1024),
    )(feat, packed["wa"], packed["wb"])
    return out[:B, :NUM_CLASSES]


# ---------------- deterministic parameter init (PyTorch-style uniform bounds) ----------------

def init_params(key):
    keys = iter(jax.random.split(key, 32))

    def u(shape, fan_in):
        bound = 1.0 / np.sqrt(fan_in)
        return jax.random.uniform(next(keys), shape, jnp.float32, -bound, bound)

    p = {}
    p["emb_w1"] = u((INPUT_SIZE, EMB1), INPUT_SIZE)
    p["emb_b1"] = u((1, EMB1), INPUT_SIZE)
    p["emb_w2"] = u((EMB1, EMB2), EMB1)
    p["emb_b2"] = u((1, EMB2), EMB1)
    for layer, d_in in ((0, EMB2), (1, 2 * HIDDEN)):
        for tag in ("f", "r"):
            p[f"l{layer}_wih_{tag}"] = u((d_in, 4 * HIDDEN), HIDDEN)
            p[f"l{layer}_whh_{tag}"] = u((HIDDEN, 4 * HIDDEN), HIDDEN)
            # combined bias (b_ih + b_hh of the PyTorch LSTM)
            p[f"l{layer}_b_{tag}"] = u((1, 4 * HIDDEN), HIDDEN)
    p["cls_w1"] = u((2 * HIDDEN, CLS_HID), 2 * HIDDEN)
    p["cls_b1"] = u((1, CLS_HID), 2 * HIDDEN)
    p["cls_w2"] = u((CLS_HID, NUM_CLASSES), CLS_HID)
    p["cls_b2"] = u((1, NUM_CLASSES), CLS_HID)
    return p


# ---------------- pure-JAX reference (same math, for validation) ----------------

def _ref_lstm_dir(seq_tbd, w_ih, w_hh, b, reverse):
    T, B, _ = seq_tbd.shape
    H = w_hh.shape[0]
    xs = seq_tbd[::-1] if reverse else seq_tbd

    def step(carry, x_t):
        h, c = carry
        g = x_t @ w_ih + h @ w_hh + b[0]
        i = jax.nn.sigmoid(g[:, 0:H])
        f = jax.nn.sigmoid(g[:, H:2 * H])
        gg = jnp.tanh(g[:, 2 * H:3 * H])
        o = jax.nn.sigmoid(g[:, 3 * H:4 * H])
        c = f * c + i * gg
        h = o * jnp.tanh(c)
        return (h, c), h

    init = (jnp.zeros((B, H), jnp.float32), jnp.zeros((B, H), jnp.float32))
    _, ys = jax.lax.scan(step, init, xs)
    return ys[::-1] if reverse else ys


def ref_forward(x, p):
    B, T = x.shape[:2]
    feat = x.reshape(B * T, -1)
    h = jax.nn.relu(feat @ p["emb_w1"] + p["emb_b1"][0])
    h = jax.nn.relu(h @ p["emb_w2"] + p["emb_b2"][0])
    seq = h.reshape(B, T, EMB2).transpose(1, 0, 2)
    f1 = _ref_lstm_dir(seq, p["l0_wih_f"], p["l0_whh_f"], p["l0_b_f"], False)
    r1 = _ref_lstm_dir(seq, p["l0_wih_r"], p["l0_whh_r"], p["l0_b_r"], True)
    l1 = jnp.concatenate([f1, r1], axis=-1)
    f2 = _ref_lstm_dir(l1, p["l1_wih_f"], p["l1_whh_f"], p["l1_b_f"], False)
    r2 = _ref_lstm_dir(l1, p["l1_wih_r"], p["l1_whh_r"], p["l1_b_r"], True)
    l2 = jnp.concatenate([f2, r2], axis=-1)
    last = l2[-1]
    h = jax.nn.relu(last @ p["cls_w1"] + p["cls_b1"][0])
    return h @ p["cls_w2"] + p["cls_b2"][0]


if __name__ == "__main__":
    key = jax.random.PRNGKey(0)
    pkey, xkey = jax.random.split(key)
    params = init_params(pkey)
    packed = pack_params(params)     # one-time packing, hoisted out of the jitted forward

    B, T = 2, 8
    x = jax.random.normal(xkey, (B, T, MAX_PERSONS, 17, 2), jnp.float32)

    out = jax.block_until_ready(keypoint_lstm_forward(x, packed))
    ref = jax.block_until_ready(ref_forward(x, params))

    assert out.shape == (B, NUM_CLASSES)
    np.testing.assert_allclose(np.asarray(out), np.asarray(ref), rtol=1e-3, atol=1e-3)
    print("KERNEL_OK")
</pallas_src>

<mosaic_0001>
module attributes {stable_mosaic.version = 11 : i64} {
  func.func @_fused_forward_kernel(%arg0: memref<64x256xf32, #tpu.memory_space<vmem>>, %arg1: memref<472x256xf32, #tpu.memory_space<vmem>>, %arg2: memref<568x128xf32, #tpu.memory_space<vmem>>, %arg3: memref<8x128xf32, #tpu.memory_space<vmem>>, %arg4: memref<64x32xf32, #tpu.memory_space<vmem>>, %arg5: memref<64x32xf32, #tpu.memory_space<vmem>>) attributes {dimension_semantics = [], scalar_prefetch = 0 : i64, scratch_operands = 2 : i64, tpu.core_type = #tpu.core_type<tc>} {
    %c0 = arith.constant 0 : index
    %c0_0 = arith.constant 0 : index
    %0 = vector.load %arg0[%c0, %c0_0] : memref<64x256xf32, #tpu.memory_space<vmem>>, vector<64x256xf32>
    %c0_1 = arith.constant 0 : index
    %c0_2 = arith.constant 0 : index
    %1 = vector.load %arg1[%c0_1, %c0_2] : memref<472x256xf32, #tpu.memory_space<vmem>>, vector<256x256xf32>
    %cst = arith.constant dense<0.000000e+00> : vector<64x256xf32>
    %2 = tpu.matmul %0, %1, %cst {dimension_numbers = #tpu.dot_dimension_numbers<[1], [0], [0], [1], [0, 0, 1, 1], [], []>} : vector<64x256xf32>, vector<256x256xf32>, vector<64x256xf32> -> vector<64x256xf32>
    %c256 = arith.constant 256 : index
    %c0_3 = arith.constant 0 : index
    %3 = vector.load %arg1[%c256, %c0_3] : memref<472x256xf32, #tpu.memory_space<vmem>>, vector<1x256xf32>
    %4 = vector.broadcast %3 : vector<1x256xf32> to vector<64x256xf32>
    %5 = arith.addf %2, %4 : vector<64x256xf32>
    %cst_4 = arith.constant 0.000000e+00 : f32
    %6 = vector.broadcast %cst_4 : f32 to vector<64x256xf32>
    %7 = arith.maximumf %5, %6 : vector<64x256xf32>
    %c0_5 = arith.constant 0 : index
    %c0_6 = arith.constant 0 : index
    %8 = vector.load %arg2[%c0_5, %c0_6] : memref<568x128xf32, #tpu.memory_space<vmem>>, vector<256x128xf32>
    %cst_7 = arith.constant dense<0.000000e+00> : vector<64x128xf32>
    %9 = tpu.matmul %7, %8, %cst_7 {dimension_numbers = #tpu.dot_dimension_numbers<[1], [0], [0], [1], [0, 0, 1, 1], [], []>} : vector<64x256xf32>, vector<256x128xf32>, vector<64x128xf32> -> vector<64x128xf32>
    %c256_8 = arith.constant 256 : index
    %c0_9 = arith.constant 0 : index
    %10 = vector.load %arg2[%c256_8, %c0_9] : memref<568x128xf32, #tpu.memory_space<vmem>>, vector<1x128xf32>
    %11 = vector.broadcast %10 : vector<1x128xf32> to vector<64x128xf32>
    %12 = arith.addf %9, %11 : vector<64x128xf32>
    %cst_10 = arith.constant 0.000000e+00 : f32
    %13 = vector.broadcast %cst_10 : f32 to vector<64x128xf32>
    %14 = arith.maximumf %12, %13 : vector<64x128xf32>
    %c264 = arith.constant 264 : index
    %c0_11 = arith.constant 0 : index
    %15 = vector.load %arg1[%c264, %c0_11] : memref<472x256xf32, #tpu.memory_space<vmem>>, vector<128x256xf32>
    %cst_12 = arith.constant dense<0.000000e+00> : vector<64x256xf32>
    %16 = tpu.matmul %14, %15, %cst_12 {dimension_numbers = #tpu.dot_dimension_numbers<[1], [0], [0], [1], [0, 0, 1, 1], [], []>} : vector<64x128xf32>, vector<128x256xf32>, vector<64x256xf32> -> vector<64x256xf32>
    %c392 = arith.constant 392 : index
    %c0_13 = arith.constant 0 : index
    %17 = vector.load %arg1[%c392, %c0_13] : memref<472x256xf32, #tpu.memory_space<vmem>>, vector<1x256xf32>
    %18 = vector.broadcast %17 : vector<1x256xf32> to vector<64x256xf32>
    %19 = arith.addf %16, %18 : vector<64x256xf32>
    %c264_14 = arith.constant 264 : index
    %c0_15 = arith.constant 0 : index
    %20 = vector.load %arg2[%c264_14, %c0_15] : memref<568x128xf32, #tpu.memory_space<vmem>>, vector<32x128xf32>
    %c296 = arith.constant 296 : index
    %c0_16 = arith.constant 0 : index
    %21 = vector.load %arg2[%c296, %c0_16] : memref<568x128xf32, #tpu.memory_space<vmem>>, vector<32x128xf32>
    %cst_17 = arith.constant 0.000000e+00 : f32
    %22 = vector.broadcast %cst_17 : f32 to vector<8x32xf32>
    %23 = vector.extract_strided_slice %19 {offsets = [0, 0], sizes = [8, 128], strides = [1, 1]} : vector<64x256xf32> to vector<8x128xf32>
    %cst_18 = arith.constant dense<0.000000e+00> : vector<8x128xf32>
    %24 = tpu.matmul %22, %20, %cst_18 {dimension_numbers = #tpu.dot_dimension_numbers<[1], [0], [0], [1], [0, 0, 1, 1], [], []>} : vector<8x32xf32>, vector<32x128xf32>, vector<8x128xf32> -> vector<8x128xf32>
    %25 = arith.addf %23, %24 : vector<8x128xf32>
    %26 = vector.extract_strided_slice %19 {offsets = [56, 128], sizes = [8, 128], strides = [1, 1]} : vector<64x256xf32> to vector<8x128xf32>
    %cst_19 = arith.constant dense<0.000000e+00> : vector<8x128xf32>
    %27 = tpu.matmul %22, %21, %cst_19 {dimension_numbers = #tpu.dot_dimension_numbers<[1], [0], [0], [1], [0, 0, 1, 1], [], []>} : vector<8x32xf32>, vector<32x128xf32>, vector<8x128xf32> -> vector<8x128xf32>
    %28 = arith.addf %26, %27 : vector<8x128xf32>
    %29 = arith.negf %25 : vector<8x128xf32>
    %30 = math.exp %29 : vector<8x128xf32>
    %cst_20 = arith.constant 1.000000e+00 : f32
    %31 = vector.broadcast %cst_20 : f32 to vector<8x128xf32>
    %32 = arith.addf %31, %30 : vector<8x128xf32>
    %33 = arith.divf %31, %32 : vector<8x128xf32>
    %34 = math.tanh %25 : vector<8x128xf32>
    %35 = vector.extract_strided_slice %33 {offsets = [0, 0], sizes = [8, 32], strides = [1, 1]} : vector<8x128xf32> to vector<8x32xf32>
    %36 = vector.extract_strided_slice %33 {offsets = [0, 32], sizes = [8, 32], strides = [1, 1]} : vector<8x128xf32> to vector<8x32xf32>
    %37 = vector.extract_strided_slice %34 {offsets = [0, 64], sizes = [8, 32], strides = [1, 1]} : vector<8x128xf32> to vector<8x32xf32>
    %38 = vector.extract_strided_slice %33 {offsets = [0, 96], sizes = [8, 32], strides = [1, 1]} : vector<8x128xf32> to vector<8x32xf32>
    %39 = arith.mulf %36, %22 : vector<8x32xf32>
    %40 = arith.mulf %35, %37 : vector<8x32xf32>
    %41 = arith.addf %39, %40 : vector<8x32xf32>
    %42 = math.tanh %41 : vector<8x32xf32>
    %43 = arith.mulf %38, %42 : vector<8x32xf32>
    %44 = arith.negf %28 : vector<8x128xf32>
    %45 = math.exp %44 : vector<8x128xf32>
    %cst_21 = arith.constant 1.000000e+00 : f32
    %46 = vector.broadcast %cst_21 : f32 to vector<8x128xf32>
    %47 = arith.addf %46, %45 : vector<8x128xf32>
    %48 = arith.divf %46, %47 : vector<8x128xf32>
    %49 = math.tanh %28 : vector<8x128xf32>
    %50 = vector.extract_strided_slice %48 {offsets = [0, 0], sizes = [8, 32], strides = [1, 1]} : vector<8x128xf32> to vector<8x32xf32>
    %51 = vector.extract_strided_slice %48 {offsets = [0, 32], sizes = [8, 32], strides = [1, 1]} : vector<8x128xf32> to vector<8x32xf32>
    %52 = vector.extract_strided_slice %49 {offsets = [0, 64], sizes = [8, 32], strides = [1, 1]} : vector<8x128xf32> to vector<8x32xf32>
    %53 = vector.extract_strided_slice %48 {offsets = [0, 96], sizes = [8, 32], strides = [1, 1]} : vector<8x128xf32> to vector<8x32xf32>
    %54 = arith.mulf %51, %22 : vector<8x32xf32>
    %55 = arith.mulf %50, %52 : vector<8x32xf32>
    %56 = arith.addf %54, %55 : vector<8x32xf32>
    %57 = math.tanh %56 : vector<8x32xf32>
    %58 = arith.mulf %53, %57 : vector<8x32xf32>
    %c0_22 = arith.constant 0 : index
    %c0_23 = arith.constant 0 : index
    %59 = vector.load %arg4[%c0_22, %c0_23] : memref<64x32xf32, #tpu.memory_space<vmem>>, vector<8x32xf32>
    tpu.vector_store %arg4[%c0_22, %c0_23], %43 {strides = array<i32>} : memref<64x32xf32, #tpu.memory_space<vmem>>, vector<8x32xf32>,
    %c56 = arith.constant 56 : index
    %c0_24 = arith.constant 0 : index
    %60 = vector.load %arg5[%c56, %c0_24] : memref<64x32xf32, #tpu.memory_space<vmem>>, vector<8x32xf32>
    tpu.vector_store %arg5[%c56, %c0_24], %58 {strides = array<i32>} : memref<64x32xf32, #tpu.memory_space<vmem>>, vector<8x32xf32>,
    %61 = vector.extract_strided_slice %19 {offsets = [8, 0], sizes = [8, 128], strides = [1, 1]} : vector<64x256xf32> to vector<8x128xf32>
    %cst_25 = arith.constant dense<0.000000e+00> : vector<8x128xf32>
    %62 = tpu.matmul %43, %20, %cst_25 {dimension_numbers = #tpu.dot_dimension_numbers<[1], [0], [0], [1], [0, 0, 1, 1], [], []>} : vector<8x32xf32>, vector<32x128xf32>, vector<8x128xf32> -> vector<8x128xf32>
    %63 = arith.addf %61, %62 : vector<8x128xf32>
    %64 = vector.extract_strided_slice %19 {offsets = [48, 128], sizes = [8, 128], strides = [1, 1]} : vector<64x256xf32> to vector<8x128xf32>
    %cst_26 = arith.constant dense<0.000000e+00> : vector<8x128xf32>
    %65 = tpu.matmul %58, %21, %cst_26 {dimension_numbers = #tpu.dot_dimension_numbers<[1], [0], [0], [1], [0, 0, 1, 1], [], []>} : vector<8x32xf32>, vector<32x128xf32>, vector<8x128xf32> -> vector<8x128xf32>
    %66 = arith.addf %64, %65 : vector<8x128xf32>
    %67 = arith.negf %63 : vector<8x128xf32>
    %68 = math.exp %67 : vector<8x128xf32>
    %cst_27 = arith.constant 1.000000e+00 : f32
    %69 = vector.broadcast %cst_27 : f32 to vector<8x128xf32>
    %70 = arith.addf %69, %68 : vector<8x128xf32>
    %71 = arith.divf %69, %70 : vector<8x128xf32>
    %72 = math.tanh %63 : vector<8x128xf32>
    %73 = vector.extract_strided_slice %71 {offsets = [0, 0], sizes = [8, 32], strides = [1, 1]} : vector<8x128xf32> to vector<8x32xf32>
    %74 = vector.extract_strided_slice %71 {offsets = [0, 32], sizes = [8, 32], strides = [1, 1]} : vector<8x128xf32> to vector<8x32xf32>
    %75 = vector.extract_strided_slice %72 {offsets = [0, 64], sizes = [8, 32], strides = [1, 1]} : vector<8x128xf32> to vector<8x32xf32>
    %76 = vector.extract_strided_slice %71 {offsets = [0, 96], sizes = [8, 32], strides = [1, 1]} : vector<8x128xf32> to vector<8x32xf32>
    %77 = arith.mulf %74, %41 : vector<8x32xf32>
    %78 = arith.mulf %73, %75 : vector<8x32xf32>
    %79 = arith.addf %77, %78 : vector<8x32xf32>
    %80 = math.tanh %79 : vector<8x32xf32>
    %81 = arith.mulf %76, %80 : vector<8x32xf32>
    %82 = arith.negf %66 : vector<8x128xf32>
    %83 = math.exp %82 : vector<8x128xf32>
    %cst_28 = arith.constant 1.000000e+00 : f32
    %84 = vector.broadcast %cst_28 : f32 to vector<8x128xf32>
    %85 = arith.addf %84, %83 : vector<8x128xf32>
    %86 = arith.divf %84, %85 : vector<8x128xf32>
    %87 = math.tanh %66 : vector<8x128xf32>
    %88 = vector.extract_strided_slice %86 {offsets = [0, 0], sizes = [8, 32], strides = [1, 1]} : vector<8x128xf32> to vector<8x32xf32>
    %89 = vector.extract_strided_slice %86 {offsets = [0, 32], sizes = [8, 32], strides = [1, 1]} : vector<8x128xf32> to vector<8x32xf32>
    %90 = vector.extract_strided_slice %87 {offsets = [0, 64], sizes = [8, 32], strides = [1, 1]} : vector<8x128xf32> to vector<8x32xf32>
    %91 = vector.extract_strided_slice %86 {offsets = [0, 96], sizes = [8, 32], strides = [1, 1]} : vector<8x128xf32> to vector<8x32xf32>
    %92 = arith.mulf %89, %56 : vector<8x32xf32>
    %93 = arith.mulf %88, %90 : vector<8x32xf32>
    %94 = arith.addf %92, %93 : vector<8x32xf32>
    %95 = math.tanh %94 : vector<8x32xf32>
    %96 = arith.mulf %91, %95 : vector<8x32xf32>
    %c8 = arith.constant 8 : index
    %c0_29 = arith.constant 0 : index
    %97 = vector.load %arg4[%c8, %c0_29] : memref<64x32xf32, #tpu.memory_space<vmem>>, vector<8x32xf32>
    tpu.vector_store %arg4[%c8, %c0_29], %81 {strides = array<i32>} : memref<64x32xf32, #tpu.memory_space<vmem>>, vector<8x32xf32>,
    %c48 = arith.constant 48 : index
    %c0_30 = arith.constant 0 : index
    %98 = vector.load %arg5[%c48, %c0_30] : memref<64x32xf32, #tpu.memory_space<vmem>>, vector<8x32xf32>
    tpu.vector_store %arg5[%c48, %c0_30], %96 {strides = array<i32>} : memref<64x32xf32, #tpu.memory_space<vmem>>, vector<8x32xf32>,
    %99 = vector.extract_strided_slice %19 {offsets = [16, 0], sizes = [8, 128], strides = [1, 1]} : vector<64x256xf32> to vector<8x128xf32>
    %cst_31 = arith.constant dense<0.000000e+00> : vector<8x128xf32>
    %100 = tpu.matmul %81, %20, %cst_31 {dimension_numbers = #tpu.dot_dimension_numbers<[1], [0], [0], [1], [0, 0, 1, 1], [], []>} : vector<8x32xf32>, vector<32x128xf32>, vector<8x128xf32> -> vector<8x128xf32>
    %101 = arith.addf %99, %100 : vector<8x128xf32>
    %102 = vector.extract_strided_slice %19 {offsets = [40, 128], sizes = [8, 128], strides = [1, 1]} : vector<64x256xf32> to vector<8x128xf32>
    %cst_32 = arith.constant dense<0.000000e+00> : vector<8x128xf32>
    %103 = tpu.matmul %96, %21, %cst_32 {dimension_numbers = #tpu.dot_dimension_numbers<[1], [0], [0], [1], [0, 0, 1, 1], [], []>} : vector<8x32xf32>, vector<32x128xf32>, vector<8x128xf32> -> vector<8x128xf32>
    %104 = arith.addf %102, %103 : vector<8x128xf32>
    %105 = arith.negf %101 : vector<8x128xf32>
    %106 = math.exp %105 : vector<8x128xf32>
    %cst_33 = arith.constant 1.000000e+00 : f32
    %107 = vector.broadcast %cst_33 : f32 to vector<8x128xf32>
    %108 = arith.addf %107, %106 : vector<8x128xf32>
    %109 = arith.divf %107, %108 : vector<8x128xf32>
    %110 = math.tanh %101 : vector<8x128xf32>
    %111 = vector.extract_strided_slice %109 {offsets = [0, 0], sizes = [8, 32], strides = [1, 1]} : vector<8x128xf32> to vector<8x32xf32>
    %112 = vector.extract_strided_slice %109 {offsets = [0, 32], sizes = [8, 32], strides = [1, 1]} : vector<8x128xf32> to vector<8x32xf32>
    %113 = vector.extract_strided_slice %110 {offsets = [0, 64], sizes = [8, 32], strides = [1, 1]} : vector<8x128xf32> to vector<8x32xf32>
    %114 = vector.extract_strided_slice %109 {offsets = [0, 96], sizes = [8, 32], strides = [1, 1]} : vector<8x128xf32> to vector<8x32xf32>
    %115 = arith.mulf %112, %79 : vector<8x32xf32>
    %116 = arith.mulf %111, %113 : vector<8x32xf32>
    %117 = arith.addf %115, %116 : vector<8x32xf32>
    %118 = math.tanh %117 : vector<8x32xf32>
    %119 = arith.mulf %114, %118 : vector<8x32xf32>
    %120 = arith.negf %104 : vector<8x128xf32>
    %121 = math.exp %120 : vector<8x128xf32>
    %cst_34 = arith.constant 1.000000e+00 : f32
    %122 = vector.broadcast %cst_34 : f32 to vector<8x128xf32>
    %123 = arith.addf %122, %121 : vector<8x128xf32>
    %124 = arith.divf %122, %123 : vector<8x128xf32>
    %125 = math.tanh %104 : vector<8x128xf32>
    %126 = vector.extract_strided_slice %124 {offsets = [0, 0], sizes = [8, 32], strides = [1, 1]} : vector<8x128xf32> to vector<8x32xf32>
    %127 = vector.extract_strided_slice %124 {offsets = [0, 32], sizes = [8, 32], strides = [1, 1]} : vector<8x128xf32> to vector<8x32xf32>
    %128 = vector.extract_strided_slice %125 {offsets = [0, 64], sizes = [8, 32], strides = [1, 1]} : vector<8x128xf32> to vector<8x32xf32>
    %129 = vector.extract_strided_slice %124 {offsets = [0, 96], sizes = [8, 32], strides = [1, 1]} : vector<8x128xf32> to vector<8x32xf32>
    %130 = arith.mulf %127, %94 : vector<8x32xf32>
    %131 = arith.mulf %126, %128 : vector<8x32xf32>
    %132 = arith.addf %130, %131 : vector<8x32xf32>
    %133 = math.tanh %132 : vector<8x32xf32>
    %134 = arith.mulf %129, %133 : vector<8x32xf32>
    %c16 = arith.constant 16 : index
    %c0_35 = arith.constant 0 : index
    %135 = vector.load %arg4[%c16, %c0_35] : memref<64x32xf32, #tpu.memory_space<vmem>>, vector<8x32xf32>
    tpu.vector_store %arg4[%c16, %c0_35], %119 {strides = array<i32>} : memref<64x32xf32, #tpu.memory_space<vmem>>, vector<8x32xf32>,
    %c40 = arith.constant 40 : index
    %c0_36 = arith.constant 0 : index
    %136 = vector.load %arg5[%c40, %c0_36] : memref<64x32xf32, #tpu.memory_space<vmem>>, vector<8x32xf32>
    tpu.vector_store %arg5[%c40, %c0_36], %134 {strides = array<i32>} : memref<64x32xf32, #tpu.memory_space<vmem>>, vector<8x32xf32>,
    %137 = vector.extract_strided_slice %19 {offsets = [24, 0], sizes = [8, 128], strides = [1, 1]} : vector<64x256xf32> to vector<8x128xf32>
    %cst_37 = arith.constant dense<0.000000e+00> : vector<8x128xf32>
    %138 = tpu.matmul %119, %20, %cst_37 {dimension_numbers = #tpu.dot_dimension_numbers<[1], [0], [0], [1], [0, 0, 1, 1], [], []>} : vector<8x32xf32>, vector<32x128xf32>, vector<8x128xf32> -> vector<8x128xf32>
    %139 = arith.addf %137, %138 : vector<8x128xf32>
    %140 = vector.extract_strided_slice %19 {offsets = [32, 128], sizes = [8, 128], strides = [1, 1]} : vector<64x256xf32> to vector<8x128xf32>
    %cst_38 = arith.constant dense<0.000000e+00> : vector<8x128xf32>
    %141 = tpu.matmul %134, %21, %cst_38 {dimension_numbers = #tpu.dot_dimension_numbers<[1], [0], [0], [1], [0, 0, 1, 1], [], []>} : vector<8x32xf32>, vector<32x128xf32>, vector<8x128xf32> -> vector<8x128xf32>
    %142 = arith.addf %140, %141 : vector<8x128xf32>
    %143 = arith.negf %139 : vector<8x128xf32>
    %144 = math.exp %143 : vector<8x128xf32>
    %cst_39 = arith.constant 1.000000e+00 : f32
    %145 = vector.broadcast %cst_39 : f32 to vector<8x128xf32>
    %146 = arith.addf %145, %144 : vector<8x128xf32>
    %147 = arith.divf %145, %146 : vector<8x128xf32>
    %148 = math.tanh %139 : vector<8x128xf32>
    %149 = vector.extract_strided_slice %147 {offsets = [0, 0], sizes = [8, 32], strides = [1, 1]} : vector<8x128xf32> to vector<8x32xf32>
    %150 = vector.extract_strided_slice %147 {offsets = [0, 32], sizes = [8, 32], strides = [1, 1]} : vector<8x128xf32> to vector<8x32xf32>
    %151 = vector.extract_strided_slice %148 {offsets = [0, 64], sizes = [8, 32], strides = [1, 1]} : vector<8x128xf32> to vector<8x32xf32>
    %152 = vector.extract_strided_slice %147 {offsets = [0, 96], sizes = [8, 32], strides = [1, 1]} : vector<8x128xf32> to vector<8x32xf32>
    %153 = arith.mulf %150, %117 : vector<8x32xf32>
    %154 = arith.mulf %149, %151 : vector<8x32xf32>
    %155 = arith.addf %153, %154 : vector<8x32xf32>
    %156 = math.tanh %155 : vector<8x32xf32>
    %157 = arith.mulf %152, %156 : vector<8x32xf32>
    %158 = arith.negf %142 : vector<8x128xf32>
    %159 = math.exp %158 : vector<8x128xf32>
    %cst_40 = arith.constant 1.000000e+00 : f32
    %160 = vector.broadcast %cst_40 : f32 to vector<8x128xf32>
    %161 = arith.addf %160, %159 : vector<8x128xf32>
    %162 = arith.divf %160, %161 : vector<8x128xf32>
    %163 = math.tanh %142 : vector<8x128xf32>
    %164 = vector.extract_strided_slice %162 {offsets = [0, 0], sizes = [8, 32], strides = [1, 1]} : vector<8x128xf32> to vector<8x32xf32>
    %165 = vector.extract_strided_slice %162 {offsets = [0, 32], sizes = [8, 32], strides = [1, 1]} : vector<8x128xf32> to vector<8x32xf32>
    %166 = vector.extract_strided_slice %163 {offsets = [0, 64], sizes = [8, 32], strides = [1, 1]} : vector<8x128xf32> to vector<8x32xf32>
    %167 = vector.extract_strided_slice %162 {offsets = [0, 96], sizes = [8, 32], strides = [1, 1]} : vector<8x128xf32> to vector<8x32xf32>
    %168 = arith.mulf %165, %132 : vector<8x32xf32>
    %169 = arith.mulf %164, %166 : vector<8x32xf32>
    %170 = arith.addf %168, %169 : vector<8x32xf32>
    %171 = math.tanh %170 : vector<8x32xf32>
    %172 = arith.mulf %167, %171 : vector<8x32xf32>
    %c24 = arith.constant 24 : index
    %c0_41 = arith.constant 0 : index
    %173 = vector.load %arg4[%c24, %c0_41] : memref<64x32xf32, #tpu.memory_space<vmem>>, vector<8x32xf32>
    tpu.vector_store %arg4[%c24, %c0_41], %157 {strides = array<i32>} : memref<64x32xf32, #tpu.memory_space<vmem>>, vector<8x32xf32>,
    %c32 = arith.constant 32 : index
    %c0_42 = arith.constant 0 : index
    %174 = vector.load %arg5[%c32, %c0_42] : memref<64x32xf32, #tpu.memory_space<vmem>>, vector<8x32xf32>
    tpu.vector_store %arg5[%c32, %c0_42], %172 {strides = array<i32>} : memref<64x32xf32, #tpu.memory_space<vmem>>, vector<8x32xf32>,
    %175 = vector.extract_strided_slice %19 {offsets = [32, 0], sizes = [8, 128], strides = [1, 1]} : vector<64x256xf32> to vector<8x128xf32>
    %cst_43 = arith.constant dense<0.000000e+00> : vector<8x128xf32>
    %176 = tpu.matmul %157, %20, %cst_43 {dimension_numbers = #tpu.dot_dimension_numbers<[1], [0], [0], [1], [0, 0, 1, 1], [], []>} : vector<8x32xf32>, vector<32x128xf32>, vector<8x128xf32> -> vector<8x128xf32>
    %177 = arith.addf %175, %176 : vector<8x128xf32>
    %178 = vector.extract_strided_slice %19 {offsets = [24, 128], sizes = [8, 128], strides = [1, 1]} : vector<64x256xf32> to vector<8x128xf32>
    %cst_44 = arith.constant dense<0.000000e+00> : vector<8x128xf32>
    %179 = tpu.matmul %172, %21, %cst_44 {dimension_numbers = #tpu.dot_dimension_numbers<[1], [0], [0], [1], [0, 0, 1, 1], [], []>} : vector<8x32xf32>, vector<32x128xf32>, vector<8x128xf32> -> vector<8x128xf32>
    %180 = arith.addf %178, %179 : vector<8x128xf32>
    %181 = arith.negf %177 : vector<8x128xf32>
    %182 = math.exp %181 : vector<8x128xf32>
    %cst_45 = arith.constant 1.000000e+00 : f32
    %183 = vector.broadcast %cst_45 : f32 to vector<8x128xf32>
    %184 = arith.addf %183, %182 : vector<8x128xf32>
    %185 = arith.divf %183, %184 : vector<8x128xf32>
    %186 = math.tanh %177 : vector<8x128xf32>
    %187 = vector.extract_strided_slice %185 {offsets = [0, 0], sizes = [8, 32], strides = [1, 1]} : vector<8x128xf32> to vector<8x32xf32>
    %188 = vector.extract_strided_slice %185 {offsets = [0, 32], sizes = [8, 32], strides = [1, 1]} : vector<8x128xf32> to vector<8x32xf32>
    %189 = vector.extract_strided_slice %186 {offsets = [0, 64], sizes = [8, 32], strides = [1, 1]} : vector<8x128xf32> to vector<8x32xf32>
    %190 = vector.extract_strided_slice %185 {offsets = [0, 96], sizes = [8, 32], strides = [1, 1]} : vector<8x128xf32> to vector<8x32xf32>
    %191 = arith.mulf %188, %155 : vector<8x32xf32>
    %192 = arith.mulf %187, %189 : vector<8x32xf32>
    %193 = arith.addf %191, %192 : vector<8x32xf32>
    %194 = math.tanh %193 : vector<8x32xf32>
    %195 = arith.mulf %190, %194 : vector<8x32xf32>
    %196 = arith.negf %180 : vector<8x128xf32>
    %197 = math.exp %196 : vector<8x128xf32>
    %cst_46 = arith.constant 1.000000e+00 : f32
    %198 = vector.broadcast %cst_46 : f32 to vector<8x128xf32>
    %199 = arith.addf %198, %197 : vector<8x128xf32>
    %200 = arith.divf %198, %199 : vector<8x128xf32>
    %201 = math.tanh %180 : vector<8x128xf32>
    %202 = vector.extract_strided_slice %200 {offsets = [0, 0], sizes = [8, 32], strides = [1, 1]} : vector<8x128xf32> to vector<8x32xf32>
    %203 = vector.extract_strided_slice %200 {offsets = [0, 32], sizes = [8, 32], strides = [1, 1]} : vector<8x128xf32> to vector<8x32xf32>
    %204 = vector.extract_strided_slice %201 {offsets = [0, 64], sizes = [8, 32], strides = [1, 1]} : vector<8x128xf32> to vector<8x32xf32>
    %205 = vector.extract_strided_slice %200 {offsets = [0, 96], sizes = [8, 32], strides = [1, 1]} : vector<8x128xf32> to vector<8x32xf32>
    %206 = arith.mulf %203, %170 : vector<8x32xf32>
    %207 = arith.mulf %202, %204 : vector<8x32xf32>
    %208 = arith.addf %206, %207 : vector<8x32xf32>
    %209 = math.tanh %208 : vector<8x32xf32>
    %210 = arith.mulf %205, %209 : vector<8x32xf32>
    %c32_47 = arith.constant 32 : index
    %c0_48 = arith.constant 0 : index
    %211 = vector.load %arg4[%c32_47, %c0_48] : memref<64x32xf32, #tpu.memory_space<vmem>>, vector<8x32xf32>
    tpu.vector_store %arg4[%c32_47, %c0_48], %195 {strides = array<i32>} : memref<64x32xf32, #tpu.memory_space<vmem>>, vector<8x32xf32>,
    %c24_49 = arith.constant 24 : index
    %c0_50 = arith.constant 0 : index
    %212 = vector.load %arg5[%c24_49, %c0_50] : memref<64x32xf32, #tpu.memory_space<vmem>>, vector<8x32xf32>
    tpu.vector_store %arg5[%c24_49, %c0_50], %210 {strides = array<i32>} : memref<64x32xf32, #tpu.memory_space<vmem>>, vector<8x32xf32>,
    %213 = vector.extract_strided_slice %19 {offsets = [40, 0], sizes = [8, 128], strides = [1, 1]} : vector<64x256xf32> to vector<8x128xf32>
    %cst_51 = arith.constant dense<0.000000e+00> : vector<8x128xf32>
    %214 = tpu.matmul %195, %20, %cst_51 {dimension_numbers = #tpu.dot_dimension_numbers<[1], [0], [0], [1], [0, 0, 1, 1], [], []>} : vector<8x32xf32>, vector<32x128xf32>, vector<8x128xf32> -> vector<8x128xf32>
    %215 = arith.addf %213, %214 : vector<8x128xf32>
    %216 = vector.extract_strided_slice %19 {offsets = [16, 128], sizes = [8, 128], strides = [1, 1]} : vector<64x256xf32> to vector<8x128xf32>
    %cst_52 = arith.constant dense<0.000000e+00> : vector<8x128xf32>
    %217 = tpu.matmul %210, %21, %cst_52 {dimension_numbers = #tpu.dot_dimension_numbers<[1], [0], [0], [1], [0, 0, 1, 1], [], []>} : vector<8x32xf32>, vector<32x128xf32>, vector<8x128xf32> -> vector<8x128xf32>
    %218 = arith.addf %216, %217 : vector<8x128xf32>
    %219 = arith.negf %215 : vector<8x128xf32>
    %220 = math.exp %219 : vector<8x128xf32>
    %cst_53 = arith.constant 1.000000e+00 : f32
    %221 = vector.broadcast %cst_53 : f32 to vector<8x128xf32>
    %222 = arith.addf %221, %220 : vector<8x128xf32>
    %223 = arith.divf %221, %222 : vector<8x128xf32>
    %224 = math.tanh %215 : vector<8x128xf32>
    %225 = vector.extract_strided_slice %223 {offsets = [0, 0], sizes = [8, 32], strides = [1, 1]} : vector<8x128xf32> to vector<8x32xf32>
    %226 = vector.extract_strided_slice %223 {offsets = [0, 32], sizes = [8, 32], strides = [1, 1]} : vector<8x128xf32> to vector<8x32xf32>
    %227 = vector.extract_strided_slice %224 {offsets = [0, 64], sizes = [8, 32], strides = [1, 1]} : vector<8x128xf32> to vector<8x32xf32>
    %228 = vector.extract_strided_slice %223 {offsets = [0, 96], sizes = [8, 32], strides = [1, 1]} : vector<8x128xf32> to vector<8x32xf32>
    %229 = arith.mulf %226, %193 : vector<8x32xf32>
    %230 = arith.mulf %225, %227 : vector<8x32xf32>
    %231 = arith.addf %229, %230 : vector<8x32xf32>
    %232 = math.tanh %231 : vector<8x32xf32>
    %233 = arith.mulf %228, %232 : vector<8x32xf32>
    %234 = arith.negf %218 : vector<8x128xf32>
    %235 = math.exp %234 : vector<8x128xf32>
    %cst_54 = arith.constant 1.000000e+00 : f32
    %236 = vector.broadcast %cst_54 : f32 to vector<8x128xf32>
    %237 = arith.addf %236, %235 : vector<8x128xf32>
    %238 = arith.divf %236, %237 : vector<8x128xf32>
    %239 = math.tanh %218 : vector<8x128xf32>
    %240 = vector.extract_strided_slice %238 {offsets = [0, 0], sizes = [8, 32], strides = [1, 1]} : vector<8x128xf32> to vector<8x32xf32>
    %241 = vector.extract_strided_slice %238 {offsets = [0, 32], sizes = [8, 32], strides = [1, 1]} : vector<8x128xf32> to vector<8x32xf32>
    %242 = vector.extract_strided_slice %239 {offsets = [0, 64], sizes = [8, 32], strides = [1, 1]} : vector<8x128xf32> to vector<8x32xf32>
    %243 = vector.extract_strided_slice %238 {offsets = [0, 96], sizes = [8, 32], strides = [1, 1]} : vector<8x128xf32> to vector<8x32xf32>
    %244 = arith.mulf %241, %208 : vector<8x32xf32>
    %245 = arith.mulf %240, %242 : vector<8x32xf32>
    %246 = arith.addf %244, %245 : vector<8x32xf32>
    %247 = math.tanh %246 : vector<8x32xf32>
    %248 = arith.mulf %243, %247 : vector<8x32xf32>
    %c40_55 = arith.constant 40 : index
    %c0_56 = arith.constant 0 : index
    %249 = vector.load %arg4[%c40_55, %c0_56] : memref<64x32xf32, #tpu.memory_space<vmem>>, vector<8x32xf32>
    tpu.vector_store %arg4[%c40_55, %c0_56], %233 {strides = array<i32>} : memref<64x32xf32, #tpu.memory_space<vmem>>, vector<8x32xf32>,
    %c16_57 = arith.constant 16 : index
    %c0_58 = arith.constant 0 : index
    %250 = vector.load %arg5[%c16_57, %c0_58] : memref<64x32xf32, #tpu.memory_space<vmem>>, vector<8x32xf32>
    tpu.vector_store %arg5[%c16_57, %c0_58], %248 {strides = array<i32>} : memref<64x32xf32, #tpu.memory_space<vmem>>, vector<8x32xf32>,
    %251 = vector.extract_strided_slice %19 {offsets = [48, 0], sizes = [8, 128], strides = [1, 1]} : vector<64x256xf32> to vector<8x128xf32>
    %cst_59 = arith.constant dense<0.000000e+00> : vector<8x128xf32>
    %252 = tpu.matmul %233, %20, %cst_59 {dimension_numbers = #tpu.dot_dimension_numbers<[1], [0], [0], [1], [0, 0, 1, 1], [], []>} : vector<8x32xf32>, vector<32x128xf32>, vector<8x128xf32> -> vector<8x128xf32>
    %253 = arith.addf %251, %252 : vector<8x128xf32>
    %254 = vector.extract_strided_slice %19 {offsets = [8, 128], sizes = [8, 128], strides = [1, 1]} : vector<64x256xf32> to vector<8x128xf32>
    %cst_60 = arith.constant dense<0.000000e+00> : vector<8x128xf32>
    %255 = tpu.matmul %248, %21, %cst_60 {dimension_numbers = #tpu.dot_dimension_numbers<[1], [0], [0], [1], [0, 0, 1, 1], [], []>} : vector<8x32xf32>, vector<32x128xf32>, vector<8x128xf32> -> vector<8x128xf32>
    %256 = arith.addf %254, %255 : vector<8x128xf32>
    %257 = arith.negf %253 : vector<8x128xf32>
    %258 = math.exp %257 : vector<8x128xf32>
    %cst_61 = arith.constant 1.000000e+00 : f32
    %259 = vector.broadcast %cst_61 : f32 to vector<8x128xf32>
    %260 = arith.addf %259, %258 : vector<8x128xf32>
    %261 = arith.divf %259, %260 : vector<8x128xf32>
    %262 = math.tanh %253 : vector<8x128xf32>
    %263 = vector.extract_strided_slice %261 {offsets = [0, 0], sizes = [8, 32], strides = [1, 1]} : vector<8x128xf32> to vector<8x32xf32>
    %264 = vector.extract_strided_slice %261 {offsets = [0, 32], sizes = [8, 32], strides = [1, 1]} : vector<8x128xf32> to vector<8x32xf32>
    %265 = vector.extract_strided_slice %262 {offsets = [0, 64], sizes = [8, 32], strides = [1, 1]} : vector<8x128xf32> to vector<8x32xf32>
    %266 = vector.extract_strided_slice %261 {offsets = [0, 96], sizes = [8, 32], strides = [1, 1]} : vector<8x128xf32> to vector<8x32xf32>
    %267 = arith.mulf %264, %231 : vector<8x32xf32>
    %268 = arith.mulf %263, %265 : vector<8x32xf32>
    %269 = arith.addf %267, %268 : vector<8x32xf32>
    %270 = math.tanh %269 : vector<8x32xf32>
    %271 = arith.mulf %266, %270 : vector<8x32xf32>
    %272 = arith.negf %256 : vector<8x128xf32>
    %273 = math.exp %272 : vector<8x128xf32>
    %cst_62 = arith.constant 1.000000e+00 : f32
    %274 = vector.broadcast %cst_62 : f32 to vector<8x128xf32>
    %275 = arith.addf %274, %273 : vector<8x128xf32>
    %276 = arith.divf %274, %275 : vector<8x128xf32>
    %277 = math.tanh %256 : vector<8x128xf32>
    %278 = vector.extract_strided_slice %276 {offsets = [0, 0], sizes = [8, 32], strides = [1, 1]} : vector<8x128xf32> to vector<8x32xf32>
    %279 = vector.extract_strided_slice %276 {offsets = [0, 32], sizes = [8, 32], strides = [1, 1]} : vector<8x128xf32> to vector<8x32xf32>
    %280 = vector.extract_strided_slice %277 {offsets = [0, 64], sizes = [8, 32], strides = [1, 1]} : vector<8x128xf32> to vector<8x32xf32>
    %281 = vector.extract_strided_slice %276 {offsets = [0, 96], sizes = [8, 32], strides = [1, 1]} : vector<8x128xf32> to vector<8x32xf32>
    %282 = arith.mulf %279, %246 : vector<8x32xf32>
    %283 = arith.mulf %278, %280 : vector<8x32xf32>
    %284 = arith.addf %282, %283 : vector<8x32xf32>
    %285 = math.tanh %284 : vector<8x32xf32>
    %286 = arith.mulf %281, %285 : vector<8x32xf32>
    %c48_63 = arith.constant 48 : index
    %c0_64 = arith.constant 0 : index
    %287 = vector.load %arg4[%c48_63, %c0_64] : memref<64x32xf32, #tpu.memory_space<vmem>>, vector<8x32xf32>
    tpu.vector_store %arg4[%c48_63, %c0_64], %271 {strides = array<i32>} : memref<64x32xf32, #tpu.memory_space<vmem>>, vector<8x32xf32>,
    %c8_65 = arith.constant 8 : index
    %c0_66 = arith.constant 0 : index
    %288 = vector.load %arg5[%c8_65, %c0_66] : memref<64x32xf32, #tpu.memory_space<vmem>>, vector<8x32xf32>
    tpu.vector_store %arg5[%c8_65, %c0_66], %286 {strides = array<i32>} : memref<64x32xf32, #tpu.memory_space<vmem>>, vector<8x32xf32>,
    %289 = vector.extract_strided_slice %19 {offsets = [56, 0], sizes = [8, 128], strides = [1, 1]} : vector<64x256xf32> to vector<8x128xf32>
    %cst_67 = arith.constant dense<0.000000e+00> : vector<8x128xf32>
    %290 = tpu.matmul %271, %20, %cst_67 {dimension_numbers = #tpu.dot_dimension_numbers<[1], [0], [0], [1], [0, 0, 1, 1], [], []>} : vector<8x32xf32>, vector<32x128xf32>, vector<8x128xf32> -> vector<8x128xf32>
    %291 = arith.addf %289, %290 : vector<8x128xf32>
    %292 = vector.extract_strided_slice %19 {offsets = [0, 128], sizes = [8, 128], strides = [1, 1]} : vector<64x256xf32> to vector<8x128xf32>
    %cst_68 = arith.constant dense<0.000000e+00> : vector<8x128xf32>
    %293 = tpu.matmul %286, %21, %cst_68 {dimension_numbers = #tpu.dot_dimension_numbers<[1], [0], [0], [1], [0, 0, 1, 1], [], []>} : vector<8x32xf32>, vector<32x128xf32>, vector<8x128xf32> -> vector<8x128xf32>
    %294 = arith.addf %292, %293 : vector<8x128xf32>
    %295 = arith.negf %291 : vector<8x128xf32>
    %296 = math.exp %295 : vector<8x128xf32>
    %cst_69 = arith.constant 1.000000e+00 : f32
    %297 = vector.broadcast %cst_69 : f32 to vector<8x128xf32>
    %298 = arith.addf %297, %296 : vector<8x128xf32>
    %299 = arith.divf %297, %298 : vector<8x128xf32>
    %300 = math.tanh %291 : vector<8x128xf32>
    %301 = vector.extract_strided_slice %299 {offsets = [0, 0], sizes = [8, 32], strides = [1, 1]} : vector<8x128xf32> to vector<8x32xf32>
    %302 = vector.extract_strided_slice %299 {offsets = [0, 32], sizes = [8, 32], strides = [1, 1]} : vector<8x128xf32> to vector<8x32xf32>
    %303 = vector.extract_strided_slice %300 {offsets = [0, 64], sizes = [8, 32], strides = [1, 1]} : vector<8x128xf32> to vector<8x32xf32>
    %304 = vector.extract_strided_slice %299 {offsets = [0, 96], sizes = [8, 32], strides = [1, 1]} : vector<8x128xf32> to vector<8x32xf32>
    %305 = arith.mulf %302, %269 : vector<8x32xf32>
    %306 = arith.mulf %301, %303 : vector<8x32xf32>
    %307 = arith.addf %305, %306 : vector<8x32xf32>
    %308 = math.tanh %307 : vector<8x32xf32>
    %309 = arith.mulf %304, %308 : vector<8x32xf32>
    %310 = arith.negf %294 : vector<8x128xf32>
    %311 = math.exp %310 : vector<8x128xf32>
    %cst_70 = arith.constant 1.000000e+00 : f32
    %312 = vector.broadcast %cst_70 : f32 to vector<8x128xf32>
    %313 = arith.addf %312, %311 : vector<8x128xf32>
    %314 = arith.divf %312, %313 : vector<8x128xf32>
    %315 = math.tanh %294 : vector<8x128xf32>
    %316 = vector.extract_strided_slice %314 {offsets = [0, 0], sizes = [8, 32], strides = [1, 1]} : vector<8x128xf32> to vector<8x32xf32>
    %317 = vector.extract_strided_slice %314 {offsets = [0, 32], sizes = [8, 32], strides = [1, 1]} : vector<8x128xf32> to vector<8x32xf32>
    %318 = vector.extract_strided_slice %315 {offsets = [0, 64], sizes = [8, 32], strides = [1, 1]} : vector<8x128xf32> to vector<8x32xf32>
    %319 = vector.extract_strided_slice %314 {offsets = [0, 96], sizes = [8, 32], strides = [1, 1]} : vector<8x128xf32> to vector<8x32xf32>
    %320 = arith.mulf %317, %284 : vector<8x32xf32>
    %321 = arith.mulf %316, %318 : vector<8x32xf32>
    %322 = arith.addf %320, %321 : vector<8x32xf32>
    %323 = math.tanh %322 : vector<8x32xf32>
    %324 = arith.mulf %319, %323 : vector<8x32xf32>
    %c56_71 = arith.constant 56 : index
    %c0_72 = arith.constant 0 : index
    %325 = vector.load %arg4[%c56_71, %c0_72] : memref<64x32xf32, #tpu.memory_space<vmem>>, vector<8x32xf32>
    tpu.vector_store %arg4[%c56_71, %c0_72], %309 {strides = array<i32>} : memref<64x32xf32, #tpu.memory_space<vmem>>, vector<8x32xf32>,
    %c0_73 = arith.constant 0 : index
    %c0_74 = arith.constant 0 : index
    %326 = vector.load %arg5[%c0_73, %c0_74] : memref<64x32xf32, #tpu.memory_space<vmem>>, vector<8x32xf32>
    tpu.vector_store %arg5[%c0_73, %c0_74], %324 {strides = array<i32>} : memref<64x32xf32, #tpu.memory_space<vmem>>, vector<8x32xf32>,
    %c0_75 = arith.constant 0 : index
    %c0_76 = arith.constant 0 : index
    %327 = vector.load %arg4[%c0_75, %c0_76] : memref<64x32xf32, #tpu.memory_space<vmem>>, vector<64x32xf32>
    %c400 = arith.constant 400 : index
    %c0_77 = arith.constant 0 : index
    %328 = vector.load %arg1[%c400, %c0_77] : memref<472x256xf32, #tpu.memory_space<vmem>>, vector<32x256xf32>
    %cst_78 = arith.constant dense<0.000000e+00> : vector<64x256xf32>
    %329 = tpu.matmul %327, %328, %cst_78 {dimension_numbers = #tpu.dot_dimension_numbers<[1], [0], [0], [1], [0, 0, 1, 1], [], []>} : vector<64x32xf32>, vector<32x256xf32>, vector<64x256xf32> -> vector<64x256xf32>
    %c0_79 = arith.constant 0 : index
    %c0_80 = arith.constant 0 : index
    %330 = vector.load %arg5[%c0_79, %c0_80] : memref<64x32xf32, #tpu.memory_space<vmem>>, vector<64x32xf32>
    %c432 = arith.constant 432 : index
    %c0_81 = arith.constant 0 : index
    %331 = vector.load %arg1[%c432, %c0_81] : memref<472x256xf32, #tpu.memory_space<vmem>>, vector<32x256xf32>
    %cst_82 = arith.constant dense<0.000000e+00> : vector<64x256xf32>
    %332 = tpu.matmul %330, %331, %cst_82 {dimension_numbers = #tpu.dot_dimension_numbers<[1], [0], [0], [1], [0, 0, 1, 1], [], []>} : vector<64x32xf32>, vector<32x256xf32>, vector<64x256xf32> -> vector<64x256xf32>
    %333 = arith.addf %329, %332 : vector<64x256xf32>
    %c464 = arith.constant 464 : index
    %c0_83 = arith.constant 0 : index
    %334 = vector.load %arg1[%c464, %c0_83] : memref<472x256xf32, #tpu.memory_space<vmem>>, vector<1x256xf32>
    %335 = vector.broadcast %334 : vector<1x256xf32> to vector<64x256xf32>
    %336 = arith.addf %333, %335 : vector<64x256xf32>
    %c328 = arith.constant 328 : index
    %c0_84 = arith.constant 0 : index
    %337 = vector.load %arg2[%c328, %c0_84] : memref<568x128xf32, #tpu.memory_space<vmem>>, vector<32x128xf32>
    %338 = vector.extract_strided_slice %336 {offsets = [0, 0], sizes = [8, 128], strides = [1, 1]} : vector<64x256xf32> to vector<8x128xf32>
    %cst_85 = arith.constant dense<0.000000e+00> : vector<8x128xf32>
    %339 = tpu.matmul %22, %337, %cst_85 {dimension_numbers = #tpu.dot_dimension_numbers<[1], [0], [0], [1], [0, 0, 1, 1], [], []>} : vector<8x32xf32>, vector<32x128xf32>, vector<8x128xf32> -> vector<8x128xf32>
    %340 = arith.addf %338, %339 : vector<8x128xf32>
    %341 = arith.negf %340 : vector<8x128xf32>
    %342 = math.exp %341 : vector<8x128xf32>
    %cst_86 = arith.constant 1.000000e+00 : f32
    %343 = vector.broadcast %cst_86 : f32 to vector<8x128xf32>
    %344 = arith.addf %343, %342 : vector<8x128xf32>
    %345 = arith.divf %343, %344 : vector<8x128xf32>
    %346 = math.tanh %340 : vector<8x128xf32>
    %347 = vector.extract_strided_slice %345 {offsets = [0, 0], sizes = [8, 32], strides = [1, 1]} : vector<8x128xf32> to vector<8x32xf32>
    %348 = vector.extract_strided_slice %345 {offsets = [0, 32], sizes = [8, 32], strides = [1, 1]} : vector<8x128xf32> to vector<8x32xf32>
    %349 = vector.extract_strided_slice %346 {offsets = [0, 64], sizes = [8, 32], strides = [1, 1]} : vector<8x128xf32> to vector<8x32xf32>
    %350 = vector.extract_strided_slice %345 {offsets = [0, 96], sizes = [8, 32], strides = [1, 1]} : vector<8x128xf32> to vector<8x32xf32>
    %351 = arith.mulf %348, %22 : vector<8x32xf32>
    %352 = arith.mulf %347, %349 : vector<8x32xf32>
    %353 = arith.addf %351, %352 : vector<8x32xf32>
    %354 = math.tanh %353 : vector<8x32xf32>
    %355 = arith.mulf %350, %354 : vector<8x32xf32>
    %356 = vector.extract_strided_slice %336 {offsets = [8, 0], sizes = [8, 128], strides = [1, 1]} : vector<64x256xf32> to vector<8x128xf32>
    %cst_87 = arith.constant dense<0.000000e+00> : vector<8x128xf32>
    %357 = tpu.matmul %355, %337, %cst_87 {dimension_numbers = #tpu.dot_dimension_numbers<[1], [0], [0], [1], [0, 0, 1, 1], [], []>} : vector<8x32xf32>, vector<32x128xf32>, vector<8x128xf32> -> vector<8x128xf32>
    %358 = arith.addf %356, %357 : vector<8x128xf32>
    %359 = arith.negf %358 : vector<8x128xf32>
    %360 = math.exp %359 : vector<8x128xf32>
    %cst_88 = arith.constant 1.000000e+00 : f32
    %361 = vector.broadcast %cst_88 : f32 to vector<8x128xf32>
    %362 = arith.addf %361, %360 : vector<8x128xf32>
    %363 = arith.divf %361, %362 : vector<8x128xf32>
    %364 = math.tanh %358 : vector<8x128xf32>
    %365 = vector.extract_strided_slice %363 {offsets = [0, 0], sizes = [8, 32], strides = [1, 1]} : vector<8x128xf32> to vector<8x32xf32>
    %366 = vector.extract_strided_slice %363 {offsets = [0, 32], sizes = [8, 32], strides = [1, 1]} : vector<8x128xf32> to vector<8x32xf32>
    %367 = vector.extract_strided_slice %364 {offsets = [0, 64], sizes = [8, 32], strides = [1, 1]} : vector<8x128xf32> to vector<8x32xf32>
    %368 = vector.extract_strided_slice %363 {offsets = [0, 96], sizes = [8, 32], strides = [1, 1]} : vector<8x128xf32> to vector<8x32xf32>
    %369 = arith.mulf %366, %353 : vector<8x32xf32>
    %370 = arith.mulf %365, %367 : vector<8x32xf32>
    %371 = arith.addf %369, %370 : vector<8x32xf32>
    %372 = math.tanh %371 : vector<8x32xf32>
    %373 = arith.mulf %368, %372 : vector<8x32xf32>
    %374 = vector.extract_strided_slice %336 {offsets = [16, 0], sizes = [8, 128], strides = [1, 1]} : vector<64x256xf32> to vector<8x128xf32>
    %cst_89 = arith.constant dense<0.000000e+00> : vector<8x128xf32>
    %375 = tpu.matmul %373, %337, %cst_89 {dimension_numbers = #tpu.dot_dimension_numbers<[1], [0], [0], [1], [0, 0, 1, 1], [], []>} : vector<8x32xf32>, vector<32x128xf32>, vector<8x128xf32> -> vector<8x128xf32>
    %376 = arith.addf %374, %375 : vector<8x128xf32>
    %377 = arith.negf %376 : vector<8x128xf32>
    %378 = math.exp %377 : vector<8x128xf32>
    %cst_90 = arith.constant 1.000000e+00 : f32
    %379 = vector.broadcast %cst_90 : f32 to vector<8x128xf32>
    %380 = arith.addf %379, %378 : vector<8x128xf32>
    %381 = arith.divf %379, %380 : vector<8x128xf32>
    %382 = math.tanh %376 : vector<8x128xf32>
    %383 = vector.extract_strided_slice %381 {offsets = [0, 0], sizes = [8, 32], strides = [1, 1]} : vector<8x128xf32> to vector<8x32xf32>
    %384 = vector.extract_strided_slice %381 {offsets = [0, 32], sizes = [8, 32], strides = [1, 1]} : vector<8x128xf32> to vector<8x32xf32>
    %385 = vector.extract_strided_slice %382 {offsets = [0, 64], sizes = [8, 32], strides = [1, 1]} : vector<8x128xf32> to vector<8x32xf32>
    %386 = vector.extract_strided_slice %381 {offsets = [0, 96], sizes = [8, 32], strides = [1, 1]} : vector<8x128xf32> to vector<8x32xf32>
    %387 = arith.mulf %384, %371 : vector<8x32xf32>
    %388 = arith.mulf %383, %385 : vector<8x32xf32>
    %389 = arith.addf %387, %388 : vector<8x32xf32>
    %390 = math.tanh %389 : vector<8x32xf32>
    %391 = arith.mulf %386, %390 : vector<8x32xf32>
    %392 = vector.extract_strided_slice %336 {offsets = [24, 0], sizes = [8, 128], strides = [1, 1]} : vector<64x256xf32> to vector<8x128xf32>
    %cst_91 = arith.constant dense<0.000000e+00> : vector<8x128xf32>
    %393 = tpu.matmul %391, %337, %cst_91 {dimension_numbers = #tpu.dot_dimension_numbers<[1], [0], [0], [1], [0, 0, 1, 1], [], []>} : vector<8x32xf32>, vector<32x128xf32>, vector<8x128xf32> -> vector<8x128xf32>
    %394 = arith.addf %392, %393 : vector<8x128xf32>
    %395 = arith.negf %394 : vector<8x128xf32>
    %396 = math.exp %395 : vector<8x128xf32>
    %cst_92 = arith.constant 1.000000e+00 : f32
    %397 = vector.broadcast %cst_92 : f32 to vector<8x128xf32>
    %398 = arith.addf %397, %396 : vector<8x128xf32>
    %399 = arith.divf %397, %398 : vector<8x128xf32>
    %400 = math.tanh %394 : vector<8x128xf32>
    %401 = vector.extract_strided_slice %399 {offsets = [0, 0], sizes = [8, 32], strides = [1, 1]} : vector<8x128xf32> to vector<8x32xf32>
    %402 = vector.extract_strided_slice %399 {offsets = [0, 32], sizes = [8, 32], strides = [1, 1]} : vector<8x128xf32> to vector<8x32xf32>
    %403 = vector.extract_strided_slice %400 {offsets = [0, 64], sizes = [8, 32], strides = [1, 1]} : vector<8x128xf32> to vector<8x32xf32>
    %404 = vector.extract_strided_slice %399 {offsets = [0, 96], sizes = [8, 32], strides = [1, 1]} : vector<8x128xf32> to vector<8x32xf32>
    %405 = arith.mulf %402, %389 : vector<8x32xf32>
    %406 = arith.mulf %401, %403 : vector<8x32xf32>
    %407 = arith.addf %405, %406 : vector<8x32xf32>
    %408 = math.tanh %407 : vector<8x32xf32>
    %409 = arith.mulf %404, %408 : vector<8x32xf32>
    %410 = vector.extract_strided_slice %336 {offsets = [32, 0], sizes = [8, 128], strides = [1, 1]} : vector<64x256xf32> to vector<8x128xf32>
    %cst_93 = arith.constant dense<0.000000e+00> : vector<8x128xf32>
    %411 = tpu.matmul %409, %337, %cst_93 {dimension_numbers = #tpu.dot_dimension_numbers<[1], [0], [0], [1], [0, 0, 1, 1], [], []>} : vector<8x32xf32>, vector<32x128xf32>, vector<8x128xf32> -> vector<8x128xf32>
    %412 = arith.addf %410, %411 : vector<8x128xf32>
    %413 = arith.negf %412 : vector<8x128xf32>
    %414 = math.exp %413 : vector<8x128xf32>
    %cst_94 = arith.constant 1.000000e+00 : f32
    %415 = vector.broadcast %cst_94 : f32 to vector<8x128xf32>
    %416 = arith.addf %415, %414 : vector<8x128xf32>
    %417 = arith.divf %415, %416 : vector<8x128xf32>
    %418 = math.tanh %412 : vector<8x128xf32>
    %419 = vector.extract_strided_slice %417 {offsets = [0, 0], sizes = [8, 32], strides = [1, 1]} : vector<8x128xf32> to vector<8x32xf32>
    %420 = vector.extract_strided_slice %417 {offsets = [0, 32], sizes = [8, 32], strides = [1, 1]} : vector<8x128xf32> to vector<8x32xf32>
    %421 = vector.extract_strided_slice %418 {offsets = [0, 64], sizes = [8, 32], strides = [1, 1]} : vector<8x128xf32> to vector<8x32xf32>
    %422 = vector.extract_strided_slice %417 {offsets = [0, 96], sizes = [8, 32], strides = [1, 1]} : vector<8x128xf32> to vector<8x32xf32>
    %423 = arith.mulf %420, %407 : vector<8x32xf32>
    %424 = arith.mulf %419, %421 : vector<8x32xf32>
    %425 = arith.addf %423, %424 : vector<8x32xf32>
    %426 = math.tanh %425 : vector<8x32xf32>
    %427 = arith.mulf %422, %426 : vector<8x32xf32>
    %428 = vector.extract_strided_slice %336 {offsets = [40, 0], sizes = [8, 128], strides = [1, 1]} : vector<64x256xf32> to vector<8x128xf32>
    %cst_95 = arith.constant dense<0.000000e+00> : vector<8x128xf32>
    %429 = tpu.matmul %427, %337, %cst_95 {dimension_numbers = #tpu.dot_dimension_numbers<[1], [0], [0], [1], [0, 0, 1, 1], [], []>} : vector<8x32xf32>, vector<32x128xf32>, vector<8x128xf32> -> vector<8x128xf32>
    %430 = arith.addf %428, %429 : vector<8x128xf32>
    %431 = arith.negf %430 : vector<8x128xf32>
    %432 = math.exp %431 : vector<8x128xf32>
    %cst_96 = arith.constant 1.000000e+00 : f32
    %433 = vector.broadcast %cst_96 : f32 to vector<8x128xf32>
    %434 = arith.addf %433, %432 : vector<8x128xf32>
    %435 = arith.divf %433, %434 : vector<8x128xf32>
    %436 = math.tanh %430 : vector<8x128xf32>
    %437 = vector.extract_strided_slice %435 {offsets = [0, 0], sizes = [8, 32], strides = [1, 1]} : vector<8x128xf32> to vector<8x32xf32>
    %438 = vector.extract_strided_slice %435 {offsets = [0, 32], sizes = [8, 32], strides = [1, 1]} : vector<8x128xf32> to vector<8x32xf32>
    %439 = vector.extract_strided_slice %436 {offsets = [0, 64], sizes = [8, 32], strides = [1, 1]} : vector<8x128xf32> to vector<8x32xf32>
    %440 = vector.extract_strided_slice %435 {offsets = [0, 96], sizes = [8, 32], strides = [1, 1]} : vector<8x128xf32> to vector<8x32xf32>
    %441 = arith.mulf %438, %425 : vector<8x32xf32>
    %442 = arith.mulf %437, %439 : vector<8x32xf32>
    %443 = arith.addf %441, %442 : vector<8x32xf32>
    %444 = math.tanh %443 : vector<8x32xf32>
    %445 = arith.mulf %440, %444 : vector<8x32xf32>
    %446 = vector.extract_strided_slice %336 {offsets = [48, 0], sizes = [8, 128], strides = [1, 1]} : vector<64x256xf32> to vector<8x128xf32>
    %cst_97 = arith.constant dense<0.000000e+00> : vector<8x128xf32>
    %447 = tpu.matmul %445, %337, %cst_97 {dimension_numbers = #tpu.dot_dimension_numbers<[1], [0], [0], [1], [0, 0, 1, 1], [], []>} : vector<8x32xf32>, vector<32x128xf32>, vector<8x128xf32> -> vector<8x128xf32>
    %448 = arith.addf %446, %447 : vector<8x128xf32>
    %449 = arith.negf %448 : vector<8x128xf32>
    %450 = math.exp %449 : vector<8x128xf32>
    %cst_98 = arith.constant 1.000000e+00 : f32
    %451 = vector.broadcast %cst_98 : f32 to vector<8x128xf32>
    %452 = arith.addf %451, %450 : vector<8x128xf32>
    %453 = arith.divf %451, %452 : vector<8x128xf32>
    %454 = math.tanh %448 : vector<8x128xf32>
    %455 = vector.extract_strided_slice %453 {offsets = [0, 0], sizes = [8, 32], strides = [1, 1]} : vector<8x128xf32> to vector<8x32xf32>
    %456 = vector.extract_strided_slice %453 {offsets = [0, 32], sizes = [8, 32], strides = [1, 1]} : vector<8x128xf32> to vector<8x32xf32>
    %457 = vector.extract_strided_slice %454 {offsets = [0, 64], sizes = [8, 32], strides = [1, 1]} : vector<8x128xf32> to vector<8x32xf32>
    %458 = vector.extract_strided_slice %453 {offsets = [0, 96], sizes = [8, 32], strides = [1, 1]} : vector<8x128xf32> to vector<8x32xf32>
    %459 = arith.mulf %456, %443 : vector<8x32xf32>
    %460 = arith.mulf %455, %457 : vector<8x32xf32>
    %461 = arith.addf %459, %460 : vector<8x32xf32>
    %462 = math.tanh %461 : vector<8x32xf32>
    %463 = arith.mulf %458, %462 : vector<8x32xf32>
    %464 = vector.extract_strided_slice %336 {offsets = [56, 0], sizes = [8, 128], strides = [1, 1]} : vector<64x256xf32> to vector<8x128xf32>
    %cst_99 = arith.constant dense<0.000000e+00> : vector<8x128xf32>
    %465 = tpu.matmul %463, %337, %cst_99 {dimension_numbers = #tpu.dot_dimension_numbers<[1], [0], [0], [1], [0, 0, 1, 1], [], []>} : vector<8x32xf32>, vector<32x128xf32>, vector<8x128xf32> -> vector<8x128xf32>
    %466 = arith.addf %464, %465 : vector<8x128xf32>
    %467 = arith.negf %466 : vector<8x128xf32>
    %468 = math.exp %467 : vector<8x128xf32>
    %cst_100 = arith.constant 1.000000e+00 : f32
    %469 = vector.broadcast %cst_100 : f32 to vector<8x128xf32>
    %470 = arith.addf %469, %468 : vector<8x128xf32>
    %471 = arith.divf %469, %470 : vector<8x128xf32>
    %472 = math.tanh %466 : vector<8x128xf32>
    %473 = vector.extract_strided_slice %471 {offsets = [0, 0], sizes = [8, 32], strides = [1, 1]} : vector<8x128xf32> to vector<8x32xf32>
    %474 = vector.extract_strided_slice %471 {offsets = [0, 32], sizes = [8, 32], strides = [1, 1]} : vector<8x128xf32> to vector<8x32xf32>
    %475 = vector.extract_strided_slice %472 {offsets = [0, 64], sizes = [8, 32], strides = [1, 1]} : vector<8x128xf32> to vector<8x32xf32>
    %476 = vector.extract_strided_slice %471 {offsets = [0, 96], sizes = [8, 32], strides = [1, 1]} : vector<8x128xf32> to vector<8x32xf32>
    %477 = arith.mulf %474, %461 : vector<8x32xf32>
    %478 = arith.mulf %473, %475 : vector<8x32xf32>
    %479 = arith.addf %477, %478 : vector<8x32xf32>
    %480 = math.tanh %479 : vector<8x32xf32>
    %481 = arith.mulf %476, %480 : vector<8x32xf32>
    %482 = vector.extract_strided_slice %336 {offsets = [56, 128], sizes = [8, 128], strides = [1, 1]} : vector<64x256xf32> to vector<8x128xf32>
    %483 = arith.negf %482 : vector<8x128xf32>
    %484 = math.exp %483 : vector<8x128xf32>
    %cst_101 = arith.constant 1.000000e+00 : f32
    %485 = vector.broadcast %cst_101 : f32 to vector<8x128xf32>
    %486 = arith.addf %485, %484 : vector<8x128xf32>
    %487 = arith.divf %485, %486 : vector<8x128xf32>
    %488 = math.tanh %482 : vector<8x128xf32>
    %489 = vector.extract_strided_slice %487 {offsets = [0, 0], sizes = [8, 32], strides = [1, 1]} : vector<8x128xf32> to vector<8x32xf32>
    %490 = vector.extract_strided_slice %487 {offsets = [0, 32], sizes = [8, 32], strides = [1, 1]} : vector<8x128xf32> to vector<8x32xf32>
    %491 = vector.extract_strided_slice %488 {offsets = [0, 64], sizes = [8, 32], strides = [1, 1]} : vector<8x128xf32> to vector<8x32xf32>
    %492 = vector.extract_strided_slice %487 {offsets = [0, 96], sizes = [8, 32], strides = [1, 1]} : vector<8x128xf32> to vector<8x32xf32>
    %493 = arith.mulf %490, %22 : vector<8x32xf32>
    %494 = arith.mulf %489, %491 : vector<8x32xf32>
    %495 = arith.addf %493, %494 : vector<8x32xf32>
    %496 = math.tanh %495 : vector<8x32xf32>
    %497 = arith.mulf %492, %496 : vector<8x32xf32>
    %c360 = arith.constant 360 : index
    %c0_102 = arith.constant 0 : index
    %498 = vector.load %arg2[%c360, %c0_102] : memref<568x128xf32, #tpu.memory_space<vmem>>, vector<32x128xf32>
    %cst_103 = arith.constant dense<0.000000e+00> : vector<8x128xf32>
    %499 = tpu.matmul %481, %498, %cst_103 {dimension_numbers = #tpu.dot_dimension_numbers<[1], [0], [0], [1], [0, 0, 1, 1], [], []>} : vector<8x32xf32>, vector<32x128xf32>, vector<8x128xf32> -> vector<8x128xf32>
    %c392_104 = arith.constant 392 : index
    %c0_105 = arith.constant 0 : index
    %500 = vector.load %arg2[%c392_104, %c0_105] : memref<568x128xf32, #tpu.memory_space<vmem>>, vector<32x128xf32>
    %cst_106 = arith.constant dense<0.000000e+00> : vector<8x128xf32>
    %501 = tpu.matmul %497, %500, %cst_106 {dimension_numbers = #tpu.dot_dimension_numbers<[1], [0], [0], [1], [0, 0, 1, 1], [], []>} : vector<8x32xf32>, vector<32x128xf32>, vector<8x128xf32> -> vector<8x128xf32>
    %502 = arith.addf %499, %501 : vector<8x128xf32>
    %c424 = arith.constant 424 : index
    %c0_107 = arith.constant 0 : index
    %503 = vector.load %arg2[%c424, %c0_107] : memref<568x128xf32, #tpu.memory_space<vmem>>, vector<1x128xf32>
    %504 = vector.broadcast %503 : vector<1x128xf32> to vector<8x128xf32>
    %505 = arith.addf %502, %504 : vector<8x128xf32>
    %cst_108 = arith.constant 0.000000e+00 : f32
    %506 = vector.broadcast %cst_108 : f32 to vector<8x128xf32>
    %507 = arith.maximumf %505, %506 : vector<8x128xf32>
    %c432_109 = arith.constant 432 : index
    %c0_110 = arith.constant 0 : index
    %508 = vector.load %arg2[%c432_109, %c0_110] : memref<568x128xf32, #tpu.memory_space<vmem>>, vector<128x128xf32>
    %cst_111 = arith.constant dense<0.000000e+00> : vector<8x128xf32>
    %509 = tpu.matmul %507, %508, %cst_111 {dimension_numbers = #tpu.dot_dimension_numbers<[1], [0], [0], [1], [0, 0, 1, 1], [], []>} : vector<8x128xf32>, vector<128x128xf32>, vector<8x128xf32> -> vector<8x128xf32>
    %c560 = arith.constant 560 : index
    %c0_112 = arith.constant 0 : index
    %510 = vector.load %arg2[%c560, %c0_112] : memref<568x128xf32, #tpu.memory_space<vmem>>, vector<1x128xf32>
    %511 = vector.broadcast %510 : vector<1x128xf32> to vector<8x128xf32>
    %512 = arith.addf %509, %511 : vector<8x128xf32>
    %c0_113 = arith.constant 0 : index
    %c0_114 = arith.constant 0 : index
    %513 = vector.load %arg3[%c0_113, %c0_114] : memref<8x128xf32, #tpu.memory_space<vmem>>, vector<8x128xf32>
    tpu.vector_store %arg3[%c0_113, %c0_114], %512 {strides = array<i32>} : memref<8x128xf32, #tpu.memory_space<vmem>>, vector<8x128xf32>,
    return
  }
}

</mosaic_0001>

<llo_original>
// kernel: keypoint_lstm_forward.1
$region0: #{keypoint_lstm_forward.1}
  #allocation0 [shape = 'u32[]', space=smem, size = 0x4, offset = 0x4, fixed_abs, tag = 'smem constant byte address 0x4 - core index']
  #allocation1 [shape = 'u32[144,128]{1,0:T(1,128)}', space=vmem, size = 0x12000, scoped, tag = 'internal scratch']
  #allocation2 [shape = 'f32[64,32]{1,0:T(8,128)}', space=vmem, size = 0x8000, scoped, tag = 'scratch operand']
  #allocation3 [shape = 'f32[64,32]{1,0:T(8,128)}', space=vmem, size = 0x8000, scoped, tag = 'scratch operand']
  %s0 = inlined_call_operand.vmem [shape: f32[64,256], index: 0, kind: input, shape index: {}]
  %s1 = inlined_call_operand.vmem [shape: f32[472,256], index: 1, kind: input, shape index: {}]
  %s2 = inlined_call_operand.hbm [shape: f32[568,128], index: 2, kind: input, shape index: {}]
  %s3 = inlined_call_operand.vmem [shape: f32[8,128], index: 3, kind: output, shape index: {}]
  %s4 = sld [smem:[#allocation0]]
  $region26: #{keypoint_lstm_forward.1} parent=0
    _
  %s6 = ssub.s32 1, %s4
  %s7 = scalar_select 0, %s6, %s4
  $region1: #{keypoint_lstm_forward.1} parent=0
    #allocation4 [shape = 'u8[290816]{0}', space=vmem, size = 0x47000, scoped, tag = 'input window, operand 2, single buffered']
    #allocation5 [shape = 's32[1]{0}', space=sflag, size = 0x4, scoped, tag = 'scoped memory for keypoint_lstm_forward.1']
    %8 = vsyncpa [#allocation5], 0
    // Predicated region
    $region2: #{keypoint_lstm_forward.1} parent=1 // pred_check
      _
    $region3: #{keypoint_lstm_forward.1} parent=1 // pred_check_branch
      %10 = sbr.rel (0) target = $region5
    $region4: #{keypoint_lstm_forward.1} parent=1 // pred_region
      _
    $region5: #{keypoint_lstm_forward.1} parent=1 // pred_fallthru
      _
    // Predicated region
    $region6: #{keypoint_lstm_forward.1} parent=1 // pred_check
      _
    $region7: #{keypoint_lstm_forward.1} parent=1 // pred_check_branch
      %12 = sbr.rel (0) target = $region9
    $region8: #{keypoint_lstm_forward.1} parent=1 // pred_region
      _
    $region9: #{keypoint_lstm_forward.1} parent=1 // pred_fallthru
      _
    // Predicated region
    $region10: #{keypoint_lstm_forward.1} parent=1 // pred_check
      _
    $region11: #{keypoint_lstm_forward.1} parent=1 // pred_check_branch
      %14 = sbr.rel (0) target = $region13
    $region12: #{keypoint_lstm_forward.1} parent=1 // pred_region
      %s16 = ssub.s32 9088, 9088
      %17 = vsyncadd [#allocation5], %s16
      %s18 = sshll.u32 [#allocation4], 4
      %s19 = int_to_ptr.vmem [resolvable:$true] %s18
      %24 = dma.hbm_to_vmem [thread:$0]  %s2, 9088, %s19, [#allocation5], 128, 128, 8
    $region13: #{keypoint_lstm_forward.1} parent=1 // pred_fallthru
      _
    // Predicated region
    $region14: #{keypoint_lstm_forward.1} parent=1 // pred_check
      _
    $region15: #{keypoint_lstm_forward.1} parent=1 // pred_check_branch
      %26 = sbr.rel (0) target = $region17
    $region16: #{keypoint_lstm_forward.1} parent=1 // pred_region
      %27 = dma.done [#allocation5], 9088
    $region17: #{keypoint_lstm_forward.1} parent=1 // pred_fallthru
      _
    %v28 = vld [vmem:[%s0] sm:$0xff]
    %v29 = vld [vmem:[%s0 + $0x8] sm:$0xff]
    %v30 = vld [vmem:[%s0 + $0x10] sm:$0xff]
    %v31 = vld [vmem:[%s0 + $0x18] sm:$0xff]
    %v32 = vld [vmem:[%s0 + $0x20] sm:$0xff]
    %v33 = vld [vmem:[%s0 + $0x28] sm:$0xff]
    %v34 = vld [vmem:[%s0 + $0x30] sm:$0xff]
    %v35 = vld [vmem:[%s0 + $0x38] sm:$0xff]
    %v36 = vld [vmem:[%s0 + $0x40] sm:$0xff]
    %v37 = vld [vmem:[%s0 + $0x48] sm:$0xff]
    %v38 = vld [vmem:[%s0 + $0x50] sm:$0xff]
    %v39 = vld [vmem:[%s0 + $0x58] sm:$0xff]
    %v40 = vld [vmem:[%s0 + $0x60] sm:$0xff]
    %v41 = vld [vmem:[%s0 + $0x68] sm:$0xff]
    %v42 = vld [vmem:[%s0 + $0x70] sm:$0xff]
    %v43 = vld [vmem:[%s0 + $0x78] sm:$0xff]
    %v44 = vld [vmem:[%s1] sm:$0xff]
    %v45 = vld [vmem:[%s1 + $0x8] sm:$0xff]
    %v46 = vld [vmem:[%s1 + $0x10] sm:$0xff]
    %v47 = vld [vmem:[%s1 + $0x18] sm:$0xff]
    %v48 = vld [vmem:[%s1 + $0x20] sm:$0xff]
    %v49 = vld [vmem:[%s1 + $0x28] sm:$0xff]
    %v50 = vld [vmem:[%s1 + $0x30] sm:$0xff]
    %v51 = vld [vmem:[%s1 + $0x38] sm:$0xff]
    %v52 = vld [vmem:[%s1 + $0x40] sm:$0xff]
    %v53 = vld [vmem:[%s1 + $0x48] sm:$0xff]
    %v54 = vld [vmem:[%s1 + $0x50] sm:$0xff]
    %v55 = vld [vmem:[%s1 + $0x58] sm:$0xff]
    %v56 = vld [vmem:[%s1 + $0x60] sm:$0xff]
    %v57 = vld [vmem:[%s1 + $0x68] sm:$0xff]
    %v58 = vld [vmem:[%s1 + $0x70] sm:$0xff]
    %v59 = vld [vmem:[%s1 + $0x78] sm:$0xff]
    %v60 = vld [vmem:[%s1 + $0x80] sm:$0xff]
    %v61 = vld [vmem:[%s1 + $0x88] sm:$0xff]
    %v62 = vld [vmem:[%s1 + $0x90] sm:$0xff]
    %v63 = vld [vmem:[%s1 + $0x98] sm:$0xff]
    %v64 = vld [vmem:[%s1 + $0xa0] sm:$0xff]
    %v65 = vld [vmem:[%s1 + $0xa8] sm:$0xff]
    %v66 = vld [vmem:[%s1 + $0xb0] sm:$0xff]
    %v67 = vld [vmem:[%s1 + $0xb8] sm:$0xff]
    %v68 = vld [vmem:[%s1 + $0xc0] sm:$0xff]
    %v69 = vld [vmem:[%s1 + $0xc8] sm:$0xff]
    %v70 = vld [vmem:[%s1 + $0xd0] sm:$0xff]
    %v71 = vld [vmem:[%s1 + $0xd8] sm:$0xff]
    %v72 = vld [vmem:[%s1 + $0xe0] sm:$0xff]
    %v73 = vld [vmem:[%s1 + $0xe8] sm:$0xff]
    %v74 = vld [vmem:[%s1 + $0xf0] sm:$0xff]
    %v75 = vld [vmem:[%s1 + $0xf8] sm:$0xff]
    %v76 = vld [vmem:[%s1 + $0x100] sm:$0xff]
    %v77 = vld [vmem:[%s1 + $0x108] sm:$0xff]
    %v78 = vld [vmem:[%s1 + $0x110] sm:$0xff]
    %v79 = vld [vmem:[%s1 + $0x118] sm:$0xff]
    %v80 = vld [vmem:[%s1 + $0x120] sm:$0xff]
    %v81 = vld [vmem:[%s1 + $0x128] sm:$0xff]
    %v82 = vld [vmem:[%s1 + $0x130] sm:$0xff]
    %v83 = vld [vmem:[%s1 + $0x138] sm:$0xff]
    %v84 = vld [vmem:[%s1 + $0x140] sm:$0xff]
    %v85 = vld [vmem:[%s1 + $0x148] sm:$0xff]
    %v86 = vld [vmem:[%s1 + $0x150] sm:$0xff]
    %v87 = vld [vmem:[%s1 + $0x158] sm:$0xff]
    %v88 = vld [vmem:[%s1 + $0x160] sm:$0xff]
    %v89 = vld [vmem:[%s1 + $0x168] sm:$0xff]
    %v90 = vld [vmem:[%s1 + $0x170] sm:$0xff]
    %v91 = vld [vmem:[%s1 + $0x178] sm:$0xff]
    %v92 = vld [vmem:[%s1 + $0x180] sm:$0xff]
    %v93 = vld [vmem:[%s1 + $0x188] sm:$0xff]
    %v94 = vld [vmem:[%s1 + $0x190] sm:$0xff]
    %v95 = vld [vmem:[%s1 + $0x198] sm:$0xff]
    %v96 = vld [vmem:[%s1 + $0x1a0] sm:$0xff]
    %v97 = vld [vmem:[%s1 + $0x1a8] sm:$0xff]
    %v98 = vld [vmem:[%s1 + $0x1b0] sm:$0xff]
    %v99 = vld [vmem:[%s1 + $0x1b8] sm:$0xff]
    %v100 = vld [vmem:[%s1 + $0x1c0] sm:$0xff]
    %v101 = vld [vmem:[%s1 + $0x1c8] sm:$0xff]
    %v102 = vld [vmem:[%s1 + $0x1d0] sm:$0xff]
    %v103 = vld [vmem:[%s1 + $0x1d8] sm:$0xff]
    %v104 = vld [vmem:[%s1 + $0x1e0] sm:$0xff]
    %v105 = vld [vmem:[%s1 + $0x1e8] sm:$0xff]
    %v106 = vld [vmem:[%s1 + $0x1f0] sm:$0xff]
    %v107 = vld [vmem:[%s1 + $0x1f8] sm:$0xff]
    %s108 = scalar_lea.vmem %s1, 512
    %v109 = vld [vmem:[%s108] ss:$8 sm:$0x3]
    %v111 = vlaneseq
    %v112 = vshrl.u32 %v111, 7
    %v113 = vsub.s32 0, %v112
    %v114 = vrot.slane %v109, %v113
    %v115 = vlaneseq
    %v116 = vshrl.u32 %v115, 7
    %v117 = vsub.s32 1, %v116
    %v118 = vrot.slane %v109, %v117
    %121 = vmatprep.subr.mxu0 %v75
    %122 = vmatpush1.msra.mxu0 %v74
    %123 = vmatprep.subr.mxu0 %v73
    %124 = vmatpush1.msra.mxu0 %v72
    %125 = vmatprep.subr.mxu0 %v71
    %126 = vmatpush1.msra.mxu0 %v70
    %127 = vmatprep.subr.mxu0 %v69
    %128 = vmatpush1.msra.mxu0 %v68
    %129 = vmatprep.subr.mxu0 %v67
    %130 = vmatpush1.msra.mxu0 %v66
    %131 = vmatprep.subr.mxu0 %v65
    %132 = vmatpush1.msra.mxu0 %v64
    %133 = vmatprep.subr.mxu0 %v63
    %134 = vmatpush1.msra.mxu0 %v62
    %135 = vmatprep.subr.mxu0 %v61
    %136 = vmatpush1.msra.mxu0 %v60
    %137 = vmatprep.subr.mxu0 %v59
    %138 = vmatpush1.msra.mxu0 %v58
    %139 = vmatprep.subr.mxu0 %v57
    %140 = vmatpush1.msra.mxu0 %v56
    %141 = vmatprep.subr.mxu0 %v55
    %142 = vmatpush1.msra.mxu0 %v54
    %143 = vmatprep.subr.mxu0 %v53
    %144 = vmatpush1.msra.mxu0 %v52
    %145 = vmatprep.subr.mxu0 %v51
    %146 = vmatpush1.msra.mxu0 %v50
    %147 = vmatprep.subr.mxu0 %v49
    %148 = vmatpush1.msra.mxu0 %v48
    %149 = vmatprep.subr.mxu0 %v47
    %150 = vmatpush1.msra.mxu0 %v46
    %151 = vmatprep.subr.mxu0 %v45
    %152 = vmatpush1.msra.mxu0 %v44
    %153 = vmatprep.subr.mxu0 %v107
    %154 = vmatpush2.msra.mxu0 %v106
    %155 = vmatprep.subr.mxu0 %v105
    %156 = vmatpush2.msra.mxu0 %v104
    %157 = vmatprep.subr.mxu0 %v103
    %158 = vmatpush2.msra.mxu0 %v102
    %159 = vmatprep.subr.mxu0 %v101
    %160 = vmatpush2.msra.mxu0 %v100
    %161 = vmatprep.subr.mxu0 %v99
    %162 = vmatpush2.msra.mxu0 %v98
    %163 = vmatprep.subr.mxu0 %v97
    %164 = vmatpush2.msra.mxu0 %v96
    %165 = vmatprep.subr.mxu0 %v95
    %166 = vmatpush2.msra.mxu0 %v94
    %167 = vmatprep.subr.mxu0 %v93
    %168 = vmatpush2.msra.mxu0 %v92
    %169 = vmatprep.subr.mxu0 %v91
    %170 = vmatpush2.msra.mxu0 %v90
    %171 = vmatprep.subr.mxu0 %v89
    %172 = vmatpush2.msra.mxu0 %v88
    %173 = vmatprep.subr.mxu0 %v87
    %174 = vmatpush2.msra.mxu0 %v86
    %175 = vmatprep.subr.mxu0 %v85
    %176 = vmatpush2.msra.mxu0 %v84
    %177 = vmatprep.subr.mxu0 %v83
    %178 = vmatpush2.msra.mxu0 %v82
    %179 = vmatprep.subr.mxu0 %v81
    %180 = vmatpush2.msra.mxu0 %v80
    %181 = vmatprep.subr.mxu0 %v79
    %182 = vmatpush2.msra.mxu0 %v78
    %183 = vmatprep.subr.mxu0 %v77
    %184 = vmatpush2.msra.mxu0 %v76
    %185 = vmatprep.mubr.f32.mxu0 %v29
    %186 = vmatmul.mubr.f32.gmra.mxu0 %v28
    %v187 = vpop.f32.mrf.mxu0
    %v188 = vadd.f32 %v114, %v187
    %v189 = vpop.f32.mrf.mxu0
    %v190 = vadd.f32 %v118, %v189
    %191 = vmatprep.mubr.f32.mxu0 %v31
    %192 = vmatmul.mubr.f32.gmra.mxu0 %v30
    %v193 = vpop.f32.mrf.mxu0
    %v194 = vadd.f32 %v114, %v193
    %v195 = vpop.f32.mrf.mxu0
    %v196 = vadd.f32 %v118, %v195
    %197 = vmatprep.mubr.f32.mxu0 %v33
    %198 = vmatmul.mubr.f32.gmra.mxu0 %v32
    %v199 = vpop.f32.mrf.mxu0
    %v200 = vadd.f32 %v114, %v199
    %v201 = vpop.f32.mrf.mxu0
    %v202 = vadd.f32 %v118, %v201
    %203 = vmatprep.mubr.f32.mxu0 %v35
    %204 = vmatmul.mubr.f32.gmra.mxu0 %v34
    %v205 = vpop.f32.mrf.mxu0
    %v206 = vadd.f32 %v114, %v205
    %v207 = vpop.f32.mrf.mxu0
    %v208 = vadd.f32 %v118, %v207
    %209 = vmatprep.mubr.f32.mxu0 %v37
    %210 = vmatmul.mubr.f32.gmra.mxu0 %v36
    %v211 = vpop.f32.mrf.mxu0
    %v212 = vadd.f32 %v114, %v211
    %v213 = vpop.f32.mrf.mxu0
    %v214 = vadd.f32 %v118, %v213
    %215 = vmatprep.mubr.f32.mxu0 %v39
    %216 = vmatmul.mubr.f32.gmra.mxu0 %v38
    %v217 = vpop.f32.mrf.mxu0
    %v218 = vadd.f32 %v114, %v217
    %v219 = vpop.f32.mrf.mxu0
    %v220 = vadd.f32 %v118, %v219
    %221 = vmatprep.mubr.f32.mxu0 %v41
    %222 = vmatmul.mubr.f32.gmra.mxu0 %v40
    %v223 = vpop.f32.mrf.mxu0
    %v224 = vadd.f32 %v114, %v223
    %v225 = vpop.f32.mrf.mxu0
    %v226 = vadd.f32 %v118, %v225
    %227 = vmatprep.mubr.f32.mxu0 %v43
    %228 = vmatmul.mubr.f32.gmra.mxu0 %v42
    %v229 = vpop.f32.mrf.mxu0
    %v230 = vadd.f32 %v114, %v229
    %v231 = vpop.f32.mrf.mxu0
    %v232 = vadd.f32 %v118, %v231
    %233 = vdwg.mxu0
    %v234 = vmax.f32 %v188, 0.0
    %v235 = vmax.f32 %v190, 0.0
    %v236 = vmax.f32 %v194, 0.0
    %v237 = vmax.f32 %v196, 0.0
    %v238 = vmax.f32 %v200, 0.0
    %v239 = vmax.f32 %v202, 0.0
    %v240 = vmax.f32 %v206, 0.0
    %v241 = vmax.f32 %v208, 0.0
    %v242 = vmax.f32 %v212, 0.0
    %v243 = vmax.f32 %v214, 0.0
    %v244 = vmax.f32 %v218, 0.0
    %v245 = vmax.f32 %v220, 0.0
    %v246 = vmax.f32 %v224, 0.0
    %v247 = vmax.f32 %v226, 0.0
    %v248 = vmax.f32 %v230, 0.0
    %v249 = vmax.f32 %v232, 0.0
    %v250 = vld [vmem:[#allocation4] sm:$0xff]
    %v251 = vld [vmem:[#allocation4 + $0x8] sm:$0xff]
    %v252 = vld [vmem:[#allocation4 + $0x10] sm:$0xff]
    %v253 = vld [vmem:[#allocation4 + $0x18] sm:$0xff]
    %v254 = vld [vmem:[#allocation4 + $0x20] sm:$0xff]
    %v255 = vld [vmem:[#allocation4 + $0x28] sm:$0xff]
    %v256 = vld [vmem:[#allocation4 + $0x30] sm:$0xff]
    %v257 = vld [vmem:[#allocation4 + $0x38] sm:$0xff]
    %v258 = vld [vmem:[#allocation4 + $0x40] sm:$0xff]
    %v259 = vld [vmem:[#allocation4 + $0x48] sm:$0xff]
    %v260 = vld [vmem:[#allocation4 + $0x50] sm:$0xff]
    %v261 = vld [vmem:[#allocation4 + $0x58] sm:$0xff]
    %v262 = vld [vmem:[#allocation4 + $0x60] sm:$0xff]
    %v263 = vld [vmem:[#allocation4 + $0x68] sm:$0xff]
    %v264 = vld [vmem:[#allocation4 + $0x70] sm:$0xff]
    %v265 = vld [vmem:[#allocation4 + $0x78] sm:$0xff]
    %v266 = vld [vmem:[#allocation4 + $0x80] sm:$0xff]
    %v267 = vld [vmem:[#allocation4 + $0x88] sm:$0xff]
    %v268 = vld [vmem:[#allocation4 + $0x90] sm:$0xff]
    %v269 = vld [vmem:[#allocation4 + $0x98] sm:$0xff]
    %v270 = vld [vmem:[#allocation4 + $0xa0] sm:$0xff]
    %v271 = vld [vmem:[#allocation4 + $0xa8] sm:$0xff]
    %v272 = vld [vmem:[#allocation4 + $0xb0] sm:$0xff]
    %v273 = vld [vmem:[#allocation4 + $0xb8] sm:$0xff]
    %v274 = vld [vmem:[#allocation4 + $0xc0] sm:$0xff]
    %v275 = vld [vmem:[#allocation4 + $0xc8] sm:$0xff]
    %v276 = vld [vmem:[#allocation4 + $0xd0] sm:$0xff]
    %v277 = vld [vmem:[#allocation4 + $0xd8] sm:$0xff]
    %v278 = vld [vmem:[#allocation4 + $0xe0] sm:$0xff]
    %v279 = vld [vmem:[#allocation4 + $0xe8] sm:$0xff]
    %v280 = vld [vmem:[#allocation4 + $0xf0] sm:$0xff]
    %v281 = vld [vmem:[#allocation4 + $0xf8] sm:$0xff]
    %v282 = vld [vmem:[#allocation4 + $0x100] sm:$0x1]
    %v283 = vlaneseq
    %v284 = vshrl.u32 %v283, 7
    %v285 = vsub.s32 0, %v284
    %v286 = vrot.slane %v282, %v285
    %287 = vmatprep.subr.mxu0 0.0
    %288 = vmatpush1.msra.mxu0 %v265
    %289 = vmatprep.subr.mxu0 0.0
    %290 = vmatpush1.msra.mxu0 %v264
    %291 = vmatprep.subr.mxu0 0.0
    %292 = vmatpush1.msra.mxu0 %v263
    %293 = vmatprep.subr.mxu0 0.0
    %294 = vmatpush1.msra.mxu0 %v262
    %295 = vmatprep.subr.mxu0 0.0
    %296 = vmatpush1.msra.mxu0 %v261
    %297 = vmatprep.subr.mxu0 0.0
    %298 = vmatpush1.msra.mxu0 %v260
    %299 = vmatprep.subr.mxu0 0.0
    %300 = vmatpush1.msra.mxu0 %v259
    %301 = vmatprep.subr.mxu0 0.0
    %302 = vmatpush1.msra.mxu0 %v258
    %303 = vmatprep.subr.mxu0 0.0
    %304 = vmatpush1.msra.mxu0 %v257
    %305 = vmatprep.subr.mxu0 0.0
    %306 = vmatpush1.msra.mxu0 %v256
    %307 = vmatprep.subr.mxu0 0.0
    %308 = vmatpush1.msra.mxu0 %v255
    %309 = vmatprep.subr.mxu0 0.0
    %310 = vmatpush1.msra.mxu0 %v254
    %311 = vmatprep.subr.mxu0 0.0
    %312 = vmatpush1.msra.mxu0 %v253
    %313 = vmatprep.subr.mxu0 0.0
    %314 = vmatpush1.msra.mxu0 %v252
    %315 = vmatprep.subr.mxu0 0.0
    %316 = vmatpush1.msra.mxu0 %v251
    %317 = vmatprep.subr.mxu0 0.0
    %318 = vmatpush1.msra.mxu0 %v250
    %319 = vmatprep.subr.mxu0 0.0
    %320 = vmatpush2.msra.mxu0 %v281
    %321 = vmatprep.subr.mxu0 0.0
    %322 = vmatpush2.msra.mxu0 %v280
    %323 = vmatprep.subr.mxu0 0.0
    %324 = vmatpush2.msra.mxu0 %v279
    %325 = vmatprep.subr.mxu0 0.0
    %326 = vmatpush2.msra.mxu0 %v278
    %327 = vmatprep.subr.mxu0 0.0
    %328 = vmatpush2.msra.mxu0 %v277
    %329 = vmatprep.subr.mxu0 0.0
    %330 = vmatpush2.msra.mxu0 %v276
    %331 = vmatprep.subr.mxu0 0.0
    %332 = vmatpush2.msra.mxu0 %v275
    %333 = vmatprep.subr.mxu0 0.0
    %334 = vmatpush2.msra.mxu0 %v274
    %335 = vmatprep.subr.mxu0 0.0
    %336 = vmatpush2.msra.mxu0 %v273
    %337 = vmatprep.subr.mxu0 0.0
    %338 = vmatpush2.msra.mxu0 %v272
    %339 = vmatprep.subr.mxu0 0.0
    %340 = vmatpush2.msra.mxu0 %v271
    %341 = vmatprep.subr.mxu0 0.0
    %342 = vmatpush2.msra.mxu0 %v270
    %343 = vmatprep.subr.mxu0 0.0
    %344 = vmatpush2.msra.mxu0 %v269
    %345 = vmatprep.subr.mxu0 0.0
    %346 = vmatpush2.msra.mxu0 %v268
    %347 = vmatprep.subr.mxu0 0.0
    %348 = vmatpush2.msra.mxu0 %v267
    %349 = vmatprep.subr.mxu0 0.0
    %350 = vmatpush2.msra.mxu0 %v266
    %351 = vmatprep.mubr.f32.mxu0 %v235
    %352 = vmatmul.mubr.f32.gmra.mxu0 %v234
    %v353 = vpop.f32.mrf.mxu0
    %v354 = vadd.f32 %v286, %v353
    %v355 = vpop.f32.mrf.mxu0
    %356 = vmatprep.mubr.f32.mxu0 %v237
    %357 = vmatmul.mubr.f32.gmra.mxu0 %v236
    %v358 = vpop.f32.mrf.mxu0
    %v359 = vadd.f32 %v286, %v358
    %v360 = vpop.f32.mrf.mxu0
    %361 = vmatprep.mubr.f32.mxu0 %v239
    %362 = vmatmul.mubr.f32.gmra.mxu0 %v238
    %v363 = vpop.f32.mrf.mxu0
    %v364 = vadd.f32 %v286, %v363
    %v365 = vpop.f32.mrf.mxu0
    %366 = vmatprep.mubr.f32.mxu0 %v241
    %367 = vmatmul.mubr.f32.gmra.mxu0 %v240
    %v368 = vpop.f32.mrf.mxu0
    %v369 = vadd.f32 %v286, %v368
    %v370 = vpop.f32.mrf.mxu0
    %371 = vmatprep.mubr.f32.mxu0 %v243
    %372 = vmatmul.mubr.f32.gmra.mxu0 %v242
    %v373 = vpop.f32.mrf.mxu0
    %v374 = vadd.f32 %v286, %v373
    %v375 = vpop.f32.mrf.mxu0
    %376 = vmatprep.mubr.f32.mxu0 %v245
    %377 = vmatmul.mubr.f32.gmra.mxu0 %v244
    %v378 = vpop.f32.mrf.mxu0
    %v379 = vadd.f32 %v286, %v378
    %v380 = vpop.f32.mrf.mxu0
    %381 = vmatprep.mubr.f32.mxu0 %v247
    %382 = vmatmul.mubr.f32.gmra.mxu0 %v246
    %v383 = vpop.f32.mrf.mxu0
    %v384 = vadd.f32 %v286, %v383
    %v385 = vpop.f32.mrf.mxu0
    %386 = vmatprep.mubr.f32.mxu0 %v249
    %387 = vmatmul.mubr.f32.gmra.mxu0 %v248
    %v388 = vpop.f32.mrf.mxu0
    %v389 = vadd.f32 %v286, %v388
    %v390 = vpop.f32.mrf.mxu0
    %391 = vdwg.mxu0
    %v392 = vmax.f32 %v354, 0.0
    %v393 = vmax.f32 %v359, 0.0
    %v394 = vmax.f32 %v364, 0.0
    %v395 = vmax.f32 %v369, 0.0
    %v396 = vmax.f32 %v374, 0.0
    %v397 = vmax.f32 %v379, 0.0
    %v398 = vmax.f32 %v384, 0.0
    %v399 = vmax.f32 %v389, 0.0
    %v400 = vld [vmem:[%s1 + $0x210] sm:$0xff]
    %v401 = vld [vmem:[%s1 + $0x218] sm:$0xff]
    %v402 = vld [vmem:[%s1 + $0x220] sm:$0xff]
    %v403 = vld [vmem:[%s1 + $0x228] sm:$0xff]
    %v404 = vld [vmem:[%s1 + $0x230] sm:$0xff]
    %v405 = vld [vmem:[%s1 + $0x238] sm:$0xff]
    %v406 = vld [vmem:[%s1 + $0x240] sm:$0xff]
    %v407 = vld [vmem:[%s1 + $0x248] sm:$0xff]
    %v408 = vld [vmem:[%s1 + $0x250] sm:$0xff]
    %v409 = vld [vmem:[%s1 + $0x258] sm:$0xff]
    %v410 = vld [vmem:[%s1 + $0x260] sm:$0xff]
    %v411 = vld [vmem:[%s1 + $0x268] sm:$0xff]
    %v412 = vld [vmem:[%s1 + $0x270] sm:$0xff]
    %v413 = vld [vmem:[%s1 + $0x278] sm:$0xff]
    %v414 = vld [vmem:[%s1 + $0x280] sm:$0xff]
    %v415 = vld [vmem:[%s1 + $0x288] sm:$0xff]
    %v416 = vld [vmem:[%s1 + $0x290] sm:$0xff]
    %v417 = vld [vmem:[%s1 + $0x298] sm:$0xff]
    %v418 = vld [vmem:[%s1 + $0x2a0] sm:$0xff]
    %v419 = vld [vmem:[%s1 + $0x2a8] sm:$0xff]
    %v420 = vld [vmem:[%s1 + $0x2b0] sm:$0xff]
    %v421 = vld [vmem:[%s1 + $0x2b8] sm:$0xff]
    %v422 = vld [vmem:[%s1 + $0x2c0] sm:$0xff]
    %v423 = vld [vmem:[%s1 + $0x2c8] sm:$0xff]
    %v424 = vld [vmem:[%s1 + $0x2d0] sm:$0xff]
    %v425 = vld [vmem:[%s1 + $0x2d8] sm:$0xff]
    %v426 = vld [vmem:[%s1 + $0x2e0] sm:$0xff]
    %v427 = vld [vmem:[%s1 + $0x2e8] sm:$0xff]
    %v428 = vld [vmem:[%s1 + $0x2f0] sm:$0xff]
    %v429 = vld [vmem:[%s1 + $0x2f8] sm:$0xff]
    %v430 = vld [vmem:[%s1 + $0x300] sm:$0xff]
    %v431 = vld [vmem:[%s1 + $0x308] sm:$0xff]
    %s432 = scalar_lea.vmem %s1, 784
    %v433 = vld [vmem:[%s432] ss:$8 sm:$0x3]
    %v435 = vlaneseq
    %v436 = vshrl.u32 %v435, 7
    %v437 = vsub.s32 0, %v436
    %v438 = vrot.slane %v433, %v437
    %v439 = vlaneseq
    %v440 = vshrl.u32 %v439, 7
    %v441 = vsub.s32 1, %v440
    %v442 = vrot.slane %v433, %v441
    %445 = vmatprep.subr.mxu0 %v431
    %446 = vmatpush1.msra.mxu0 %v430
    %447 = vmatprep.subr.mxu0 %v429
    %448 = vmatpush1.msra.mxu0 %v428
    %449 = vmatprep.subr.mxu0 %v427
    %450 = vmatpush1.msra.mxu0 %v426
    %451 = vmatprep.subr.mxu0 %v425
    %452 = vmatpush1.msra.mxu0 %v424
    %453 = vmatprep.subr.mxu0 %v423
    %454 = vmatpush1.msra.mxu0 %v422
    %455 = vmatprep.subr.mxu0 %v421
    %456 = vmatpush1.msra.mxu0 %v420
    %457 = vmatprep.subr.mxu0 %v419
    %458 = vmatpush1.msra.mxu0 %v418
    %459 = vmatprep.subr.mxu0 %v417
    %460 = vmatpush1.msra.mxu0 %v416
    %461 = vmatprep.subr.mxu0 %v415
    %462 = vmatpush1.msra.mxu0 %v414
    %463 = vmatprep.subr.mxu0 %v413
    %464 = vmatpush1.msra.mxu0 %v412
    %465 = vmatprep.subr.mxu0 %v411
    %466 = vmatpush1.msra.mxu0 %v410
    %467 = vmatprep.subr.mxu0 %v409
    %468 = vmatpush1.msra.mxu0 %v408
    %469 = vmatprep.subr.mxu0 %v407
    %470 = vmatpush1.msra.mxu0 %v406
    %471 = vmatprep.subr.mxu0 %v405
    %472 = vmatpush1.msra.mxu0 %v404
    %473 = vmatprep.subr.mxu0 %v403
    %474 = vmatpush1.msra.mxu0 %v402
    %475 = vmatprep.subr.mxu0 %v401
    %476 = vmatpush1.msra.mxu0 %v400
    %477 = vmatprep.subr.mxu0 0.0
    %478 = vmatpush2.msra.mxu0 0.0
    %479 = vmatprep.subr.mxu0 0.0
    %480 = vmatpush2.msra.mxu0 0.0
    %481 = vmatprep.subr.mxu0 0.0
    %482 = vmatpush2.msra.mxu0 0.0
    %483 = vmatprep.subr.mxu0 0.0
    %484 = vmatpush2.msra.mxu0 0.0
    %485 = vmatprep.subr.mxu0 0.0
    %486 = vmatpush2.msra.mxu0 0.0
    %487 = vmatprep.subr.mxu0 0.0
    %488 = vmatpush2.msra.mxu0 0.0
    %489 = vmatprep.subr.mxu0 0.0
    %490 = vmatpush2.msra.mxu0 0.0
    %491 = vmatprep.subr.mxu0 0.0
    %492 = vmatpush2.msra.mxu0 0.0
    %493 = vmatprep.subr.mxu0 0.0
    %494 = vmatpush2.msra.mxu0 0.0
    %495 = vmatprep.subr.mxu0 0.0
    %496 = vmatpush2.msra.mxu0 0.0
    %497 = vmatprep.subr.mxu0 0.0
    %498 = vmatpush2.msra.mxu0 0.0
    %499 = vmatprep.subr.mxu0 0.0
    %500 = vmatpush2.msra.mxu0 0.0
    %501 = vmatprep.subr.mxu0 0.0
    %502 = vmatpush2.msra.mxu0 0.0
    %503 = vmatprep.subr.mxu0 0.0
    %504 = vmatpush2.msra.mxu0 0.0
    %505 = vmatprep.subr.mxu0 0.0
    %506 = vmatpush2.msra.mxu0 0.0
    %507 = vmatprep.subr.mxu0 0.0
    %508 = vmatpush2.msra.mxu0 0.0
    %509 = vmatprep.mubr.f32.mxu0 0.0
    %510 = vmatmul.mubr.f32.gmra.mxu0 %v392
    %v511 = vpop.f32.mrf.mxu0
    %v512 = vadd.f32 %v438, %v511
    %v513 = vpop.f32.mrf.mxu0
    %v514 = vadd.f32 %v442, %v513
    %515 = vmatprep.mubr.f32.mxu0 0.0
    %516 = vmatmul.mubr.f32.gmra.mxu0 %v393
    %v517 = vpop.f32.mrf.mxu0
    %v518 = vadd.f32 %v438, %v517
    %v519 = vpop.f32.mrf.mxu0
    %v520 = vadd.f32 %v442, %v519
    %521 = vmatprep.mubr.f32.mxu0 0.0
    %522 = vmatmul.mubr.f32.gmra.mxu0 %v394
    %v523 = vpop.f32.mrf.mxu0
    %v524 = vadd.f32 %v438, %v523
    %v525 = vpop.f32.mrf.mxu0
    %v526 = vadd.f32 %v442, %v525
    %527 = vmatprep.mubr.f32.mxu0 0.0
    %528 = vmatmul.mubr.f32.gmra.mxu0 %v395
    %v529 = vpop.f32.mrf.mxu0
    %v530 = vadd.f32 %v438, %v529
    %v531 = vpop.f32.mrf.mxu0
    %v532 = vadd.f32 %v442, %v531
    %533 = vmatprep.mubr.f32.mxu0 0.0
    %534 = vmatmul.mubr.f32.gmra.mxu0 %v396
    %v535 = vpop.f32.mrf.mxu0
    %v536 = vadd.f32 %v438, %v535
    %v537 = vpop.f32.mrf.mxu0
    %v538 = vadd.f32 %v442, %v537
    %539 = vmatprep.mubr.f32.mxu0 0.0
    %540 = vmatmul.mubr.f32.gmra.mxu0 %v397
    %v541 = vpop.f32.mrf.mxu0
    %v542 = vadd.f32 %v438, %v541
    %v543 = vpop.f32.mrf.mxu0
    %v544 = vadd.f32 %v442, %v543
    %545 = vmatprep.mubr.f32.mxu0 0.0
    %546 = vmatmul.mubr.f32.gmra.mxu0 %v398
    %v547 = vpop.f32.mrf.mxu0
    %v548 = vadd.f32 %v438, %v547
    %v549 = vpop.f32.mrf.mxu0
    %v550 = vadd.f32 %v442, %v549
    %551 = vmatprep.mubr.f32.mxu0 0.0
    %552 = vmatmul.mubr.f32.gmra.mxu0 %v399
    %v553 = vpop.f32.mrf.mxu0
    %v554 = vadd.f32 %v438, %v553
    %v555 = vpop.f32.mrf.mxu0
    %v556 = vadd.f32 %v442, %v555
    %557 = vdwg.mxu0
    %v558 = vld [vmem:[#allocation4 + $0x108] sm:$0xff]
    %v559 = vld [vmem:[#allocation4 + $0x110] sm:$0xff]
    %v560 = vld [vmem:[#allocation4 + $0x118] sm:$0xff]
    %v561 = vld [vmem:[#allocation4 + $0x120] sm:$0xff]
    %v562 = vld [vmem:[#allocation4 + $0x128] sm:$0xff]
    %v563 = vld [vmem:[#allocation4 + $0x130] sm:$0xff]
    %v564 = vld [vmem:[#allocation4 + $0x138] sm:$0xff]
    %v565 = vld [vmem:[#allocation4 + $0x140] sm:$0xff]
    %vm566 = vcmask 261120
    %v568 = vsel %vm566, 0.0, 0
    %570 = vmatprep.subr.mxu0 0.0
    %571 = vmatpush1.msra.mxu0 0.0
    %572 = vmatprep.subr.mxu0 0.0
    %573 = vmatpush1.msra.mxu0 0.0
    %574 = vmatprep.subr.mxu0 0.0
    %575 = vmatpush1.msra.mxu0 0.0
    %576 = vmatprep.subr.mxu0 0.0
    %577 = vmatpush1.msra.mxu0 0.0
    %578 = vmatprep.subr.mxu0 0.0
    %579 = vmatpush1.msra.mxu0 0.0
    %580 = vmatprep.subr.mxu0 0.0
    %581 = vmatpush1.msra.mxu0 0.0
    %582 = vmatprep.subr.mxu0 0.0
    %583 = vmatpush1.msra.mxu0 0.0
    %584 = vmatprep.subr.mxu0 0.0
    %585 = vmatpush1.msra.mxu0 0.0
    %586 = vmatprep.subr.mxu0 0.0
    %587 = vmatpush1.msra.mxu0 0.0
    %588 = vmatprep.subr.mxu0 0.0
    %589 = vmatpush1.msra.mxu0 0.0
    %590 = vmatprep.subr.mxu0 0.0
    %591 = vmatpush1.msra.mxu0 0.0
    %592 = vmatprep.subr.mxu0 0.0
    %593 = vmatpush1.msra.mxu0 0.0
    %594 = vmatprep.subr.mxu0 0.0
    %595 = vmatpush1.msra.mxu0 %v561
    %596 = vmatprep.subr.mxu0 0.0
    %597 = vmatpush1.msra.mxu0 %v560
    %598 = vmatprep.subr.mxu0 0.0
    %599 = vmatpush1.msra.mxu0 %v559
    %600 = vmatprep.subr.mxu0 0.0
    %601 = vmatpush1.msra.mxu0 %v558
    %602 = vmatprep.subr.mxu0 0.0
    %603 = vmatpush2.msra.mxu0 0.0
    %604 = vmatprep.subr.mxu0 0.0
    %605 = vmatpush2.msra.mxu0 0.0
    %606 = vmatprep.subr.mxu0 0.0
    %607 = vmatpush2.msra.mxu0 0.0
    %608 = vmatprep.subr.mxu0 0.0
    %609 = vmatpush2.msra.mxu0 0.0
    %610 = vmatprep.subr.mxu0 0.0
    %611 = vmatpush2.msra.mxu0 0.0
    %612 = vmatprep.subr.mxu0 0.0
    %613 = vmatpush2.msra.mxu0 0.0
    %614 = vmatprep.subr.mxu0 0.0
    %615 = vmatpush2.msra.mxu0 0.0
    %616 = vmatprep.subr.mxu0 0.0
    %617 = vmatpush2.msra.mxu0 0.0
    %618 = vmatprep.subr.mxu0 0.0
    %619 = vmatpush2.msra.mxu0 0.0
    %620 = vmatprep.subr.mxu0 0.0
    %621 = vmatpush2.msra.mxu0 0.0
    %622 = vmatprep.subr.mxu0 0.0
    %623 = vmatpush2.msra.mxu0 0.0
    %624 = vmatprep.subr.mxu0 0.0
    %625 = vmatpush2.msra.mxu0 0.0
    %626 = vmatprep.subr.mxu0 0.0
    %627 = vmatpush2.msra.mxu0 0.0
    %628 = vmatprep.subr.mxu0 0.0
    %629 = vmatpush2.msra.mxu0 0.0
    %630 = vmatprep.subr.mxu0 0.0
    %631 = vmatpush2.msra.mxu0 0.0
    %632 = vmatprep.subr.mxu0 0.0
    %633 = vmatpush2.msra.mxu0 0.0
    %634 = vmatprep.mubr.f32.mxu0 0.0
    %635 = vmatmul.mubr.f32.gmra.mxu0 %v568
    %v636 = vpop.f32.mrf.mxu0
    %v637 = vadd.f32 0.0, %v636
    %v638 = vpop.f32.mrf.mxu0
    %639 = vdwg.mxu0
    %v640 = vadd.f32 %v512, %v637
    %641 = vmatprep.subr.mxu0 0.0
    %642 = vmatpush1.msra.mxu0 0.0
    %643 = vmatprep.subr.mxu0 0.0
    %644 = vmatpush1.msra.mxu0 0.0
    %645 = vmatprep.subr.mxu0 0.0
    %646 = vmatpush1.msra.mxu0 0.0
    %647 = vmatprep.subr.mxu0 0.0
    %648 = vmatpush1.msra.mxu0 0.0
    %649 = vmatprep.subr.mxu0 0.0
    %650 = vmatpush1.msra.mxu0 0.0
    %651 = vmatprep.subr.mxu0 0.0
    %652 = vmatpush1.msra.mxu0 0.0
    %653 = vmatprep.subr.mxu0 0.0
    %654 = vmatpush1.msra.mxu0 0.0
    %655 = vmatprep.subr.mxu0 0.0
    %656 = vmatpush1.msra.mxu0 0.0
    %657 = vmatprep.subr.mxu0 0.0
    %658 = vmatpush1.msra.mxu0 0.0
    %659 = vmatprep.subr.mxu0 0.0
    %660 = vmatpush1.msra.mxu0 0.0
    %661 = vmatprep.subr.mxu0 0.0
    %662 = vmatpush1.msra.mxu0 0.0
    %663 = vmatprep.subr.mxu0 0.0
    %664 = vmatpush1.msra.mxu0 0.0
    %665 = vmatprep.subr.mxu0 0.0
    %666 = vmatpush1.msra.mxu0 %v565
    %667 = vmatprep.subr.mxu0 0.0
    %668 = vmatpush1.msra.mxu0 %v564
    %669 = vmatprep.subr.mxu0 0.0
    %670 = vmatpush1.msra.mxu0 %v563
    %671 = vmatprep.subr.mxu0 0.0
    %672 = vmatpush1.msra.mxu0 %v562
    %673 = vmatprep.subr.mxu0 0.0
    %674 = vmatpush2.msra.mxu0 0.0
    %675 = vmatprep.subr.mxu0 0.0
    %676 = vmatpush2.msra.mxu0 0.0
    %677 = vmatprep.subr.mxu0 0.0
    %678 = vmatpush2.msra.mxu0 0.0
    %679 = vmatprep.subr.mxu0 0.0
    %680 = vmatpush2.msra.mxu0 0.0
    %681 = vmatprep.subr.mxu0 0.0
    %682 = vmatpush2.msra.mxu0 0.0
    %683 = vmatprep.subr.mxu0 0.0
    %684 = vmatpush2.msra.mxu0 0.0
    %685 = vmatprep.subr.mxu0 0.0
    %686 = vmatpush2.msra.mxu0 0.0
    %687 = vmatprep.subr.mxu0 0.0
    %688 = vmatpush2.msra.mxu0 0.0
    %689 = vmatprep.subr.mxu0 0.0
    %690 = vmatpush2.msra.mxu0 0.0
    %691 = vmatprep.subr.mxu0 0.0
    %692 = vmatpush2.msra.mxu0 0.0
    %693 = vmatprep.subr.mxu0 0.0
    %694 = vmatpush2.msra.mxu0 0.0
    %695 = vmatprep.subr.mxu0 0.0
    %696 = vmatpush2.msra.mxu0 0.0
    %697 = vmatprep.subr.mxu0 0.0
    %698 = vmatpush2.msra.mxu0 0.0
    %699 = vmatprep.subr.mxu0 0.0
    %700 = vmatpush2.msra.mxu0 0.0
    %701 = vmatprep.subr.mxu0 0.0
    %702 = vmatpush2.msra.mxu0 0.0
    %703 = vmatprep.subr.mxu0 0.0
    %704 = vmatpush2.msra.mxu0 0.0
    %705 = vmatprep.mubr.f32.mxu0 0.0
    %706 = vmatmul.mubr.f32.gmra.mxu0 %v568
    %v707 = vpop.f32.mrf.mxu0
    %v708 = vadd.f32 0.0, %v707
    %v709 = vpop.f32.mrf.mxu0
    %710 = vdwg.mxu0
    %v711 = vadd.f32 %v556, %v708
    %v712 = vxor.u32 %v640, 2147483648
    %v713 = vmul.f32 %v712, 1.442695
    %v714 = vpow.pop %v713
    %v715 = vadd.f32 %v714, 1.0
    %v716 = vrcp.pop %v715
    %v717 = vmul.f32 1.0, %v716
    %v718 = vtanh.pop %v640
    %v719 = vmul.f32 %v717, 0.0
    %721 = vrot.lane.b32.xlu0 %v718, 64
    %v722 = vpop.permute.xlu0 %721
    %v724 = vmul.f32 %v717, %v722
    %726 = vrot.lane.b32.xlu0 %v724, 32
    %v727 = vpop.permute.xlu0 %726
    %v729 = vadd.f32 %v719, %v727
    %v730 = vtanh.pop %v729
    %732 = vrot.lane.b32.xlu0 %v730, 64
    %v733 = vpop.permute.xlu0 %732
    %v735 = vmul.f32 %v717, %v733
    %v736 = vxor.u32 %v711, 2147483648
    %v737 = vmul.f32 %v736, 1.442695
    %v738 = vpow.pop %v737
    %v739 = vadd.f32 %v738, 1.0
    %v740 = vrcp.pop %v739
    %v741 = vmul.f32 1.0, %v740
    %v742 = vtanh.pop %v711
    %v743 = vmul.f32 %v741, 0.0
    %745 = vrot.lane.b32.xlu0 %v742, 64
    %v746 = vpop.permute.xlu0 %745
    %v748 = vmul.f32 %v741, %v746
    %750 = vrot.lane.b32.xlu0 %v748, 32
    %v751 = vpop.permute.xlu0 %750
    %v753 = vadd.f32 %v743, %v751
    %v754 = vtanh.pop %v753
    %756 = vrot.lane.b32.xlu0 %v754, 64
    %v757 = vpop.permute.xlu0 %756
    %v759 = vmul.f32 %v741, %v757
    %761 = vrot.lane.b32.xlu0 %v735, 32
    %v762 = vpop.permute.xlu0 %761
    %764 = vst.msk [vmem:[#allocation2] sm:$0xff] %vm566, %v762
    %766 = vrot.lane.b32.xlu0 %v759, 32
    %v767 = vpop.permute.xlu0 %766
    %769 = vst.msk [vmem:[#allocation3 + $0x38] sm:$0xff] %vm566, %v767
    %v770 = vsel %vm566, %v762, 0
    %772 = vmatprep.subr.mxu0 0.0
    %773 = vmatpush1.msra.mxu0 0.0
    %774 = vmatprep.subr.mxu0 0.0
    %775 = vmatpush1.msra.mxu0 0.0
    %776 = vmatprep.subr.mxu0 0.0
    %777 = vmatpush1.msra.mxu0 0.0
    %778 = vmatprep.subr.mxu0 0.0
    %779 = vmatpush1.msra.mxu0 0.0
    %780 = vmatprep.subr.mxu0 0.0
    %781 = vmatpush1.msra.mxu0 0.0
    %782 = vmatprep.subr.mxu0 0.0
    %783 = vmatpush1.msra.mxu0 0.0
    %784 = vmatprep.subr.mxu0 0.0
    %785 = vmatpush1.msra.mxu0 0.0
    %786 = vmatprep.subr.mxu0 0.0
    %787 = vmatpush1.msra.mxu0 0.0
    %788 = vmatprep.subr.mxu0 0.0
    %789 = vmatpush1.msra.mxu0 0.0
    %790 = vmatprep.subr.mxu0 0.0
    %791 = vmatpush1.msra.mxu0 0.0
    %792 = vmatprep.subr.mxu0 0.0
    %793 = vmatpush1.msra.mxu0 0.0
    %794 = vmatprep.subr.mxu0 0.0
    %795 = vmatpush1.msra.mxu0 0.0
    %796 = vmatprep.subr.mxu0 0.0
    %797 = vmatpush1.msra.mxu0 %v561
    %798 = vmatprep.subr.mxu0 0.0
    %799 = vmatpush1.msra.mxu0 %v560
    %800 = vmatprep.subr.mxu0 0.0
    %801 = vmatpush1.msra.mxu0 %v559
    %802 = vmatprep.subr.mxu0 0.0
    %803 = vmatpush1.msra.mxu0 %v558
    %804 = vmatprep.subr.mxu0 0.0
    %805 = vmatpush2.msra.mxu0 0.0
    %806 = vmatprep.subr.mxu0 0.0
    %807 = vmatpush2.msra.mxu0 0.0
    %808 = vmatprep.subr.mxu0 0.0
    %809 = vmatpush2.msra.mxu0 0.0
    %810 = vmatprep.subr.mxu0 0.0
    %811 = vmatpush2.msra.mxu0 0.0
    %812 = vmatprep.subr.mxu0 0.0
    %813 = vmatpush2.msra.mxu0 0.0
    %814 = vmatprep.subr.mxu0 0.0
    %815 = vmatpush2.msra.mxu0 0.0
    %816 = vmatprep.subr.mxu0 0.0
    %817 = vmatpush2.msra.mxu0 0.0
    %818 = vmatprep.subr.mxu0 0.0
    %819 = vmatpush2.msra.mxu0 0.0
    %820 = vmatprep.subr.mxu0 0.0
    %821 = vmatpush2.msra.mxu0 0.0
    %822 = vmatprep.subr.mxu0 0.0
    %823 = vmatpush2.msra.mxu0 0.0
    %824 = vmatprep.subr.mxu0 0.0
    %825 = vmatpush2.msra.mxu0 0.0
    %826 = vmatprep.subr.mxu0 0.0
    %827 = vmatpush2.msra.mxu0 0.0
    %828 = vmatprep.subr.mxu0 0.0
    %829 = vmatpush2.msra.mxu0 0.0
    %830 = vmatprep.subr.mxu0 0.0
    %831 = vmatpush2.msra.mxu0 0.0
    %832 = vmatprep.subr.mxu0 0.0
    %833 = vmatpush2.msra.mxu0 0.0
    %834 = vmatprep.subr.mxu0 0.0
    %835 = vmatpush2.msra.mxu0 0.0
    %836 = vmatprep.mubr.f32.mxu0 0.0
    %837 = vmatmul.mubr.f32.gmra.mxu0 %v770
    %v838 = vpop.f32.mrf.mxu0
    %v839 = vadd.f32 0.0, %v838
    %v840 = vpop.f32.mrf.mxu0
    %841 = vdwg.mxu0
    %v842 = vadd.f32 %v518, %v839
    %v843 = vsel %vm566, %v767, 0
    %845 = vmatprep.subr.mxu0 0.0
    %846 = vmatpush1.msra.mxu0 0.0
    %847 = vmatprep.subr.mxu0 0.0
    %848 = vmatpush1.msra.mxu0 0.0
    %849 = vmatprep.subr.mxu0 0.0
    %850 = vmatpush1.msra.mxu0 0.0
    %851 = vmatprep.subr.mxu0 0.0
    %852 = vmatpush1.msra.mxu0 0.0
    %853 = vmatprep.subr.mxu0 0.0
    %854 = vmatpush1.msra.mxu0 0.0
    %855 = vmatprep.subr.mxu0 0.0
    %856 = vmatpush1.msra.mxu0 0.0
    %857 = vmatprep.subr.mxu0 0.0
    %858 = vmatpush1.msra.mxu0 0.0
    %859 = vmatprep.subr.mxu0 0.0
    %860 = vmatpush1.msra.mxu0 0.0
    %861 = vmatprep.subr.mxu0 0.0
    %862 = vmatpush1.msra.mxu0 0.0
    %863 = vmatprep.subr.mxu0 0.0
    %864 = vmatpush1.msra.mxu0 0.0
    %865 = vmatprep.subr.mxu0 0.0
    %866 = vmatpush1.msra.mxu0 0.0
    %867 = vmatprep.subr.mxu0 0.0
    %868 = vmatpush1.msra.mxu0 0.0
    %869 = vmatprep.subr.mxu0 0.0
    %870 = vmatpush1.msra.mxu0 %v565
    %871 = vmatprep.subr.mxu0 0.0
    %872 = vmatpush1.msra.mxu0 %v564
    %873 = vmatprep.subr.mxu0 0.0
    %874 = vmatpush1.msra.mxu0 %v563
    %875 = vmatprep.subr.mxu0 0.0
    %876 = vmatpush1.msra.mxu0 %v562
    %877 = vmatprep.subr.mxu0 0.0
    %878 = vmatpush2.msra.mxu0 0.0
    %879 = vmatprep.subr.mxu0 0.0
    %880 = vmatpush2.msra.mxu0 0.0
    %881 = vmatprep.subr.mxu0 0.0
    %882 = vmatpush2.msra.mxu0 0.0
    %883 = vmatprep.subr.mxu0 0.0
    %884 = vmatpush2.msra.mxu0 0.0
    %885 = vmatprep.subr.mxu0 0.0
    %886 = vmatpush2.msra.mxu0 0.0
    %887 = vmatprep.subr.mxu0 0.0
    %888 = vmatpush2.msra.mxu0 0.0
    %889 = vmatprep.subr.mxu0 0.0
    %890 = vmatpush2.msra.mxu0 0.0
    %891 = vmatprep.subr.mxu0 0.0
    %892 = vmatpush2.msra.mxu0 0.0
    %893 = vmatprep.subr.mxu0 0.0
    %894 = vmatpush2.msra.mxu0 0.0
    %895 = vmatprep.subr.mxu0 0.0
    %896 = vmatpush2.msra.mxu0 0.0
    %897 = vmatprep.subr.mxu0 0.0
    %898 = vmatpush2.msra.mxu0 0.0
    %899 = vmatprep.subr.mxu0 0.0
    %900 = vmatpush2.msra.mxu0 0.0
    %901 = vmatprep.subr.mxu0 0.0
    %902 = vmatpush2.msra.mxu0 0.0
    %903 = vmatprep.subr.mxu0 0.0
    %904 = vmatpush2.msra.mxu0 0.0
    %905 = vmatprep.subr.mxu0 0.0
    %906 = vmatpush2.msra.mxu0 0.0
    %907 = vmatprep.subr.mxu0 0.0
    %908 = vmatpush2.msra.mxu0 0.0
    %909 = vmatprep.mubr.f32.mxu0 0.0
    %910 = vmatmul.mubr.f32.gmra.mxu0 %v843
    %v911 = vpop.f32.mrf.mxu0
    %v912 = vadd.f32 0.0, %v911
    %v913 = vpop.f32.mrf.mxu0
    %914 = vdwg.mxu0
    %v915 = vadd.f32 %v550, %v912
    %v916 = vxor.u32 %v842, 2147483648
    %v917 = vmul.f32 %v916, 1.442695
    %v918 = vpow.pop %v917
    %v919 = vadd.f32 %v918, 1.0
    %v920 = vrcp.pop %v919
    %v921 = vmul.f32 1.0, %v920
    %v922 = vtanh.pop %v842
    %v923 = vmul.f32 %v921, %v729
    %925 = vrot.lane.b32.xlu0 %v922, 64
    %v926 = vpop.permute.xlu0 %925
    %v928 = vmul.f32 %v921, %v926
    %930 = vrot.lane.b32.xlu0 %v928, 32
    %v931 = vpop.permute.xlu0 %930
    %v933 = vadd.f32 %v923, %v931
    %v934 = vtanh.pop %v933
    %936 = vrot.lane.b32.xlu0 %v934, 64
    %v937 = vpop.permute.xlu0 %936
    %v939 = vmul.f32 %v921, %v937
    %v940 = vxor.u32 %v915, 2147483648
    %v941 = vmul.f32 %v940, 1.442695
    %v942 = vpow.pop %v941
    %v943 = vadd.f32 %v942, 1.0
    %v944 = vrcp.pop %v943
    %v945 = vmul.f32 1.0, %v944
    %v946 = vtanh.pop %v915
    %v947 = vmul.f32 %v945, %v753
    %949 = vrot.lane.b32.xlu0 %v946, 64
    %v950 = vpop.permute.xlu0 %949
    %v952 = vmul.f32 %v945, %v950
    %954 = vrot.lane.b32.xlu0 %v952, 32
    %v955 = vpop.permute.xlu0 %954
    %v957 = vadd.f32 %v947, %v955
    %v958 = vtanh.pop %v957
    %960 = vrot.lane.b32.xlu0 %v958, 64
    %v961 = vpop.permute.xlu0 %960
    %v963 = vmul.f32 %v945, %v961
    %965 = vrot.lane.b32.xlu0 %v939, 32
    %v966 = vpop.permute.xlu0 %965
    %968 = vst.msk [vmem:[#allocation2 + $0x8] sm:$0xff] %vm566, %v966
    %970 = vrot.lane.b32.xlu0 %v963, 32
    %v971 = vpop.permute.xlu0 %970
    %973 = vst.msk [vmem:[#allocation3 + $0x30] sm:$0xff] %vm566, %v971
    %v974 = vsel %vm566, %v966, 0
    %976 = vmatprep.subr.mxu0 0.0
    %977 = vmatpush1.msra.mxu0 0.0
    %978 = vmatprep.subr.mxu0 0.0
    %979 = vmatpush1.msra.mxu0 0.0
    %980 = vmatprep.subr.mxu0 0.0
    %981 = vmatpush1.msra.mxu0 0.0
    %982 = vmatprep.subr.mxu0 0.0
    %983 = vmatpush1.msra.mxu0 0.0
    %984 = vmatprep.subr.mxu0 0.0
    %985 = vmatpush1.msra.mxu0 0.0
    %986 = vmatprep.subr.mxu0 0.0
    %987 = vmatpush1.msra.mxu0 0.0
    %988 = vmatprep.subr.mxu0 0.0
    %989 = vmatpush1.msra.mxu0 0.0
    %990 = vmatprep.subr.mxu0 0.0
    %991 = vmatpush1.msra.mxu0 0.0
    %992 = vmatprep.subr.mxu0 0.0
    %993 = vmatpush1.msra.mxu0 0.0
    %994 = vmatprep.subr.mxu0 0.0
    %995 = vmatpush1.msra.mxu0 0.0
    %996 = vmatprep.subr.mxu0 0.0
    %997 = vmatpush1.msra.mxu0 0.0
    %998 = vmatprep.subr.mxu0 0.0
    %999 = vmatpush1.msra.mxu0 0.0
    %1000 = vmatprep.subr.mxu0 0.0
    %1001 = vmatpush1.msra.mxu0 %v561
    %1002 = vmatprep.subr.mxu0 0.0
    %1003 = vmatpush1.msra.mxu0 %v560
    %1004 = vmatprep.subr.mxu0 0.0
    %1005 = vmatpush1.msra.mxu0 %v559
    %1006 = vmatprep.subr.mxu0 0.0
    %1007 = vmatpush1.msra.mxu0 %v558
    %1008 = vmatprep.subr.mxu0 0.0
    %1009 = vmatpush2.msra.mxu0 0.0
    %1010 = vmatprep.subr.mxu0 0.0
    %1011 = vmatpush2.msra.mxu0 0.0
    %1012 = vmatprep.subr.mxu0 0.0
    %1013 = vmatpush2.msra.mxu0 0.0
    %1014 = vmatprep.subr.mxu0 0.0
    %1015 = vmatpush2.msra.mxu0 0.0
    %1016 = vmatprep.subr.mxu0 0.0
    %1017 = vmatpush2.msra.mxu0 0.0
    %1018 = vmatprep.subr.mxu0 0.0
    %1019 = vmatpush2.msra.mxu0 0.0
    %1020 = vmatprep.subr.mxu0 0.0
    %1021 = vmatpush2.msra.mxu0 0.0
    %1022 = vmatprep.subr.mxu0 0.0
    %1023 = vmatpush2.msra.mxu0 0.0
    %1024 = vmatprep.subr.mxu0 0.0
    %1025 = vmatpush2.msra.mxu0 0.0
    %1026 = vmatprep.subr.mxu0 0.0
    %1027 = vmatpush2.msra.mxu0 0.0
    %1028 = vmatprep.subr.mxu0 0.0
    %1029 = vmatpush2.msra.mxu0 0.0
    %1030 = vmatprep.subr.mxu0 0.0
    %1031 = vmatpush2.msra.mxu0 0.0
    %1032 = vmatprep.subr.mxu0 0.0
    %1033 = vmatpush2.msra.mxu0 0.0
    %1034 = vmatprep.subr.mxu0 0.0
    %1035 = vmatpush2.msra.mxu0 0.0
    %1036 = vmatprep.subr.mxu0 0.0
    %1037 = vmatpush2.msra.mxu0 0.0
    %1038 = vmatprep.subr.mxu0 0.0
    %1039 = vmatpush2.msra.mxu0 0.0
    %1040 = vmatprep.mubr.f32.mxu0 0.0
    %1041 = vmatmul.mubr.f32.gmra.mxu0 %v974
    %v1042 = vpop.f32.mrf.mxu0
    %v1043 = vadd.f32 0.0, %v1042
    %v1044 = vpop.f32.mrf.mxu0
    %1045 = vdwg.mxu0
    %v1046 = vadd.f32 %v524, %v1043
    %v1047 = vsel %vm566, %v971, 0
    %1049 = vmatprep.subr.mxu0 0.0
    %1050 = vmatpush1.msra.mxu0 0.0
    %1051 = vmatprep.subr.mxu0 0.0
    %1052 = vmatpush1.msra.mxu0 0.0
    %1053 = vmatprep.subr.mxu0 0.0
    %1054 = vmatpush1.msra.mxu0 0.0
    %1055 = vmatprep.subr.mxu0 0.0
    %1056 = vmatpush1.msra.mxu0 0.0
    %1057 = vmatprep.subr.mxu0 0.0
    %1058 = vmatpush1.msra.mxu0 0.0
    %1059 = vmatprep.subr.mxu0 0.0
    %1060 = vmatpush1.msra.mxu0 0.0
    %1061 = vmatprep.subr.mxu0 0.0
    %1062 = vmatpush1.msra.mxu0 0.0
    %1063 = vmatprep.subr.mxu0 0.0
    %1064 = vmatpush1.msra.mxu0 0.0
    %1065 = vmatprep.subr.mxu0 0.0
    %1066 = vmatpush1.msra.mxu0 0.0
    %1067 = vmatprep.subr.mxu0 0.0
    %1068 = vmatpush1.msra.mxu0 0.0
    %1069 = vmatprep.subr.mxu0 0.0
    %1070 = vmatpush1.msra.mxu0 0.0
    %1071 = vmatprep.subr.mxu0 0.0
    %1072 = vmatpush1.msra.mxu0 0.0
    %1073 = vmatprep.subr.mxu0 0.0
    %1074 = vmatpush1.msra.mxu0 %v565
    %1075 = vmatprep.subr.mxu0 0.0
    %1076 = vmatpush1.msra.mxu0 %v564
    %1077 = vmatprep.subr.mxu0 0.0
    %1078 = vmatpush1.msra.mxu0 %v563
    %1079 = vmatprep.subr.mxu0 0.0
    %1080 = vmatpush1.msra.mxu0 %v562
    %1081 = vmatprep.subr.mxu0 0.0
    %1082 = vmatpush2.msra.mxu0 0.0
    %1083 = vmatprep.subr.mxu0 0.0
    %1084 = vmatpush2.msra.mxu0 0.0
    %1085 = vmatprep.subr.mxu0 0.0
    %1086 = vmatpush2.msra.mxu0 0.0
    %1087 = vmatprep.subr.mxu0 0.0
    %1088 = vmatpush2.msra.mxu0 0.0
    %1089 = vmatprep.subr.mxu0 0.0
    %1090 = vmatpush2.msra.mxu0 0.0
    %1091 = vmatprep.subr.mxu0 0.0
    %1092 = vmatpush2.msra.mxu0 0.0
    %1093 = vmatprep.subr.mxu0 0.0
    %1094 = vmatpush2.msra.mxu0 0.0
    %1095 = vmatprep.subr.mxu0 0.0
    %1096 = vmatpush2.msra.mxu0 0.0
    %1097 = vmatprep.subr.mxu0 0.0
    %1098 = vmatpush2.msra.mxu0 0.0
    %1099 = vmatprep.subr.mxu0 0.0
    %1100 = vmatpush2.msra.mxu0 0.0
    %1101 = vmatprep.subr.mxu0 0.0
    %1102 = vmatpush2.msra.mxu0 0.0
    %1103 = vmatprep.subr.mxu0 0.0
    %1104 = vmatpush2.msra.mxu0 0.0
    %1105 = vmatprep.subr.mxu0 0.0
    %1106 = vmatpush2.msra.mxu0 0.0
    %1107 = vmatprep.subr.mxu0 0.0
    %1108 = vmatpush2.msra.mxu0 0.0
    %1109 = vmatprep.subr.mxu0 0.0
    %1110 = vmatpush2.msra.mxu0 0.0
    %1111 = vmatprep.subr.mxu0 0.0
    %1112 = vmatpush2.msra.mxu0 0.0
    %1113 = vmatprep.mubr.f32.mxu0 0.0
    %1114 = vmatmul.mubr.f32.gmra.mxu0 %v1047
    %v1115 = vpop.f32.mrf.mxu0
    %v1116 = vadd.f32 0.0, %v1115
    %v1117 = vpop.f32.mrf.mxu0
    %1118 = vdwg.mxu0
    %v1119 = vadd.f32 %v544, %v1116
    %v1120 = vxor.u32 %v1046, 2147483648
    %v1121 = vmul.f32 %v1120, 1.442695
    %v1122 = vpow.pop %v1121
    %v1123 = vadd.f32 %v1122, 1.0
    %v1124 = vrcp.pop %v1123
    %v1125 = vmul.f32 1.0, %v1124
    %v1126 = vtanh.pop %v1046
    %v1127 = vmul.f32 %v1125, %v933
    %1129 = vrot.lane.b32.xlu0 %v1126, 64
    %v1130 = vpop.permute.xlu0 %1129
    %v1132 = vmul.f32 %v1125, %v1130
    %1134 = vrot.lane.b32.xlu0 %v1132, 32
    %v1135 = vpop.permute.xlu0 %1134
    %v1137 = vadd.f32 %v1127, %v1135
    %v1138 = vtanh.pop %v1137
    %1140 = vrot.lane.b32.xlu0 %v1138, 64
    %v1141 = vpop.permute.xlu0 %1140
    %v1143 = vmul.f32 %v1125, %v1141
    %v1144 = vxor.u32 %v1119, 2147483648
    %v1145 = vmul.f32 %v1144, 1.442695
    %v1146 = vpow.pop %v1145
    %v1147 = vadd.f32 %v1146, 1.0
    %v1148 = vrcp.pop %v1147
    %v1149 = vmul.f32 1.0, %v1148
    %v1150 = vtanh.pop %v1119
    %v1151 = vmul.f32 %v1149, %v957
    %1153 = vrot.lane.b32.xlu0 %v1150, 64
    %v1154 = vpop.permute.xlu0 %1153
    %v1156 = vmul.f32 %v1149, %v1154
    %1158 = vrot.lane.b32.xlu0 %v1156, 32
    %v1159 = vpop.permute.xlu0 %1158
    %v1161 = vadd.f32 %v1151, %v1159
    %v1162 = vtanh.pop %v1161
    %1164 = vrot.lane.b32.xlu0 %v1162, 64
    %v1165 = vpop.permute.xlu0 %1164
    %v1167 = vmul.f32 %v1149, %v1165
    %1169 = vrot.lane.b32.xlu0 %v1143, 32
    %v1170 = vpop.permute.xlu0 %1169
    %1172 = vst.msk [vmem:[#allocation2 + $0x10] sm:$0xff] %vm566, %v1170
    %1174 = vrot.lane.b32.xlu0 %v1167, 32
    %v1175 = vpop.permute.xlu0 %1174
    %1177 = vst.msk [vmem:[#allocation3 + $0x28] sm:$0xff] %vm566, %v1175
    %v1178 = vsel %vm566, %v1170, 0
    %1180 = vmatprep.subr.mxu0 0.0
    %1181 = vmatpush1.msra.mxu0 0.0
    %1182 = vmatprep.subr.mxu0 0.0
    %1183 = vmatpush1.msra.mxu0 0.0
    %1184 = vmatprep.subr.mxu0 0.0
    %1185 = vmatpush1.msra.mxu0 0.0
    %1186 = vmatprep.subr.mxu0 0.0
    %1187 = vmatpush1.msra.mxu0 0.0
    %1188 = vmatprep.subr.mxu0 0.0
    %1189 = vmatpush1.msra.mxu0 0.0
    %1190 = vmatprep.subr.mxu0 0.0
    %1191 = vmatpush1.msra.mxu0 0.0
    %1192 = vmatprep.subr.mxu0 0.0
    %1193 = vmatpush1.msra.mxu0 0.0
    %1194 = vmatprep.subr.mxu0 0.0
    %1195 = vmatpush1.msra.mxu0 0.0
    %1196 = vmatprep.subr.mxu0 0.0
    %1197 = vmatpush1.msra.mxu0 0.0
    %1198 = vmatprep.subr.mxu0 0.0
    %1199 = vmatpush1.msra.mxu0 0.0
    %1200 = vmatprep.subr.mxu0 0.0
    %1201 = vmatpush1.msra.mxu0 0.0
    %1202 = vmatprep.subr.mxu0 0.0
    %1203 = vmatpush1.msra.mxu0 0.0
    %1204 = vmatprep.subr.mxu0 0.0
    %1205 = vmatpush1.msra.mxu0 %v561
    %1206 = vmatprep.subr.mxu0 0.0
    %1207 = vmatpush1.msra.mxu0 %v560
    %1208 = vmatprep.subr.mxu0 0.0
    %1209 = vmatpush1.msra.mxu0 %v559
    %1210 = vmatprep.subr.mxu0 0.0
    %1211 = vmatpush1.msra.mxu0 %v558
    %1212 = vmatprep.subr.mxu0 0.0
    %1213 = vmatpush2.msra.mxu0 0.0
    %1214 = vmatprep.subr.mxu0 0.0
    %1215 = vmatpush2.msra.mxu0 0.0
    %1216 = vmatprep.subr.mxu0 0.0
    %1217 = vmatpush2.msra.mxu0 0.0
    %1218 = vmatprep.subr.mxu0 0.0
    %1219 = vmatpush2.msra.mxu0 0.0
    %1220 = vmatprep.subr.mxu0 0.0
    %1221 = vmatpush2.msra.mxu0 0.0
    %1222 = vmatprep.subr.mxu0 0.0
    %1223 = vmatpush2.msra.mxu0 0.0
    %1224 = vmatprep.subr.mxu0 0.0
    %1225 = vmatpush2.msra.mxu0 0.0
    %1226 = vmatprep.subr.mxu0 0.0
    %1227 = vmatpush2.msra.mxu0 0.0
    %1228 = vmatprep.subr.mxu0 0.0
    %1229 = vmatpush2.msra.mxu0 0.0
    %1230 = vmatprep.subr.mxu0 0.0
    %1231 = vmatpush2.msra.mxu0 0.0
    %1232 = vmatprep.subr.mxu0 0.0
    %1233 = vmatpush2.msra.mxu0 0.0
    %1234 = vmatprep.subr.mxu0 0.0
    %1235 = vmatpush2.msra.mxu0 0.0
    %1236 = vmatprep.subr.mxu0 0.0
    %1237 = vmatpush2.msra.mxu0 0.0
    %1238 = vmatprep.subr.mxu0 0.0
    %1239 = vmatpush2.msra.mxu0 0.0
    %1240 = vmatprep.subr.mxu0 0.0
    %1241 = vmatpush2.msra.mxu0 0.0
    %1242 = vmatprep.subr.mxu0 0.0
    %1243 = vmatpush2.msra.mxu0 0.0
    %1244 = vmatprep.mubr.f32.mxu0 0.0
    %1245 = vmatmul.mubr.f32.gmra.mxu0 %v1178
    %v1246 = vpop.f32.mrf.mxu0
    %v1247 = vadd.f32 0.0, %v1246
    %v1248 = vpop.f32.mrf.mxu0
    %1249 = vdwg.mxu0
    %v1250 = vadd.f32 %v530, %v1247
    %v1251 = vsel %vm566, %v1175, 0
    %1253 = vmatprep.subr.mxu0 0.0
    %1254 = vmatpush1.msra.mxu0 0.0
    %1255 = vmatprep.subr.mxu0 0.0
    %1256 = vmatpush1.msra.mxu0 0.0
    %1257 = vmatprep.subr.mxu0 0.0
    %1258 = vmatpush1.msra.mxu0 0.0
    %1259 = vmatprep.subr.mxu0 0.0
    %1260 = vmatpush1.msra.mxu0 0.0
    %1261 = vmatprep.subr.mxu0 0.0
    %1262 = vmatpush1.msra.mxu0 0.0
    %1263 = vmatprep.subr.mxu0 0.0
    %1264 = vmatpush1.msra.mxu0 0.0
    %1265 = vmatprep.subr.mxu0 0.0
    %1266 = vmatpush1.msra.mxu0 0.0
    %1267 = vmatprep.subr.mxu0 0.0
    %1268 = vmatpush1.msra.mxu0 0.0
    %1269 = vmatprep.subr.mxu0 0.0
    %1270 = vmatpush1.msra.mxu0 0.0
    %1271 = vmatprep.subr.mxu0 0.0
    %1272 = vmatpush1.msra.mxu0 0.0
    %1273 = vmatprep.subr.mxu0 0.0
    %1274 = vmatpush1.msra.mxu0 0.0
    %1275 = vmatprep.subr.mxu0 0.0
    %1276 = vmatpush1.msra.mxu0 0.0
    %1277 = vmatprep.subr.mxu0 0.0
    %1278 = vmatpush1.msra.mxu0 %v565
    %1279 = vmatprep.subr.mxu0 0.0
    %1280 = vmatpush1.msra.mxu0 %v564
    %1281 = vmatprep.subr.mxu0 0.0
    %1282 = vmatpush1.msra.mxu0 %v563
    %1283 = vmatprep.subr.mxu0 0.0
    %1284 = vmatpush1.msra.mxu0 %v562
    %1285 = vmatprep.subr.mxu0 0.0
    %1286 = vmatpush2.msra.mxu0 0.0
    %1287 = vmatprep.subr.mxu0 0.0
    %1288 = vmatpush2.msra.mxu0 0.0
    %1289 = vmatprep.subr.mxu0 0.0
    %1290 = vmatpush2.msra.mxu0 0.0
    %1291 = vmatprep.subr.mxu0 0.0
    %1292 = vmatpush2.msra.mxu0 0.0
    %1293 = vmatprep.subr.mxu0 0.0
    %1294 = vmatpush2.msra.mxu0 0.0
    %1295 = vmatprep.subr.mxu0 0.0
    %1296 = vmatpush2.msra.mxu0 0.0
    %1297 = vmatprep.subr.mxu0 0.0
    %1298 = vmatpush2.msra.mxu0 0.0
    %1299 = vmatprep.subr.mxu0 0.0
    %1300 = vmatpush2.msra.mxu0 0.0
    %1301 = vmatprep.subr.mxu0 0.0
    %1302 = vmatpush2.msra.mxu0 0.0
    %1303 = vmatprep.subr.mxu0 0.0
    %1304 = vmatpush2.msra.mxu0 0.0
    %1305 = vmatprep.subr.mxu0 0.0
    %1306 = vmatpush2.msra.mxu0 0.0
    %1307 = vmatprep.subr.mxu0 0.0
    %1308 = vmatpush2.msra.mxu0 0.0
    %1309 = vmatprep.subr.mxu0 0.0
    %1310 = vmatpush2.msra.mxu0 0.0
    %1311 = vmatprep.subr.mxu0 0.0
    %1312 = vmatpush2.msra.mxu0 0.0
    %1313 = vmatprep.subr.mxu0 0.0
    %1314 = vmatpush2.msra.mxu0 0.0
    %1315 = vmatprep.subr.mxu0 0.0
    %1316 = vmatpush2.msra.mxu0 0.0
    %1317 = vmatprep.mubr.f32.mxu0 0.0
    %1318 = vmatmul.mubr.f32.gmra.mxu0 %v1251
    %v1319 = vpop.f32.mrf.mxu0
    %v1320 = vadd.f32 0.0, %v1319
    %v1321 = vpop.f32.mrf.mxu0
    %1322 = vdwg.mxu0
    %v1323 = vadd.f32 %v538, %v1320
    %v1324 = vxor.u32 %v1250, 2147483648
    %v1325 = vmul.f32 %v1324, 1.442695
    %v1326 = vpow.pop %v1325
    %v1327 = vadd.f32 %v1326, 1.0
    %v1328 = vrcp.pop %v1327
    %v1329 = vmul.f32 1.0, %v1328
    %v1330 = vtanh.pop %v1250
    %v1331 = vmul.f32 %v1329, %v1137
    %1333 = vrot.lane.b32.xlu0 %v1330, 64
    %v1334 = vpop.permute.xlu0 %1333
    %v1336 = vmul.f32 %v1329, %v1334
    %1338 = vrot.lane.b32.xlu0 %v1336, 32
    %v1339 = vpop.permute.xlu0 %1338
    %v1341 = vadd.f32 %v1331, %v1339
    %v1342 = vtanh.pop %v1341
    %1344 = vrot.lane.b32.xlu0 %v1342, 64
    %v1345 = vpop.permute.xlu0 %1344
    %v1347 = vmul.f32 %v1329, %v1345
    %v1348 = vxor.u32 %v1323, 2147483648
    %v1349 = vmul.f32 %v1348, 1.442695
    %v1350 = vpow.pop %v1349
    %v1351 = vadd.f32 %v1350, 1.0
    %v1352 = vrcp.pop %v1351
    %v1353 = vmul.f32 1.0, %v1352
    %v1354 = vtanh.pop %v1323
    %v1355 = vmul.f32 %v1353, %v1161
    %1357 = vrot.lane.b32.xlu0 %v1354, 64
    %v1358 = vpop.permute.xlu0 %1357
    %v1360 = vmul.f32 %v1353, %v1358
    %1362 = vrot.lane.b32.xlu0 %v1360, 32
    %v1363 = vpop.permute.xlu0 %1362
    %v1365 = vadd.f32 %v1355, %v1363
    %v1366 = vtanh.pop %v1365
    %1368 = vrot.lane.b32.xlu0 %v1366, 64
    %v1369 = vpop.permute.xlu0 %1368
    %v1371 = vmul.f32 %v1353, %v1369
    %1373 = vrot.lane.b32.xlu0 %v1347, 32
    %v1374 = vpop.permute.xlu0 %1373
    %1376 = vst.msk [vmem:[#allocation2 + $0x18] sm:$0xff] %vm566, %v1374
    %1378 = vrot.lane.b32.xlu0 %v1371, 32
    %v1379 = vpop.permute.xlu0 %1378
    %1381 = vst.msk [vmem:[#allocation3 + $0x20] sm:$0xff] %vm566, %v1379
    %v1382 = vsel %vm566, %v1374, 0
    %1384 = vmatprep.subr.mxu0 0.0
    %1385 = vmatpush1.msra.mxu0 0.0
    %1386 = vmatprep.subr.mxu0 0.0
    %1387 = vmatpush1.msra.mxu0 0.0
    %1388 = vmatprep.subr.mxu0 0.0
    %1389 = vmatpush1.msra.mxu0 0.0
    %1390 = vmatprep.subr.mxu0 0.0
    %1391 = vmatpush1.msra.mxu0 0.0
    %1392 = vmatprep.subr.mxu0 0.0
    %1393 = vmatpush1.msra.mxu0 0.0
    %1394 = vmatprep.subr.mxu0 0.0
    %1395 = vmatpush1.msra.mxu0 0.0
    %1396 = vmatprep.subr.mxu0 0.0
    %1397 = vmatpush1.msra.mxu0 0.0
    %1398 = vmatprep.subr.mxu0 0.0
    %1399 = vmatpush1.msra.mxu0 0.0
    %1400 = vmatprep.subr.mxu0 0.0
    %1401 = vmatpush1.msra.mxu0 0.0
    %1402 = vmatprep.subr.mxu0 0.0
    %1403 = vmatpush1.msra.mxu0 0.0
    %1404 = vmatprep.subr.mxu0 0.0
    %1405 = vmatpush1.msra.mxu0 0.0
    %1406 = vmatprep.subr.mxu0 0.0
    %1407 = vmatpush1.msra.mxu0 0.0
    %1408 = vmatprep.subr.mxu0 0.0
    %1409 = vmatpush1.msra.mxu0 %v561
    %1410 = vmatprep.subr.mxu0 0.0
    %1411 = vmatpush1.msra.mxu0 %v560
    %1412 = vmatprep.subr.mxu0 0.0
    %1413 = vmatpush1.msra.mxu0 %v559
    %1414 = vmatprep.subr.mxu0 0.0
    %1415 = vmatpush1.msra.mxu0 %v558
    %1416 = vmatprep.subr.mxu0 0.0
    %1417 = vmatpush2.msra.mxu0 0.0
    %1418 = vmatprep.subr.mxu0 0.0
    %1419 = vmatpush2.msra.mxu0 0.0
    %1420 = vmatprep.subr.mxu0 0.0
    %1421 = vmatpush2.msra.mxu0 0.0
    %1422 = vmatprep.subr.mxu0 0.0
    %1423 = vmatpush2.msra.mxu0 0.0
    %1424 = vmatprep.subr.mxu0 0.0
    %1425 = vmatpush2.msra.mxu0 0.0
    %1426 = vmatprep.subr.mxu0 0.0
    %1427 = vmatpush2.msra.mxu0 0.0
    %1428 = vmatprep.subr.mxu0 0.0
    %1429 = vmatpush2.msra.mxu0 0.0
    %1430 = vmatprep.subr.mxu0 0.0
    %1431 = vmatpush2.msra.mxu0 0.0
    %1432 = vmatprep.subr.mxu0 0.0
    %1433 = vmatpush2.msra.mxu0 0.0
    %1434 = vmatprep.subr.mxu0 0.0
    %1435 = vmatpush2.msra.mxu0 0.0
    %1436 = vmatprep.subr.mxu0 0.0
    %1437 = vmatpush2.msra.mxu0 0.0
    %1438 = vmatprep.subr.mxu0 0.0
    %1439 = vmatpush2.msra.mxu0 0.0
    %1440 = vmatprep.subr.mxu0 0.0
    %1441 = vmatpush2.msra.mxu0 0.0
    %1442 = vmatprep.subr.mxu0 0.0
    %1443 = vmatpush2.msra.mxu0 0.0
    %1444 = vmatprep.subr.mxu0 0.0
    %1445 = vmatpush2.msra.mxu0 0.0
    %1446 = vmatprep.subr.mxu0 0.0
    %1447 = vmatpush2.msra.mxu0 0.0
    %1448 = vmatprep.mubr.f32.mxu0 0.0
    %1449 = vmatmul.mubr.f32.gmra.mxu0 %v1382
    %v1450 = vpop.f32.mrf.mxu0
    %v1451 = vadd.f32 0.0, %v1450
    %v1452 = vpop.f32.mrf.mxu0
    %1453 = vdwg.mxu0
    %v1454 = vadd.f32 %v536, %v1451
    %v1455 = vsel %vm566, %v1379, 0
    %1457 = vmatprep.subr.mxu0 0.0
    %1458 = vmatpush1.msra.mxu0 0.0
    %1459 = vmatprep.subr.mxu0 0.0
    %1460 = vmatpush1.msra.mxu0 0.0
    %1461 = vmatprep.subr.mxu0 0.0
    %1462 = vmatpush1.msra.mxu0 0.0
    %1463 = vmatprep.subr.mxu0 0.0
    %1464 = vmatpush1.msra.mxu0 0.0
    %1465 = vmatprep.subr.mxu0 0.0
    %1466 = vmatpush1.msra.mxu0 0.0
    %1467 = vmatprep.subr.mxu0 0.0
    %1468 = vmatpush1.msra.mxu0 0.0
    %1469 = vmatprep.subr.mxu0 0.0
    %1470 = vmatpush1.msra.mxu0 0.0
    %1471 = vmatprep.subr.mxu0 0.0
    %1472 = vmatpush1.msra.mxu0 0.0
    %1473 = vmatprep.subr.mxu0 0.0
    %1474 = vmatpush1.msra.mxu0 0.0
    %1475 = vmatprep.subr.mxu0 0.0
    %1476 = vmatpush1.msra.mxu0 0.0
    %1477 = vmatprep.subr.mxu0 0.0
    %1478 = vmatpush1.msra.mxu0 0.0
    %1479 = vmatprep.subr.mxu0 0.0
    %1480 = vmatpush1.msra.mxu0 0.0
    %1481 = vmatprep.subr.mxu0 0.0
    %1482 = vmatpush1.msra.mxu0 %v565
    %1483 = vmatprep.subr.mxu0 0.0
    %1484 = vmatpush1.msra.mxu0 %v564
    %1485 = vmatprep.subr.mxu0 0.0
    %1486 = vmatpush1.msra.mxu0 %v563
    %1487 = vmatprep.subr.mxu0 0.0
    %1488 = vmatpush1.msra.mxu0 %v562
    %1489 = vmatprep.subr.mxu0 0.0
    %1490 = vmatpush2.msra.mxu0 0.0
    %1491 = vmatprep.subr.mxu0 0.0
    %1492 = vmatpush2.msra.mxu0 0.0
    %1493 = vmatprep.subr.mxu0 0.0
    %1494 = vmatpush2.msra.mxu0 0.0
    %1495 = vmatprep.subr.mxu0 0.0
    %1496 = vmatpush2.msra.mxu0 0.0
    %1497 = vmatprep.subr.mxu0 0.0
    %1498 = vmatpush2.msra.mxu0 0.0
    %1499 = vmatprep.subr.mxu0 0.0
    %1500 = vmatpush2.msra.mxu0 0.0
    %1501 = vmatprep.subr.mxu0 0.0
    %1502 = vmatpush2.msra.mxu0 0.0
    %1503 = vmatprep.subr.mxu0 0.0
    %1504 = vmatpush2.msra.mxu0 0.0
    %1505 = vmatprep.subr.mxu0 0.0
    %1506 = vmatpush2.msra.mxu0 0.0
    %1507 = vmatprep.subr.mxu0 0.0
    %1508 = vmatpush2.msra.mxu0 0.0
    %1509 = vmatprep.subr.mxu0 0.0
    %1510 = vmatpush2.msra.mxu0 0.0
    %1511 = vmatprep.subr.mxu0 0.0
    %1512 = vmatpush2.msra.mxu0 0.0
    %1513 = vmatprep.subr.mxu0 0.0
    %1514 = vmatpush2.msra.mxu0 0.0
    %1515 = vmatprep.subr.mxu0 0.0
    %1516 = vmatpush2.msra.mxu0 0.0
    %1517 = vmatprep.subr.mxu0 0.0
    %1518 = vmatpush2.msra.mxu0 0.0
    %1519 = vmatprep.subr.mxu0 0.0
    %1520 = vmatpush2.msra.mxu0 0.0
    %1521 = vmatprep.mubr.f32.mxu0 0.0
    %1522 = vmatmul.mubr.f32.gmra.mxu0 %v1455
    %v1523 = vpop.f32.mrf.mxu0
    %v1524 = vadd.f32 0.0, %v1523
    %v1525 = vpop.f32.mrf.mxu0
    %1526 = vdwg.mxu0
    %v1527 = vadd.f32 %v532, %v1524
    %v1528 = vxor.u32 %v1454, 2147483648
    %v1529 = vmul.f32 %v1528, 1.442695
    %v1530 = vpow.pop %v1529
    %v1531 = vadd.f32 %v1530, 1.0
    %v1532 = vrcp.pop %v1531
    %v1533 = vmul.f32 1.0, %v1532
    %v1534 = vtanh.pop %v1454
    %v1535 = vmul.f32 %v1533, %v1341
    %1537 = vrot.lane.b32.xlu0 %v1534, 64
    %v1538 = vpop.permute.xlu0 %1537
    %v1540 = vmul.f32 %v1533, %v1538
    %1542 = vrot.lane.b32.xlu0 %v1540, 32
    %v1543 = vpop.permute.xlu0 %1542
    %v1545 = vadd.f32 %v1535, %v1543
    %v1546 = vtanh.pop %v1545
    %1548 = vrot.lane.b32.xlu0 %v1546, 64
    %v1549 = vpop.permute.xlu0 %1548
    %v1551 = vmul.f32 %v1533, %v1549
    %v1552 = vxor.u32 %v1527, 2147483648
    %v1553 = vmul.f32 %v1552, 1.442695
    %v1554 = vpow.pop %v1553
    %v1555 = vadd.f32 %v1554, 1.0
    %v1556 = vrcp.pop %v1555
    %v1557 = vmul.f32 1.0, %v1556
    %v1558 = vtanh.pop %v1527
    %v1559 = vmul.f32 %v1557, %v1365
    %1561 = vrot.lane.b32.xlu0 %v1558, 64
    %v1562 = vpop.permute.xlu0 %1561
    %v1564 = vmul.f32 %v1557, %v1562
    %1566 = vrot.lane.b32.xlu0 %v1564, 32
    %v1567 = vpop.permute.xlu0 %1566
    %v1569 = vadd.f32 %v1559, %v1567
    %v1570 = vtanh.pop %v1569
    %1572 = vrot.lane.b32.xlu0 %v1570, 64
    %v1573 = vpop.permute.xlu0 %1572
    %v1575 = vmul.f32 %v1557, %v1573
    %1577 = vrot.lane.b32.xlu0 %v1551, 32
    %v1578 = vpop.permute.xlu0 %1577
    %1580 = vst.msk [vmem:[#allocation2 + $0x20] sm:$0xff] %vm566, %v1578
    %1582 = vrot.lane.b32.xlu0 %v1575, 32
    %v1583 = vpop.permute.xlu0 %1582
    %1585 = vst.msk [vmem:[#allocation3 + $0x18] sm:$0xff] %vm566, %v1583
    %v1586 = vsel %vm566, %v1578, 0
    %1588 = vmatprep.subr.mxu0 0.0
    %1589 = vmatpush1.msra.mxu0 0.0
    %1590 = vmatprep.subr.mxu0 0.0
    %1591 = vmatpush1.msra.mxu0 0.0
    %1592 = vmatprep.subr.mxu0 0.0
    %1593 = vmatpush1.msra.mxu0 0.0
    %1594 = vmatprep.subr.mxu0 0.0
    %1595 = vmatpush1.msra.mxu0 0.0
    %1596 = vmatprep.subr.mxu0 0.0
    %1597 = vmatpush1.msra.mxu0 0.0
    %1598 = vmatprep.subr.mxu0 0.0
    %1599 = vmatpush1.msra.mxu0 0.0
    %1600 = vmatprep.subr.mxu0 0.0
    %1601 = vmatpush1.msra.mxu0 0.0
    %1602 = vmatprep.subr.mxu0 0.0
    %1603 = vmatpush1.msra.mxu0 0.0
    %1604 = vmatprep.subr.mxu0 0.0
    %1605 = vmatpush1.msra.mxu0 0.0
    %1606 = vmatprep.subr.mxu0 0.0
    %1607 = vmatpush1.msra.mxu0 0.0
    %1608 = vmatprep.subr.mxu0 0.0
    %1609 = vmatpush1.msra.mxu0 0.0
    %1610 = vmatprep.subr.mxu0 0.0
    %1611 = vmatpush1.msra.mxu0 0.0
    %1612 = vmatprep.subr.mxu0 0.0
    %1613 = vmatpush1.msra.mxu0 %v561
    %1614 = vmatprep.subr.mxu0 0.0
    %1615 = vmatpush1.msra.mxu0 %v560
    %1616 = vmatprep.subr.mxu0 0.0
    %1617 = vmatpush1.msra.mxu0 %v559
    %1618 = vmatprep.subr.mxu0 0.0
    %1619 = vmatpush1.msra.mxu0 %v558
    %1620 = vmatprep.subr.mxu0 0.0
    %1621 = vmatpush2.msra.mxu0 0.0
    %1622 = vmatprep.subr.mxu0 0.0
    %1623 = vmatpush2.msra.mxu0 0.0
    %1624 = vmatprep.subr.mxu0 0.0
    %1625 = vmatpush2.msra.mxu0 0.0
    %1626 = vmatprep.subr.mxu0 0.0
    %1627 = vmatpush2.msra.mxu0 0.0
    %1628 = vmatprep.subr.mxu0 0.0
    %1629 = vmatpush2.msra.mxu0 0.0
    %1630 = vmatprep.subr.mxu0 0.0
    %1631 = vmatpush2.msra.mxu0 0.0
    %1632 = vmatprep.subr.mxu0 0.0
    %1633 = vmatpush2.msra.mxu0 0.0
    %1634 = vmatprep.subr.mxu0 0.0
    %1635 = vmatpush2.msra.mxu0 0.0
    %1636 = vmatprep.subr.mxu0 0.0
    %1637 = vmatpush2.msra.mxu0 0.0
    %1638 = vmatprep.subr.mxu0 0.0
    %1639 = vmatpush2.msra.mxu0 0.0
    %1640 = vmatprep.subr.mxu0 0.0
    %1641 = vmatpush2.msra.mxu0 0.0
    %1642 = vmatprep.subr.mxu0 0.0
    %1643 = vmatpush2.msra.mxu0 0.0
    %1644 = vmatprep.subr.mxu0 0.0
    %1645 = vmatpush2.msra.mxu0 0.0
    %1646 = vmatprep.subr.mxu0 0.0
    %1647 = vmatpush2.msra.mxu0 0.0
    %1648 = vmatprep.subr.mxu0 0.0
    %1649 = vmatpush2.msra.mxu0 0.0
    %1650 = vmatprep.subr.mxu0 0.0
    %1651 = vmatpush2.msra.mxu0 0.0
    %1652 = vmatprep.mubr.f32.mxu0 0.0
    %1653 = vmatmul.mubr.f32.gmra.mxu0 %v1586
    %v1654 = vpop.f32.mrf.mxu0
    %v1655 = vadd.f32 0.0, %v1654
    %v1656 = vpop.f32.mrf.mxu0
    %1657 = vdwg.mxu0
    %v1658 = vadd.f32 %v542, %v1655
    %v1659 = vsel %vm566, %v1583, 0
    %1661 = vmatprep.subr.mxu0 0.0
    %1662 = vmatpush1.msra.mxu0 0.0
    %1663 = vmatprep.subr.mxu0 0.0
    %1664 = vmatpush1.msra.mxu0 0.0
    %1665 = vmatprep.subr.mxu0 0.0
    %1666 = vmatpush1.msra.mxu0 0.0
    %1667 = vmatprep.subr.mxu0 0.0
    %1668 = vmatpush1.msra.mxu0 0.0
    %1669 = vmatprep.subr.mxu0 0.0
    %1670 = vmatpush1.msra.mxu0 0.0
    %1671 = vmatprep.subr.mxu0 0.0
    %1672 = vmatpush1.msra.mxu0 0.0
    %1673 = vmatprep.subr.mxu0 0.0
    %1674 = vmatpush1.msra.mxu0 0.0
    %1675 = vmatprep.subr.mxu0 0.0
    %1676 = vmatpush1.msra.mxu0 0.0
    %1677 = vmatprep.subr.mxu0 0.0
    %1678 = vmatpush1.msra.mxu0 0.0
    %1679 = vmatprep.subr.mxu0 0.0
    %1680 = vmatpush1.msra.mxu0 0.0
    %1681 = vmatprep.subr.mxu0 0.0
    %1682 = vmatpush1.msra.mxu0 0.0
    %1683 = vmatprep.subr.mxu0 0.0
    %1684 = vmatpush1.msra.mxu0 0.0
    %1685 = vmatprep.subr.mxu0 0.0
    %1686 = vmatpush1.msra.mxu0 %v565
    %1687 = vmatprep.subr.mxu0 0.0
    %1688 = vmatpush1.msra.mxu0 %v564
    %1689 = vmatprep.subr.mxu0 0.0
    %1690 = vmatpush1.msra.mxu0 %v563
    %1691 = vmatprep.subr.mxu0 0.0
    %1692 = vmatpush1.msra.mxu0 %v562
    %1693 = vmatprep.subr.mxu0 0.0
    %1694 = vmatpush2.msra.mxu0 0.0
    %1695 = vmatprep.subr.mxu0 0.0
    %1696 = vmatpush2.msra.mxu0 0.0
    %1697 = vmatprep.subr.mxu0 0.0
    %1698 = vmatpush2.msra.mxu0 0.0
    %1699 = vmatprep.subr.mxu0 0.0
    %1700 = vmatpush2.msra.mxu0 0.0
    %1701 = vmatprep.subr.mxu0 0.0
    %1702 = vmatpush2.msra.mxu0 0.0
    %1703 = vmatprep.subr.mxu0 0.0
    %1704 = vmatpush2.msra.mxu0 0.0
    %1705 = vmatprep.subr.mxu0 0.0
    %1706 = vmatpush2.msra.mxu0 0.0
    %1707 = vmatprep.subr.mxu0 0.0
    %1708 = vmatpush2.msra.mxu0 0.0
    %1709 = vmatprep.subr.mxu0 0.0
    %1710 = vmatpush2.msra.mxu0 0.0
    %1711 = vmatprep.subr.mxu0 0.0
    %1712 = vmatpush2.msra.mxu0 0.0
    %1713 = vmatprep.subr.mxu0 0.0
    %1714 = vmatpush2.msra.mxu0 0.0
    %1715 = vmatprep.subr.mxu0 0.0
    %1716 = vmatpush2.msra.mxu0 0.0
    %1717 = vmatprep.subr.mxu0 0.0
    %1718 = vmatpush2.msra.mxu0 0.0
    %1719 = vmatprep.subr.mxu0 0.0
    %1720 = vmatpush2.msra.mxu0 0.0
    %1721 = vmatprep.subr.mxu0 0.0
    %1722 = vmatpush2.msra.mxu0 0.0
    %1723 = vmatprep.subr.mxu0 0.0
    %1724 = vmatpush2.msra.mxu0 0.0
    %1725 = vmatprep.mubr.f32.mxu0 0.0
    %1726 = vmatmul.mubr.f32.gmra.mxu0 %v1659
    %v1727 = vpop.f32.mrf.mxu0
    %v1728 = vadd.f32 0.0, %v1727
    %v1729 = vpop.f32.mrf.mxu0
    %1730 = vdwg.mxu0
    %v1731 = vadd.f32 %v526, %v1728
    %v1732 = vxor.u32 %v1658, 2147483648
    %v1733 = vmul.f32 %v1732, 1.442695
    %v1734 = vpow.pop %v1733
    %v1735 = vadd.f32 %v1734, 1.0
    %v1736 = vrcp.pop %v1735
    %v1737 = vmul.f32 1.0, %v1736
    %v1738 = vtanh.pop %v1658
    %v1739 = vmul.f32 %v1737, %v1545
    %1741 = vrot.lane.b32.xlu0 %v1738, 64
    %v1742 = vpop.permute.xlu0 %1741
    %v1744 = vmul.f32 %v1737, %v1742
    %1746 = vrot.lane.b32.xlu0 %v1744, 32
    %v1747 = vpop.permute.xlu0 %1746
    %v1749 = vadd.f32 %v1739, %v1747
    %v1750 = vtanh.pop %v1749
    %1752 = vrot.lane.b32.xlu0 %v1750, 64
    %v1753 = vpop.permute.xlu0 %1752
    %v1755 = vmul.f32 %v1737, %v1753
    %v1756 = vxor.u32 %v1731, 2147483648
    %v1757 = vmul.f32 %v1756, 1.442695
    %v1758 = vpow.pop %v1757
    %v1759 = vadd.f32 %v1758, 1.0
    %v1760 = vrcp.pop %v1759
    %v1761 = vmul.f32 1.0, %v1760
    %v1762 = vtanh.pop %v1731
    %v1763 = vmul.f32 %v1761, %v1569
    %1765 = vrot.lane.b32.xlu0 %v1762, 64
    %v1766 = vpop.permute.xlu0 %1765
    %v1768 = vmul.f32 %v1761, %v1766
    %1770 = vrot.lane.b32.xlu0 %v1768, 32
    %v1771 = vpop.permute.xlu0 %1770
    %v1773 = vadd.f32 %v1763, %v1771
    %v1774 = vtanh.pop %v1773
    %1776 = vrot.lane.b32.xlu0 %v1774, 64
    %v1777 = vpop.permute.xlu0 %1776
    %v1779 = vmul.f32 %v1761, %v1777
    %1781 = vrot.lane.b32.xlu0 %v1755, 32
    %v1782 = vpop.permute.xlu0 %1781
    %1784 = vst.msk [vmem:[#allocation2 + $0x28] sm:$0xff] %vm566, %v1782
    %1786 = vrot.lane.b32.xlu0 %v1779, 32
    %v1787 = vpop.permute.xlu0 %1786
    %1789 = vst.msk [vmem:[#allocation3 + $0x10] sm:$0xff] %vm566, %v1787
    %v1790 = vsel %vm566, %v1782, 0
    %1792 = vmatprep.subr.mxu0 0.0
    %1793 = vmatpush1.msra.mxu0 0.0
    %1794 = vmatprep.subr.mxu0 0.0
    %1795 = vmatpush1.msra.mxu0 0.0
    %1796 = vmatprep.subr.mxu0 0.0
    %1797 = vmatpush1.msra.mxu0 0.0
    %1798 = vmatprep.subr.mxu0 0.0
    %1799 = vmatpush1.msra.mxu0 0.0
    %1800 = vmatprep.subr.mxu0 0.0
    %1801 = vmatpush1.msra.mxu0 0.0
    %1802 = vmatprep.subr.mxu0 0.0
    %1803 = vmatpush1.msra.mxu0 0.0
    %1804 = vmatprep.subr.mxu0 0.0
    %1805 = vmatpush1.msra.mxu0 0.0
    %1806 = vmatprep.subr.mxu0 0.0
    %1807 = vmatpush1.msra.mxu0 0.0
    %1808 = vmatprep.subr.mxu0 0.0
    %1809 = vmatpush1.msra.mxu0 0.0
    %1810 = vmatprep.subr.mxu0 0.0
    %1811 = vmatpush1.msra.mxu0 0.0
    %1812 = vmatprep.subr.mxu0 0.0
    %1813 = vmatpush1.msra.mxu0 0.0
    %1814 = vmatprep.subr.mxu0 0.0
    %1815 = vmatpush1.msra.mxu0 0.0
    %1816 = vmatprep.subr.mxu0 0.0
    %1817 = vmatpush1.msra.mxu0 %v561
    %1818 = vmatprep.subr.mxu0 0.0
    %1819 = vmatpush1.msra.mxu0 %v560
    %1820 = vmatprep.subr.mxu0 0.0
    %1821 = vmatpush1.msra.mxu0 %v559
    %1822 = vmatprep.subr.mxu0 0.0
    %1823 = vmatpush1.msra.mxu0 %v558
    %1824 = vmatprep.subr.mxu0 0.0
    %1825 = vmatpush2.msra.mxu0 0.0
    %1826 = vmatprep.subr.mxu0 0.0
    %1827 = vmatpush2.msra.mxu0 0.0
    %1828 = vmatprep.subr.mxu0 0.0
    %1829 = vmatpush2.msra.mxu0 0.0
    %1830 = vmatprep.subr.mxu0 0.0
    %1831 = vmatpush2.msra.mxu0 0.0
    %1832 = vmatprep.subr.mxu0 0.0
    %1833 = vmatpush2.msra.mxu0 0.0
    %1834 = vmatprep.subr.mxu0 0.0
    %1835 = vmatpush2.msra.mxu0 0.0
    %1836 = vmatprep.subr.mxu0 0.0
    %1837 = vmatpush2.msra.mxu0 0.0
    %1838 = vmatprep.subr.mxu0 0.0
    %1839 = vmatpush2.msra.mxu0 0.0
    %1840 = vmatprep.subr.mxu0 0.0
    %1841 = vmatpush2.msra.mxu0 0.0
    %1842 = vmatprep.subr.mxu0 0.0
    %1843 = vmatpush2.msra.mxu0 0.0
    %1844 = vmatprep.subr.mxu0 0.0
    %1845 = vmatpush2.msra.mxu0 0.0
    %1846 = vmatprep.subr.mxu0 0.0
    %1847 = vmatpush2.msra.mxu0 0.0
    %1848 = vmatprep.subr.mxu0 0.0
    %1849 = vmatpush2.msra.mxu0 0.0
    %1850 = vmatprep.subr.mxu0 0.0
    %1851 = vmatpush2.msra.mxu0 0.0
    %1852 = vmatprep.subr.mxu0 0.0
    %1853 = vmatpush2.msra.mxu0 0.0
    %1854 = vmatprep.subr.mxu0 0.0
    %1855 = vmatpush2.msra.mxu0 0.0
    %1856 = vmatprep.mubr.f32.mxu0 0.0
    %1857 = vmatmul.mubr.f32.gmra.mxu0 %v1790
    %v1858 = vpop.f32.mrf.mxu0
    %v1859 = vadd.f32 0.0, %v1858
    %v1860 = vpop.f32.mrf.mxu0
    %1861 = vdwg.mxu0
    %v1862 = vadd.f32 %v548, %v1859
    %v1863 = vsel %vm566, %v1787, 0
    %1865 = vmatprep.subr.mxu0 0.0
    %1866 = vmatpush1.msra.mxu0 0.0
    %1867 = vmatprep.subr.mxu0 0.0
    %1868 = vmatpush1.msra.mxu0 0.0
    %1869 = vmatprep.subr.mxu0 0.0
    %1870 = vmatpush1.msra.mxu0 0.0
    %1871 = vmatprep.subr.mxu0 0.0
    %1872 = vmatpush1.msra.mxu0 0.0
    %1873 = vmatprep.subr.mxu0 0.0
    %1874 = vmatpush1.msra.mxu0 0.0
    %1875 = vmatprep.subr.mxu0 0.0
    %1876 = vmatpush1.msra.mxu0 0.0
    %1877 = vmatprep.subr.mxu0 0.0
    %1878 = vmatpush1.msra.mxu0 0.0
    %1879 = vmatprep.subr.mxu0 0.0
    %1880 = vmatpush1.msra.mxu0 0.0
    %1881 = vmatprep.subr.mxu0 0.0
    %1882 = vmatpush1.msra.mxu0 0.0
    %1883 = vmatprep.subr.mxu0 0.0
    %1884 = vmatpush1.msra.mxu0 0.0
    %1885 = vmatprep.subr.mxu0 0.0
    %1886 = vmatpush1.msra.mxu0 0.0
    %1887 = vmatprep.subr.mxu0 0.0
    %1888 = vmatpush1.msra.mxu0 0.0
    %1889 = vmatprep.subr.mxu0 0.0
    %1890 = vmatpush1.msra.mxu0 %v565
    %1891 = vmatprep.subr.mxu0 0.0
    %1892 = vmatpush1.msra.mxu0 %v564
    %1893 = vmatprep.subr.mxu0 0.0
    %1894 = vmatpush1.msra.mxu0 %v563
    %1895 = vmatprep.subr.mxu0 0.0
    %1896 = vmatpush1.msra.mxu0 %v562
    %1897 = vmatprep.subr.mxu0 0.0
    %1898 = vmatpush2.msra.mxu0 0.0
    %1899 = vmatprep.subr.mxu0 0.0
    %1900 = vmatpush2.msra.mxu0 0.0
    %1901 = vmatprep.subr.mxu0 0.0
    %1902 = vmatpush2.msra.mxu0 0.0
    %1903 = vmatprep.subr.mxu0 0.0
    %1904 = vmatpush2.msra.mxu0 0.0
    %1905 = vmatprep.subr.mxu0 0.0
    %1906 = vmatpush2.msra.mxu0 0.0
    %1907 = vmatprep.subr.mxu0 0.0
    %1908 = vmatpush2.msra.mxu0 0.0
    %1909 = vmatprep.subr.mxu0 0.0
    %1910 = vmatpush2.msra.mxu0 0.0
    %1911 = vmatprep.subr.mxu0 0.0
    %1912 = vmatpush2.msra.mxu0 0.0
    %1913 = vmatprep.subr.mxu0 0.0
    %1914 = vmatpush2.msra.mxu0 0.0
    %1915 = vmatprep.subr.mxu0 0.0
    %1916 = vmatpush2.msra.mxu0 0.0
    %1917 = vmatprep.subr.mxu0 0.0
    %1918 = vmatpush2.msra.mxu0 0.0
    %1919 = vmatprep.subr.mxu0 0.0
    %1920 = vmatpush2.msra.mxu0 0.0
    %1921 = vmatprep.subr.mxu0 0.0
    %1922 = vmatpush2.msra.mxu0 0.0
    %1923 = vmatprep.subr.mxu0 0.0
    %1924 = vmatpush2.msra.mxu0 0.0
    %1925 = vmatprep.subr.mxu0 0.0
    %1926 = vmatpush2.msra.mxu0 0.0
    %1927 = vmatprep.subr.mxu0 0.0
    %1928 = vmatpush2.msra.mxu0 0.0
    %1929 = vmatprep.mubr.f32.mxu0 0.0
    %1930 = vmatmul.mubr.f32.gmra.mxu0 %v1863
    %v1931 = vpop.f32.mrf.mxu0
    %v1932 = vadd.f32 0.0, %v1931
    %v1933 = vpop.f32.mrf.mxu0
    %1934 = vdwg.mxu0
    %v1935 = vadd.f32 %v520, %v1932
    %v1936 = vxor.u32 %v1862, 2147483648
    %v1937 = vmul.f32 %v1936, 1.442695
    %v1938 = vpow.pop %v1937
    %v1939 = vadd.f32 %v1938, 1.0
    %v1940 = vrcp.pop %v1939
    %v1941 = vmul.f32 1.0, %v1940
    %v1942 = vtanh.pop %v1862
    %v1943 = vmul.f32 %v1941, %v1749
    %1945 = vrot.lane.b32.xlu0 %v1942, 64
    %v1946 = vpop.permute.xlu0 %1945
    %v1948 = vmul.f32 %v1941, %v1946
    %1950 = vrot.lane.b32.xlu0 %v1948, 32
    %v1951 = vpop.permute.xlu0 %1950
    %v1953 = vadd.f32 %v1943, %v1951
    %v1954 = vtanh.pop %v1953
    %1956 = vrot.lane.b32.xlu0 %v1954, 64
    %v1957 = vpop.permute.xlu0 %1956
    %v1959 = vmul.f32 %v1941, %v1957
    %v1960 = vxor.u32 %v1935, 2147483648
    %v1961 = vmul.f32 %v1960, 1.442695
    %v1962 = vpow.pop %v1961
    %v1963 = vadd.f32 %v1962, 1.0
    %v1964 = vrcp.pop %v1963
    %v1965 = vmul.f32 1.0, %v1964
    %v1966 = vtanh.pop %v1935
    %v1967 = vmul.f32 %v1965, %v1773
    %1969 = vrot.lane.b32.xlu0 %v1966, 64
    %v1970 = vpop.permute.xlu0 %1969
    %v1972 = vmul.f32 %v1965, %v1970
    %1974 = vrot.lane.b32.xlu0 %v1972, 32
    %v1975 = vpop.permute.xlu0 %1974
    %v1977 = vadd.f32 %v1967, %v1975
    %v1978 = vtanh.pop %v1977
    %1980 = vrot.lane.b32.xlu0 %v1978, 64
    %v1981 = vpop.permute.xlu0 %1980
    %v1983 = vmul.f32 %v1965, %v1981
    %1985 = vrot.lane.b32.xlu0 %v1959, 32
    %v1986 = vpop.permute.xlu0 %1985
    %1988 = vst.msk [vmem:[#allocation2 + $0x30] sm:$0xff] %vm566, %v1986
    %1990 = vrot.lane.b32.xlu0 %v1983, 32
    %v1991 = vpop.permute.xlu0 %1990
    %1993 = vst.msk [vmem:[#allocation3 + $0x8] sm:$0xff] %vm566, %v1991
    %v1994 = vsel %vm566, %v1986, 0
    %1996 = vmatprep.subr.mxu0 0.0
    %1997 = vmatpush1.msra.mxu0 0.0
    %1998 = vmatprep.subr.mxu0 0.0
    %1999 = vmatpush1.msra.mxu0 0.0
    %2000 = vmatprep.subr.mxu0 0.0
    %2001 = vmatpush1.msra.mxu0 0.0
    %2002 = vmatprep.subr.mxu0 0.0
    %2003 = vmatpush1.msra.mxu0 0.0
    %2004 = vmatprep.subr.mxu0 0.0
    %2005 = vmatpush1.msra.mxu0 0.0
    %2006 = vmatprep.subr.mxu0 0.0
    %2007 = vmatpush1.msra.mxu0 0.0
    %2008 = vmatprep.subr.mxu0 0.0
    %2009 = vmatpush1.msra.mxu0 0.0
    %2010 = vmatprep.subr.mxu0 0.0
    %2011 = vmatpush1.msra.mxu0 0.0
    %2012 = vmatprep.subr.mxu0 0.0
    %2013 = vmatpush1.msra.mxu0 0.0
    %2014 = vmatprep.subr.mxu0 0.0
    %2015 = vmatpush1.msra.mxu0 0.0
    %2016 = vmatprep.subr.mxu0 0.0
    %2017 = vmatpush1.msra.mxu0 0.0
    %2018 = vmatprep.subr.mxu0 0.0
    %2019 = vmatpush1.msra.mxu0 0.0
    %2020 = vmatprep.subr.mxu0 0.0
    %2021 = vmatpush1.msra.mxu0 %v561
    %2022 = vmatprep.subr.mxu0 0.0
    %2023 = vmatpush1.msra.mxu0 %v560
    %2024 = vmatprep.subr.mxu0 0.0
    %2025 = vmatpush1.msra.mxu0 %v559
    %2026 = vmatprep.subr.mxu0 0.0
    %2027 = vmatpush1.msra.mxu0 %v558
    %2028 = vmatprep.subr.mxu0 0.0
    %2029 = vmatpush2.msra.mxu0 0.0
    %2030 = vmatprep.subr.mxu0 0.0
    %2031 = vmatpush2.msra.mxu0 0.0
    %2032 = vmatprep.subr.mxu0 0.0
    %2033 = vmatpush2.msra.mxu0 0.0
    %2034 = vmatprep.subr.mxu0 0.0
    %2035 = vmatpush2.msra.mxu0 0.0
    %2036 = vmatprep.subr.mxu0 0.0
    %2037 = vmatpush2.msra.mxu0 0.0
    %2038 = vmatprep.subr.mxu0 0.0
    %2039 = vmatpush2.msra.mxu0 0.0
    %2040 = vmatprep.subr.mxu0 0.0
    %2041 = vmatpush2.msra.mxu0 0.0
    %2042 = vmatprep.subr.mxu0 0.0
    %2043 = vmatpush2.msra.mxu0 0.0
    %2044 = vmatprep.subr.mxu0 0.0
    %2045 = vmatpush2.msra.mxu0 0.0
    %2046 = vmatprep.subr.mxu0 0.0
    %2047 = vmatpush2.msra.mxu0 0.0
    %2048 = vmatprep.subr.mxu0 0.0
    %2049 = vmatpush2.msra.mxu0 0.0
    %2050 = vmatprep.subr.mxu0 0.0
    %2051 = vmatpush2.msra.mxu0 0.0
    %2052 = vmatprep.subr.mxu0 0.0
    %2053 = vmatpush2.msra.mxu0 0.0
    %2054 = vmatprep.subr.mxu0 0.0
    %2055 = vmatpush2.msra.mxu0 0.0
    %2056 = vmatprep.subr.mxu0 0.0
    %2057 = vmatpush2.msra.mxu0 0.0
    %2058 = vmatprep.subr.mxu0 0.0
    %2059 = vmatpush2.msra.mxu0 0.0
    %2060 = vmatprep.mubr.f32.mxu0 0.0
    %2061 = vmatmul.mubr.f32.gmra.mxu0 %v1994
    %v2062 = vpop.f32.mrf.mxu0
    %v2063 = vadd.f32 0.0, %v2062
    %v2064 = vpop.f32.mrf.mxu0
    %2065 = vdwg.mxu0
    %v2066 = vadd.f32 %v554, %v2063
    %v2067 = vsel %vm566, %v1991, 0
    %2069 = vmatprep.subr.mxu0 0.0
    %2070 = vmatpush1.msra.mxu0 0.0
    %2071 = vmatprep.subr.mxu0 0.0
    %2072 = vmatpush1.msra.mxu0 0.0
    %2073 = vmatprep.subr.mxu0 0.0
    %2074 = vmatpush1.msra.mxu0 0.0
    %2075 = vmatprep.subr.mxu0 0.0
    %2076 = vmatpush1.msra.mxu0 0.0
    %2077 = vmatprep.subr.mxu0 0.0
    %2078 = vmatpush1.msra.mxu0 0.0
    %2079 = vmatprep.subr.mxu0 0.0
    %2080 = vmatpush1.msra.mxu0 0.0
    %2081 = vmatprep.subr.mxu0 0.0
    %2082 = vmatpush1.msra.mxu0 0.0
    %2083 = vmatprep.subr.mxu0 0.0
    %2084 = vmatpush1.msra.mxu0 0.0
    %2085 = vmatprep.subr.mxu0 0.0
    %2086 = vmatpush1.msra.mxu0 0.0
    %2087 = vmatprep.subr.mxu0 0.0
    %2088 = vmatpush1.msra.mxu0 0.0
    %2089 = vmatprep.subr.mxu0 0.0
    %2090 = vmatpush1.msra.mxu0 0.0
    %2091 = vmatprep.subr.mxu0 0.0
    %2092 = vmatpush1.msra.mxu0 0.0
    %2093 = vmatprep.subr.mxu0 0.0
    %2094 = vmatpush1.msra.mxu0 %v565
    %2095 = vmatprep.subr.mxu0 0.0
    %2096 = vmatpush1.msra.mxu0 %v564
    %2097 = vmatprep.subr.mxu0 0.0
    %2098 = vmatpush1.msra.mxu0 %v563
    %2099 = vmatprep.subr.mxu0 0.0
    %2100 = vmatpush1.msra.mxu0 %v562
    %2101 = vmatprep.subr.mxu0 0.0
    %2102 = vmatpush2.msra.mxu0 0.0
    %2103 = vmatprep.subr.mxu0 0.0
    %2104 = vmatpush2.msra.mxu0 0.0
    %2105 = vmatprep.subr.mxu0 0.0
    %2106 = vmatpush2.msra.mxu0 0.0
    %2107 = vmatprep.subr.mxu0 0.0
    %2108 = vmatpush2.msra.mxu0 0.0
    %2109 = vmatprep.subr.mxu0 0.0
    %2110 = vmatpush2.msra.mxu0 0.0
    %2111 = vmatprep.subr.mxu0 0.0
    %2112 = vmatpush2.msra.mxu0 0.0
    %2113 = vmatprep.subr.mxu0 0.0
    %2114 = vmatpush2.msra.mxu0 0.0
    %2115 = vmatprep.subr.mxu0 0.0
    %2116 = vmatpush2.msra.mxu0 0.0
    %2117 = vmatprep.subr.mxu0 0.0
    %2118 = vmatpush2.msra.mxu0 0.0
    %2119 = vmatprep.subr.mxu0 0.0
    %2120 = vmatpush2.msra.mxu0 0.0
    %2121 = vmatprep.subr.mxu0 0.0
    %2122 = vmatpush2.msra.mxu0 0.0
    %2123 = vmatprep.subr.mxu0 0.0
    %2124 = vmatpush2.msra.mxu0 0.0
    %2125 = vmatprep.subr.mxu0 0.0
    %2126 = vmatpush2.msra.mxu0 0.0
    %2127 = vmatprep.subr.mxu0 0.0
    %2128 = vmatpush2.msra.mxu0 0.0
    %2129 = vmatprep.subr.mxu0 0.0
    %2130 = vmatpush2.msra.mxu0 0.0
    %2131 = vmatprep.subr.mxu0 0.0
    %2132 = vmatpush2.msra.mxu0 0.0
    %2133 = vmatprep.mubr.f32.mxu0 0.0
    %2134 = vmatmul.mubr.f32.gmra.mxu0 %v2067
    %v2135 = vpop.f32.mrf.mxu0
    %v2136 = vadd.f32 0.0, %v2135
    %v2137 = vpop.f32.mrf.mxu0
    %2138 = vdwg.mxu0
    %v2139 = vadd.f32 %v514, %v2136
    %v2140 = vxor.u32 %v2066, 2147483648
    %v2141 = vmul.f32 %v2140, 1.442695
    %v2142 = vpow.pop %v2141
    %v2143 = vadd.f32 %v2142, 1.0
    %v2144 = vrcp.pop %v2143
    %v2145 = vmul.f32 1.0, %v2144
    %v2146 = vtanh.pop %v2066
    %v2147 = vmul.f32 %v2145, %v1953
    %2149 = vrot.lane.b32.xlu0 %v2146, 64
    %v2150 = vpop.permute.xlu0 %2149
    %v2152 = vmul.f32 %v2145, %v2150
    %2154 = vrot.lane.b32.xlu0 %v2152, 32
    %v2155 = vpop.permute.xlu0 %2154
    %v2157 = vadd.f32 %v2147, %v2155
    %v2158 = vtanh.pop %v2157
    %2160 = vrot.lane.b32.xlu0 %v2158, 64
    %v2161 = vpop.permute.xlu0 %2160
    %v2163 = vmul.f32 %v2145, %v2161
    %v2164 = vxor.u32 %v2139, 2147483648
    %v2165 = vmul.f32 %v2164, 1.442695
    %v2166 = vpow.pop %v2165
    %v2167 = vadd.f32 %v2166, 1.0
    %v2168 = vrcp.pop %v2167
    %v2169 = vmul.f32 1.0, %v2168
    %v2170 = vtanh.pop %v2139
    %v2171 = vmul.f32 %v2169, %v1977
    %2173 = vrot.lane.b32.xlu0 %v2170, 64
    %v2174 = vpop.permute.xlu0 %2173
    %v2176 = vmul.f32 %v2169, %v2174
    %2178 = vrot.lane.b32.xlu0 %v2176, 32
    %v2179 = vpop.permute.xlu0 %2178
    %v2181 = vadd.f32 %v2171, %v2179
    %v2182 = vtanh.pop %v2181
    %2184 = vrot.lane.b32.xlu0 %v2182, 64
    %v2185 = vpop.permute.xlu0 %2184
    %v2187 = vmul.f32 %v2169, %v2185
    %2189 = vrot.lane.b32.xlu0 %v2163, 32
    %v2190 = vpop.permute.xlu0 %2189
    %2192 = vst.msk [vmem:[#allocation2 + $0x38] sm:$0xff] %vm566, %v2190
    %2194 = vrot.lane.b32.xlu0 %v2187, 32
    %v2195 = vpop.permute.xlu0 %2194
    %2197 = vst.msk [vmem:[#allocation3] sm:$0xff] %vm566, %v2195
    %v2198 = vld [vmem:[#allocation2] sm:$0xff]
    %v2199 = vld [vmem:[#allocation2 + $0x8] sm:$0xff]
    %v2200 = vld [vmem:[#allocation2 + $0x10] sm:$0xff]
    %v2201 = vld [vmem:[#allocation2 + $0x18] sm:$0xff]
    %v2202 = vld [vmem:[#allocation2 + $0x20] sm:$0xff]
    %v2203 = vld [vmem:[#allocation2 + $0x28] sm:$0xff]
    %v2204 = vld [vmem:[#allocation2 + $0x30] sm:$0xff]
    %v2205 = vld [vmem:[#allocation2 + $0x38] sm:$0xff]
    %v2206 = vld [vmem:[%s1 + $0x320] sm:$0xff]
    %v2207 = vld [vmem:[%s1 + $0x328] sm:$0xff]
    %v2208 = vld [vmem:[%s1 + $0x330] sm:$0xff]
    %v2209 = vld [vmem:[%s1 + $0x338] sm:$0xff]
    %v2210 = vld [vmem:[%s1 + $0x340] sm:$0xff]
    %v2211 = vld [vmem:[%s1 + $0x348] sm:$0xff]
    %v2212 = vld [vmem:[%s1 + $0x350] sm:$0xff]
    %v2213 = vld [vmem:[%s1 + $0x358] sm:$0xff]
    %v2214 = vld [vmem:[#allocation3] sm:$0xff]
    %v2215 = vld [vmem:[#allocation3 + $0x8] sm:$0xff]
    %v2216 = vld [vmem:[#allocation3 + $0x10] sm:$0xff]
    %v2217 = vld [vmem:[#allocation3 + $0x18] sm:$0xff]
    %v2218 = vld [vmem:[#allocation3 + $0x20] sm:$0xff]
    %v2219 = vld [vmem:[#allocation3 + $0x28] sm:$0xff]
    %v2220 = vld [vmem:[#allocation3 + $0x30] sm:$0xff]
    %v2221 = vld [vmem:[#allocation3 + $0x38] sm:$0xff]
    %v2222 = vld [vmem:[%s1 + $0x360] sm:$0xff]
    %v2223 = vld [vmem:[%s1 + $0x368] sm:$0xff]
    %v2224 = vld [vmem:[%s1 + $0x370] sm:$0xff]
    %v2225 = vld [vmem:[%s1 + $0x378] sm:$0xff]
    %v2226 = vld [vmem:[%s1 + $0x380] sm:$0xff]
    %v2227 = vld [vmem:[%s1 + $0x388] sm:$0xff]
    %v2228 = vld [vmem:[%s1 + $0x390] sm:$0xff]
    %v2229 = vld [vmem:[%s1 + $0x398] sm:$0xff]
    %v2231 = vsel %vm566, %v2214, 0
    %v2234 = vsel %vm566, %v2215, 0
    %v2237 = vsel %vm566, %v2216, 0
    %v2240 = vsel %vm566, %v2217, 0
    %v2243 = vsel %vm566, %v2218, 0
    %v2246 = vsel %vm566, %v2219, 0
    %v2249 = vsel %vm566, %v2220, 0
    %v2252 = vsel %vm566, %v2221, 0
    %2254 = vmatprep.subr.mxu0 0.0
    %2255 = vmatpush1.msra.mxu0 0.0
    %2256 = vmatprep.subr.mxu0 0.0
    %2257 = vmatpush1.msra.mxu0 0.0
    %2258 = vmatprep.subr.mxu0 0.0
    %2259 = vmatpush1.msra.mxu0 0.0
    %2260 = vmatprep.subr.mxu0 0.0
    %2261 = vmatpush1.msra.mxu0 0.0
    %2262 = vmatprep.subr.mxu0 0.0
    %2263 = vmatpush1.msra.mxu0 0.0
    %2264 = vmatprep.subr.mxu0 0.0
    %2265 = vmatpush1.msra.mxu0 0.0
    %2266 = vmatprep.subr.mxu0 0.0
    %2267 = vmatpush1.msra.mxu0 0.0
    %2268 = vmatprep.subr.mxu0 0.0
    %2269 = vmatpush1.msra.mxu0 0.0
    %2270 = vmatprep.subr.mxu0 0.0
    %2271 = vmatpush1.msra.mxu0 0.0
    %2272 = vmatprep.subr.mxu0 0.0
    %2273 = vmatpush1.msra.mxu0 0.0
    %2274 = vmatprep.subr.mxu0 0.0
    %2275 = vmatpush1.msra.mxu0 0.0
    %2276 = vmatprep.subr.mxu0 0.0
    %2277 = vmatpush1.msra.mxu0 0.0
    %2278 = vmatprep.subr.mxu0 %v2229
    %2279 = vmatpush1.msra.mxu0 %v2228
    %2280 = vmatprep.subr.mxu0 %v2227
    %2281 = vmatpush1.msra.mxu0 %v2226
    %2282 = vmatprep.subr.mxu0 %v2225
    %2283 = vmatpush1.msra.mxu0 %v2224
    %2284 = vmatprep.subr.mxu0 %v2223
    %2285 = vmatpush1.msra.mxu0 %v2222
    %2286 = vmatprep.subr.mxu0 0.0
    %2287 = vmatpush2.msra.mxu0 0.0
    %2288 = vmatprep.subr.mxu0 0.0
    %2289 = vmatpush2.msra.mxu0 0.0
    %2290 = vmatprep.subr.mxu0 0.0
    %2291 = vmatpush2.msra.mxu0 0.0
    %2292 = vmatprep.subr.mxu0 0.0
    %2293 = vmatpush2.msra.mxu0 0.0
    %2294 = vmatprep.subr.mxu0 0.0
    %2295 = vmatpush2.msra.mxu0 0.0
    %2296 = vmatprep.subr.mxu0 0.0
    %2297 = vmatpush2.msra.mxu0 0.0
    %2298 = vmatprep.subr.mxu0 0.0
    %2299 = vmatpush2.msra.mxu0 0.0
    %2300 = vmatprep.subr.mxu0 0.0
    %2301 = vmatpush2.msra.mxu0 0.0
    %2302 = vmatprep.subr.mxu0 0.0
    %2303 = vmatpush2.msra.mxu0 0.0
    %2304 = vmatprep.subr.mxu0 0.0
    %2305 = vmatpush2.msra.mxu0 0.0
    %2306 = vmatprep.subr.mxu0 0.0
    %2307 = vmatpush2.msra.mxu0 0.0
    %2308 = vmatprep.subr.mxu0 0.0
    %2309 = vmatpush2.msra.mxu0 0.0
    %2310 = vmatprep.subr.mxu0 0.0
    %2311 = vmatpush2.msra.mxu0 0.0
    %2312 = vmatprep.subr.mxu0 0.0
    %2313 = vmatpush2.msra.mxu0 0.0
    %2314 = vmatprep.subr.mxu0 0.0
    %2315 = vmatpush2.msra.mxu0 0.0
    %2316 = vmatprep.subr.mxu0 0.0
    %2317 = vmatpush2.msra.mxu0 0.0
    %2318 = vmatprep.mubr.f32.mxu0 0.0
    %2319 = vmatmul.mubr.f32.gmra.mxu0 %v2231
    %v2320 = vpop.f32.mrf.mxu0
    %v2321 = vadd.f32 0.0, %v2320
    %v2322 = vpop.f32.mrf.mxu0
    %2323 = vmatprep.mubr.f32.mxu0 0.0
    %2324 = vmatmul.mubr.f32.gmra.mxu0 %v2234
    %v2325 = vpop.f32.mrf.mxu0
    %v2326 = vadd.f32 0.0, %v2325
    %v2327 = vpop.f32.mrf.mxu0
    %2328 = vmatprep.mubr.f32.mxu0 0.0
    %2329 = vmatmul.mubr.f32.gmra.mxu0 %v2237
    %v2330 = vpop.f32.mrf.mxu0
    %v2331 = vadd.f32 0.0, %v2330
    %v2332 = vpop.f32.mrf.mxu0
    %2333 = vmatprep.mubr.f32.mxu0 0.0
    %2334 = vmatmul.mubr.f32.gmra.mxu0 %v2240
    %v2335 = vpop.f32.mrf.mxu0
    %v2336 = vadd.f32 0.0, %v2335
    %v2337 = vpop.f32.mrf.mxu0
    %2338 = vmatprep.mubr.f32.mxu0 0.0
    %2339 = vmatmul.mubr.f32.gmra.mxu0 %v2243
    %v2340 = vpop.f32.mrf.mxu0
    %v2341 = vadd.f32 0.0, %v2340
    %v2342 = vpop.f32.mrf.mxu0
    %2343 = vmatprep.mubr.f32.mxu0 0.0
    %2344 = vmatmul.mubr.f32.gmra.mxu0 %v2246
    %v2345 = vpop.f32.mrf.mxu0
    %v2346 = vadd.f32 0.0, %v2345
    %v2347 = vpop.f32.mrf.mxu0
    %2348 = vmatprep.mubr.f32.mxu0 0.0
    %2349 = vmatmul.mubr.f32.gmra.mxu0 %v2249
    %v2350 = vpop.f32.mrf.mxu0
    %v2351 = vadd.f32 0.0, %v2350
    %v2352 = vpop.f32.mrf.mxu0
    %2353 = vmatprep.mubr.f32.mxu0 0.0
    %2354 = vmatmul.mubr.f32.gmra.mxu0 %v2252
    %v2355 = vpop.f32.mrf.mxu0
    %v2356 = vadd.f32 0.0, %v2355
    %v2357 = vpop.f32.mrf.mxu0
    %v2358 = vadd.f32 0.0, %v2357
    %2359 = vdwg.mxu0
    %v2361 = vsel %vm566, %v2198, 0
    %v2364 = vsel %vm566, %v2199, 0
    %v2367 = vsel %vm566, %v2200, 0
    %v2370 = vsel %vm566, %v2201, 0
    %v2373 = vsel %vm566, %v2202, 0
    %v2376 = vsel %vm566, %v2203, 0
    %v2379 = vsel %vm566, %v2204, 0
    %v2382 = vsel %vm566, %v2205, 0
    %2384 = vmatprep.subr.mxu0 0.0
    %2385 = vmatpush1.msra.mxu0 0.0
    %2386 = vmatprep.subr.mxu0 0.0
    %2387 = vmatpush1.msra.mxu0 0.0
    %2388 = vmatprep.subr.mxu0 0.0
    %2389 = vmatpush1.msra.mxu0 0.0
    %2390 = vmatprep.subr.mxu0 0.0
    %2391 = vmatpush1.msra.mxu0 0.0
    %2392 = vmatprep.subr.mxu0 0.0
    %2393 = vmatpush1.msra.mxu0 0.0
    %2394 = vmatprep.subr.mxu0 0.0
    %2395 = vmatpush1.msra.mxu0 0.0
    %2396 = vmatprep.subr.mxu0 0.0
    %2397 = vmatpush1.msra.mxu0 0.0
    %2398 = vmatprep.subr.mxu0 0.0
    %2399 = vmatpush1.msra.mxu0 0.0
    %2400 = vmatprep.subr.mxu0 0.0
    %2401 = vmatpush1.msra.mxu0 0.0
    %2402 = vmatprep.subr.mxu0 0.0
    %2403 = vmatpush1.msra.mxu0 0.0
    %2404 = vmatprep.subr.mxu0 0.0
    %2405 = vmatpush1.msra.mxu0 0.0
    %2406 = vmatprep.subr.mxu0 0.0
    %2407 = vmatpush1.msra.mxu0 0.0
    %2408 = vmatprep.subr.mxu0 %v2213
    %2409 = vmatpush1.msra.mxu0 %v2212
    %2410 = vmatprep.subr.mxu0 %v2211
    %2411 = vmatpush1.msra.mxu0 %v2210
    %2412 = vmatprep.subr.mxu0 %v2209
    %2413 = vmatpush1.msra.mxu0 %v2208
    %2414 = vmatprep.subr.mxu0 %v2207
    %2415 = vmatpush1.msra.mxu0 %v2206
    %2416 = vmatprep.subr.mxu0 0.0
    %2417 = vmatpush2.msra.mxu0 0.0
    %2418 = vmatprep.subr.mxu0 0.0
    %2419 = vmatpush2.msra.mxu0 0.0
    %2420 = vmatprep.subr.mxu0 0.0
    %2421 = vmatpush2.msra.mxu0 0.0
    %2422 = vmatprep.subr.mxu0 0.0
    %2423 = vmatpush2.msra.mxu0 0.0
    %2424 = vmatprep.subr.mxu0 0.0
    %2425 = vmatpush2.msra.mxu0 0.0
    %2426 = vmatprep.subr.mxu0 0.0
    %2427 = vmatpush2.msra.mxu0 0.0
    %2428 = vmatprep.subr.mxu0 0.0
    %2429 = vmatpush2.msra.mxu0 0.0
    %2430 = vmatprep.subr.mxu0 0.0
    %2431 = vmatpush2.msra.mxu0 0.0
    %2432 = vmatprep.subr.mxu0 0.0
    %2433 = vmatpush2.msra.mxu0 0.0
    %2434 = vmatprep.subr.mxu0 0.0
    %2435 = vmatpush2.msra.mxu0 0.0
    %2436 = vmatprep.subr.mxu0 0.0
    %2437 = vmatpush2.msra.mxu0 0.0
    %2438 = vmatprep.subr.mxu0 0.0
    %2439 = vmatpush2.msra.mxu0 0.0
    %2440 = vmatprep.subr.mxu0 0.0
    %2441 = vmatpush2.msra.mxu0 0.0
    %2442 = vmatprep.subr.mxu0 0.0
    %2443 = vmatpush2.msra.mxu0 0.0
    %2444 = vmatprep.subr.mxu0 0.0
    %2445 = vmatpush2.msra.mxu0 0.0
    %2446 = vmatprep.subr.mxu0 0.0
    %2447 = vmatpush2.msra.mxu0 0.0
    %2448 = vmatprep.mubr.f32.mxu0 0.0
    %2449 = vmatmul.mubr.f32.gmra.mxu0 %v2361
    %v2450 = vpop.f32.mrf.mxu0
    %v2451 = vadd.f32 %v2321, %v2450
    %v2452 = vpop.f32.mrf.mxu0
    %2453 = vmatprep.mubr.f32.mxu0 0.0
    %2454 = vmatmul.mubr.f32.gmra.mxu0 %v2364
    %v2455 = vpop.f32.mrf.mxu0
    %v2456 = vadd.f32 %v2326, %v2455
    %v2457 = vpop.f32.mrf.mxu0
    %2458 = vmatprep.mubr.f32.mxu0 0.0
    %2459 = vmatmul.mubr.f32.gmra.mxu0 %v2367
    %v2460 = vpop.f32.mrf.mxu0
    %v2461 = vadd.f32 %v2331, %v2460
    %v2462 = vpop.f32.mrf.mxu0
    %2463 = vmatprep.mubr.f32.mxu0 0.0
    %2464 = vmatmul.mubr.f32.gmra.mxu0 %v2370
    %v2465 = vpop.f32.mrf.mxu0
    %v2466 = vadd.f32 %v2336, %v2465
    %v2467 = vpop.f32.mrf.mxu0
    %2468 = vmatprep.mubr.f32.mxu0 0.0
    %2469 = vmatmul.mubr.f32.gmra.mxu0 %v2373
    %v2470 = vpop.f32.mrf.mxu0
    %v2471 = vadd.f32 %v2341, %v2470
    %v2472 = vpop.f32.mrf.mxu0
    %2473 = vmatprep.mubr.f32.mxu0 0.0
    %2474 = vmatmul.mubr.f32.gmra.mxu0 %v2376
    %v2475 = vpop.f32.mrf.mxu0
    %v2476 = vadd.f32 %v2346, %v2475
    %v2477 = vpop.f32.mrf.mxu0
    %2478 = vmatprep.mubr.f32.mxu0 0.0
    %2479 = vmatmul.mubr.f32.gmra.mxu0 %v2379
    %v2480 = vpop.f32.mrf.mxu0
    %v2481 = vadd.f32 %v2351, %v2480
    %v2482 = vpop.f32.mrf.mxu0
    %2483 = vmatprep.mubr.f32.mxu0 0.0
    %2484 = vmatmul.mubr.f32.gmra.mxu0 %v2382
    %v2485 = vpop.f32.mrf.mxu0
    %v2486 = vadd.f32 %v2356, %v2485
    %v2487 = vpop.f32.mrf.mxu0
    %v2488 = vadd.f32 %v2358, %v2487
    %2489 = vdwg.mxu0
    %s2490 = scalar_lea.vmem %s1, 928
    %v2491 = vld [vmem:[%s2490] ss:$8 sm:$0x3]
    %v2493 = vlaneseq
    %v2494 = vshrl.u32 %v2493, 7
    %v2495 = vsub.s32 0, %v2494
    %v2496 = vrot.slane %v2491, %v2495
    %v2497 = vlaneseq
    %v2498 = vshrl.u32 %v2497, 7
    %v2499 = vsub.s32 1, %v2498
    %v2500 = vrot.slane %v2491, %v2499
    %v2503 = vadd.f32 %v2451, %v2496
    %v2504 = vadd.f32 %v2456, %v2496
    %v2505 = vadd.f32 %v2461, %v2496
    %v2506 = vadd.f32 %v2466, %v2496
    %v2507 = vadd.f32 %v2471, %v2496
    %v2508 = vadd.f32 %v2476, %v2496
    %v2509 = vadd.f32 %v2481, %v2496
    %v2510 = vadd.f32 %v2486, %v2496
    %v2511 = vadd.f32 %v2488, %v2500
    %v2512 = vld [vmem:[#allocation4 + $0x148] sm:$0xff]
    %v2513 = vld [vmem:[#allocation4 + $0x150] sm:$0xff]
    %v2514 = vld [vmem:[#allocation4 + $0x158] sm:$0xff]
    %v2515 = vld [vmem:[#allocation4 + $0x160] sm:$0xff]
    %2516 = vmatprep.subr.mxu0 0.0
    %2517 = vmatpush1.msra.mxu0 0.0
    %2518 = vmatprep.subr.mxu0 0.0
    %2519 = vmatpush1.msra.mxu0 0.0
    %2520 = vmatprep.subr.mxu0 0.0
    %2521 = vmatpush1.msra.mxu0 0.0
    %2522 = vmatprep.subr.mxu0 0.0
    %2523 = vmatpush1.msra.mxu0 0.0
    %2524 = vmatprep.subr.mxu0 0.0
    %2525 = vmatpush1.msra.mxu0 0.0
    %2526 = vmatprep.subr.mxu0 0.0
    %2527 = vmatpush1.msra.mxu0 0.0
    %2528 = vmatprep.subr.mxu0 0.0
    %2529 = vmatpush1.msra.mxu0 0.0
    %2530 = vmatprep.subr.mxu0 0.0
    %2531 = vmatpush1.msra.mxu0 0.0
    %2532 = vmatprep.subr.mxu0 0.0
    %2533 = vmatpush1.msra.mxu0 0.0
    %2534 = vmatprep.subr.mxu0 0.0
    %2535 = vmatpush1.msra.mxu0 0.0
    %2536 = vmatprep.subr.mxu0 0.0
    %2537 = vmatpush1.msra.mxu0 0.0
    %2538 = vmatprep.subr.mxu0 0.0
    %2539 = vmatpush1.msra.mxu0 0.0
    %2540 = vmatprep.subr.mxu0 0.0
    %2541 = vmatpush1.msra.mxu0 %v2515
    %2542 = vmatprep.subr.mxu0 0.0
    %2543 = vmatpush1.msra.mxu0 %v2514
    %2544 = vmatprep.subr.mxu0 0.0
    %2545 = vmatpush1.msra.mxu0 %v2513
    %2546 = vmatprep.subr.mxu0 0.0
    %2547 = vmatpush1.msra.mxu0 %v2512
    %2548 = vmatprep.subr.mxu0 0.0
    %2549 = vmatpush2.msra.mxu0 0.0
    %2550 = vmatprep.subr.mxu0 0.0
    %2551 = vmatpush2.msra.mxu0 0.0
    %2552 = vmatprep.subr.mxu0 0.0
    %2553 = vmatpush2.msra.mxu0 0.0
    %2554 = vmatprep.subr.mxu0 0.0
    %2555 = vmatpush2.msra.mxu0 0.0
    %2556 = vmatprep.subr.mxu0 0.0
    %2557 = vmatpush2.msra.mxu0 0.0
    %2558 = vmatprep.subr.mxu0 0.0
    %2559 = vmatpush2.msra.mxu0 0.0
    %2560 = vmatprep.subr.mxu0 0.0
    %2561 = vmatpush2.msra.mxu0 0.0
    %2562 = vmatprep.subr.mxu0 0.0
    %2563 = vmatpush2.msra.mxu0 0.0
    %2564 = vmatprep.subr.mxu0 0.0
    %2565 = vmatpush2.msra.mxu0 0.0
    %2566 = vmatprep.subr.mxu0 0.0
    %2567 = vmatpush2.msra.mxu0 0.0
    %2568 = vmatprep.subr.mxu0 0.0
    %2569 = vmatpush2.msra.mxu0 0.0
    %2570 = vmatprep.subr.mxu0 0.0
    %2571 = vmatpush2.msra.mxu0 0.0
    %2572 = vmatprep.subr.mxu0 0.0
    %2573 = vmatpush2.msra.mxu0 0.0
    %2574 = vmatprep.subr.mxu0 0.0
    %2575 = vmatpush2.msra.mxu0 0.0
    %2576 = vmatprep.subr.mxu0 0.0
    %2577 = vmatpush2.msra.mxu0 0.0
    %2578 = vmatprep.subr.mxu0 0.0
    %2579 = vmatpush2.msra.mxu0 0.0
    %2580 = vmatprep.mubr.f32.mxu0 0.0
    %2581 = vmatmul.mubr.f32.gmra.mxu0 %v568
    %v2582 = vpop.f32.mrf.mxu0
    %v2583 = vadd.f32 0.0, %v2582
    %v2584 = vpop.f32.mrf.mxu0
    %2585 = vdwg.mxu0
    %v2586 = vadd.f32 %v2503, %v2583
    %v2587 = vxor.u32 %v2586, 2147483648
    %v2588 = vmul.f32 %v2587, 1.442695
    %v2589 = vpow.pop %v2588
    %v2590 = vadd.f32 %v2589, 1.0
    %v2591 = vrcp.pop %v2590
    %v2592 = vmul.f32 1.0, %v2591
    %v2593 = vtanh.pop %v2586
    %v2594 = vmul.f32 %v2592, 0.0
    %2596 = vrot.lane.b32.xlu0 %v2593, 64
    %v2597 = vpop.permute.xlu0 %2596
    %v2599 = vmul.f32 %v2592, %v2597
    %2601 = vrot.lane.b32.xlu0 %v2599, 32
    %v2602 = vpop.permute.xlu0 %2601
    %v2604 = vadd.f32 %v2594, %v2602
    %v2605 = vtanh.pop %v2604
    %2607 = vrot.lane.b32.xlu0 %v2605, 64
    %v2608 = vpop.permute.xlu0 %2607
    %v2610 = vmul.f32 %v2592, %v2608
    %2612 = vrot.lane.b32.xlu0 %v2610, 32
    %v2613 = vpop.permute.xlu0 %2612
    %v2614 = vsel %vm566, %v2613, 0
    %2616 = vmatprep.subr.mxu0 0.0
    %2617 = vmatpush1.msra.mxu0 0.0
    %2618 = vmatprep.subr.mxu0 0.0
    %2619 = vmatpush1.msra.mxu0 0.0
    %2620 = vmatprep.subr.mxu0 0.0
    %2621 = vmatpush1.msra.mxu0 0.0
    %2622 = vmatprep.subr.mxu0 0.0
    %2623 = vmatpush1.msra.mxu0 0.0
    %2624 = vmatprep.subr.mxu0 0.0
    %2625 = vmatpush1.msra.mxu0 0.0
    %2626 = vmatprep.subr.mxu0 0.0
    %2627 = vmatpush1.msra.mxu0 0.0
    %2628 = vmatprep.subr.mxu0 0.0
    %2629 = vmatpush1.msra.mxu0 0.0
    %2630 = vmatprep.subr.mxu0 0.0
    %2631 = vmatpush1.msra.mxu0 0.0
    %2632 = vmatprep.subr.mxu0 0.0
    %2633 = vmatpush1.msra.mxu0 0.0
    %2634 = vmatprep.subr.mxu0 0.0
    %2635 = vmatpush1.msra.mxu0 0.0
    %2636 = vmatprep.subr.mxu0 0.0
    %2637 = vmatpush1.msra.mxu0 0.0
    %2638 = vmatprep.subr.mxu0 0.0
    %2639 = vmatpush1.msra.mxu0 0.0
    %2640 = vmatprep.subr.mxu0 0.0
    %2641 = vmatpush1.msra.mxu0 %v2515
    %2642 = vmatprep.subr.mxu0 0.0
    %2643 = vmatpush1.msra.mxu0 %v2514
    %2644 = vmatprep.subr.mxu0 0.0
    %2645 = vmatpush1.msra.mxu0 %v2513
    %2646 = vmatprep.subr.mxu0 0.0
    %2647 = vmatpush1.msra.mxu0 %v2512
    %2648 = vmatprep.subr.mxu0 0.0
    %2649 = vmatpush2.msra.mxu0 0.0
    %2650 = vmatprep.subr.mxu0 0.0
    %2651 = vmatpush2.msra.mxu0 0.0
    %2652 = vmatprep.subr.mxu0 0.0
    %2653 = vmatpush2.msra.mxu0 0.0
    %2654 = vmatprep.subr.mxu0 0.0
    %2655 = vmatpush2.msra.mxu0 0.0
    %2656 = vmatprep.subr.mxu0 0.0
    %2657 = vmatpush2.msra.mxu0 0.0
    %2658 = vmatprep.subr.mxu0 0.0
    %2659 = vmatpush2.msra.mxu0 0.0
    %2660 = vmatprep.subr.mxu0 0.0
    %2661 = vmatpush2.msra.mxu0 0.0
    %2662 = vmatprep.subr.mxu0 0.0
    %2663 = vmatpush2.msra.mxu0 0.0
    %2664 = vmatprep.subr.mxu0 0.0
    %2665 = vmatpush2.msra.mxu0 0.0
    %2666 = vmatprep.subr.mxu0 0.0
    %2667 = vmatpush2.msra.mxu0 0.0
    %2668 = vmatprep.subr.mxu0 0.0
    %2669 = vmatpush2.msra.mxu0 0.0
    %2670 = vmatprep.subr.mxu0 0.0
    %2671 = vmatpush2.msra.mxu0 0.0
    %2672 = vmatprep.subr.mxu0 0.0
    %2673 = vmatpush2.msra.mxu0 0.0
    %2674 = vmatprep.subr.mxu0 0.0
    %2675 = vmatpush2.msra.mxu0 0.0
    %2676 = vmatprep.subr.mxu0 0.0
    %2677 = vmatpush2.msra.mxu0 0.0
    %2678 = vmatprep.subr.mxu0 0.0
    %2679 = vmatpush2.msra.mxu0 0.0
    %2680 = vmatprep.mubr.f32.mxu0 0.0
    %2681 = vmatmul.mubr.f32.gmra.mxu0 %v2614
    %v2682 = vpop.f32.mrf.mxu0
    %v2683 = vadd.f32 0.0, %v2682
    %v2684 = vpop.f32.mrf.mxu0
    %2685 = vdwg.mxu0
    %v2686 = vadd.f32 %v2504, %v2683
    %v2687 = vxor.u32 %v2686, 2147483648
    %v2688 = vmul.f32 %v2687, 1.442695
    %v2689 = vpow.pop %v2688
    %v2690 = vadd.f32 %v2689, 1.0
    %v2691 = vrcp.pop %v2690
    %v2692 = vmul.f32 1.0, %v2691
    %v2693 = vtanh.pop %v2686
    %v2694 = vmul.f32 %v2692, %v2604
    %2696 = vrot.lane.b32.xlu0 %v2693, 64
    %v2697 = vpop.permute.xlu0 %2696
    %v2699 = vmul.f32 %v2692, %v2697
    %2701 = vrot.lane.b32.xlu0 %v2699, 32
    %v2702 = vpop.permute.xlu0 %2701
    %v2704 = vadd.f32 %v2694, %v2702
    %v2705 = vtanh.pop %v2704
    %2707 = vrot.lane.b32.xlu0 %v2705, 64
    %v2708 = vpop.permute.xlu0 %2707
    %v2710 = vmul.f32 %v2692, %v2708
    %2712 = vrot.lane.b32.xlu0 %v2710, 32
    %v2713 = vpop.permute.xlu0 %2712
    %v2714 = vsel %vm566, %v2713, 0
    %2716 = vmatprep.subr.mxu0 0.0
    %2717 = vmatpush1.msra.mxu0 0.0
    %2718 = vmatprep.subr.mxu0 0.0
    %2719 = vmatpush1.msra.mxu0 0.0
    %2720 = vmatprep.subr.mxu0 0.0
    %2721 = vmatpush1.msra.mxu0 0.0
    %2722 = vmatprep.subr.mxu0 0.0
    %2723 = vmatpush1.msra.mxu0 0.0
    %2724 = vmatprep.subr.mxu0 0.0
    %2725 = vmatpush1.msra.mxu0 0.0
    %2726 = vmatprep.subr.mxu0 0.0
    %2727 = vmatpush1.msra.mxu0 0.0
    %2728 = vmatprep.subr.mxu0 0.0
    %2729 = vmatpush1.msra.mxu0 0.0
    %2730 = vmatprep.subr.mxu0 0.0
    %2731 = vmatpush1.msra.mxu0 0.0
    %2732 = vmatprep.subr.mxu0 0.0
    %2733 = vmatpush1.msra.mxu0 0.0
    %2734 = vmatprep.subr.mxu0 0.0
    %2735 = vmatpush1.msra.mxu0 0.0
    %2736 = vmatprep.subr.mxu0 0.0
    %2737 = vmatpush1.msra.mxu0 0.0
    %2738 = vmatprep.subr.mxu0 0.0
    %2739 = vmatpush1.msra.mxu0 0.0
    %2740 = vmatprep.subr.mxu0 0.0
    %2741 = vmatpush1.msra.mxu0 %v2515
    %2742 = vmatprep.subr.mxu0 0.0
    %2743 = vmatpush1.msra.mxu0 %v2514
    %2744 = vmatprep.subr.mxu0 0.0
    %2745 = vmatpush1.msra.mxu0 %v2513
    %2746 = vmatprep.subr.mxu0 0.0
    %2747 = vmatpush1.msra.mxu0 %v2512
    %2748 = vmatprep.subr.mxu0 0.0
    %2749 = vmatpush2.msra.mxu0 0.0
    %2750 = vmatprep.subr.mxu0 0.0
    %2751 = vmatpush2.msra.mxu0 0.0
    %2752 = vmatprep.subr.mxu0 0.0
    %2753 = vmatpush2.msra.mxu0 0.0
    %2754 = vmatprep.subr.mxu0 0.0
    %2755 = vmatpush2.msra.mxu0 0.0
    %2756 = vmatprep.subr.mxu0 0.0
    %2757 = vmatpush2.msra.mxu0 0.0
    %2758 = vmatprep.subr.mxu0 0.0
    %2759 = vmatpush2.msra.mxu0 0.0
    %2760 = vmatprep.subr.mxu0 0.0
    %2761 = vmatpush2.msra.mxu0 0.0
    %2762 = vmatprep.subr.mxu0 0.0
    %2763 = vmatpush2.msra.mxu0 0.0
    %2764 = vmatprep.subr.mxu0 0.0
    %2765 = vmatpush2.msra.mxu0 0.0
    %2766 = vmatprep.subr.mxu0 0.0
    %2767 = vmatpush2.msra.mxu0 0.0
    %2768 = vmatprep.subr.mxu0 0.0
    %2769 = vmatpush2.msra.mxu0 0.0
    %2770 = vmatprep.subr.mxu0 0.0
    %2771 = vmatpush2.msra.mxu0 0.0
    %2772 = vmatprep.subr.mxu0 0.0
    %2773 = vmatpush2.msra.mxu0 0.0
    %2774 = vmatprep.subr.mxu0 0.0
    %2775 = vmatpush2.msra.mxu0 0.0
    %2776 = vmatprep.subr.mxu0 0.0
    %2777 = vmatpush2.msra.mxu0 0.0
    %2778 = vmatprep.subr.mxu0 0.0
    %2779 = vmatpush2.msra.mxu0 0.0
    %2780 = vmatprep.mubr.f32.mxu0 0.0
    %2781 = vmatmul.mubr.f32.gmra.mxu0 %v2714
    %v2782 = vpop.f32.mrf.mxu0
    %v2783 = vadd.f32 0.0, %v2782
    %v2784 = vpop.f32.mrf.mxu0
    %2785 = vdwg.mxu0
    %v2786 = vadd.f32 %v2505, %v2783
    %v2787 = vxor.u32 %v2786, 2147483648
    %v2788 = vmul.f32 %v2787, 1.442695
    %v2789 = vpow.pop %v2788
    %v2790 = vadd.f32 %v2789, 1.0
    %v2791 = vrcp.pop %v2790
    %v2792 = vmul.f32 1.0, %v2791
    %v2793 = vtanh.pop %v2786
    %v2794 = vmul.f32 %v2792, %v2704
    %2796 = vrot.lane.b32.xlu0 %v2793, 64
    %v2797 = vpop.permute.xlu0 %2796
    %v2799 = vmul.f32 %v2792, %v2797
    %2801 = vrot.lane.b32.xlu0 %v2799, 32
    %v2802 = vpop.permute.xlu0 %2801
    %v2804 = vadd.f32 %v2794, %v2802
    %v2805 = vtanh.pop %v2804
    %2807 = vrot.lane.b32.xlu0 %v2805, 64
    %v2808 = vpop.permute.xlu0 %2807
    %v2810 = vmul.f32 %v2792, %v2808
    %2812 = vrot.lane.b32.xlu0 %v2810, 32
    %v2813 = vpop.permute.xlu0 %2812
    %v2814 = vsel %vm566, %v2813, 0
    %2816 = vmatprep.subr.mxu0 0.0
    %2817 = vmatpush1.msra.mxu0 0.0
    %2818 = vmatprep.subr.mxu0 0.0
    %2819 = vmatpush1.msra.mxu0 0.0
    %2820 = vmatprep.subr.mxu0 0.0
    %2821 = vmatpush1.msra.mxu0 0.0
    %2822 = vmatprep.subr.mxu0 0.0
    %2823 = vmatpush1.msra.mxu0 0.0
    %2824 = vmatprep.subr.mxu0 0.0
    %2825 = vmatpush1.msra.mxu0 0.0
    %2826 = vmatprep.subr.mxu0 0.0
    %2827 = vmatpush1.msra.mxu0 0.0
    %2828 = vmatprep.subr.mxu0 0.0
    %2829 = vmatpush1.msra.mxu0 0.0
    %2830 = vmatprep.subr.mxu0 0.0
    %2831 = vmatpush1.msra.mxu0 0.0
    %2832 = vmatprep.subr.mxu0 0.0
    %2833 = vmatpush1.msra.mxu0 0.0
    %2834 = vmatprep.subr.mxu0 0.0
    %2835 = vmatpush1.msra.mxu0 0.0
    %2836 = vmatprep.subr.mxu0 0.0
    %2837 = vmatpush1.msra.mxu0 0.0
    %2838 = vmatprep.subr.mxu0 0.0
    %2839 = vmatpush1.msra.mxu0 0.0
    %2840 = vmatprep.subr.mxu0 0.0
    %2841 = vmatpush1.msra.mxu0 %v2515
    %2842 = vmatprep.subr.mxu0 0.0
    %2843 = vmatpush1.msra.mxu0 %v2514
    %2844 = vmatprep.subr.mxu0 0.0
    %2845 = vmatpush1.msra.mxu0 %v2513
    %2846 = vmatprep.subr.mxu0 0.0
    %2847 = vmatpush1.msra.mxu0 %v2512
    %2848 = vmatprep.subr.mxu0 0.0
    %2849 = vmatpush2.msra.mxu0 0.0
    %2850 = vmatprep.subr.mxu0 0.0
    %2851 = vmatpush2.msra.mxu0 0.0
    %2852 = vmatprep.subr.mxu0 0.0
    %2853 = vmatpush2.msra.mxu0 0.0
    %2854 = vmatprep.subr.mxu0 0.0
    %2855 = vmatpush2.msra.mxu0 0.0
    %2856 = vmatprep.subr.mxu0 0.0
    %2857 = vmatpush2.msra.mxu0 0.0
    %2858 = vmatprep.subr.mxu0 0.0
    %2859 = vmatpush2.msra.mxu0 0.0
    %2860 = vmatprep.subr.mxu0 0.0
    %2861 = vmatpush2.msra.mxu0 0.0
    %2862 = vmatprep.subr.mxu0 0.0
    %2863 = vmatpush2.msra.mxu0 0.0
    %2864 = vmatprep.subr.mxu0 0.0
    %2865 = vmatpush2.msra.mxu0 0.0
    %2866 = vmatprep.subr.mxu0 0.0
    %2867 = vmatpush2.msra.mxu0 0.0
    %2868 = vmatprep.subr.mxu0 0.0
    %2869 = vmatpush2.msra.mxu0 0.0
    %2870 = vmatprep.subr.mxu0 0.0
    %2871 = vmatpush2.msra.mxu0 0.0
    %2872 = vmatprep.subr.mxu0 0.0
    %2873 = vmatpush2.msra.mxu0 0.0
    %2874 = vmatprep.subr.mxu0 0.0
    %2875 = vmatpush2.msra.mxu0 0.0
    %2876 = vmatprep.subr.mxu0 0.0
    %2877 = vmatpush2.msra.mxu0 0.0
    %2878 = vmatprep.subr.mxu0 0.0
    %2879 = vmatpush2.msra.mxu0 0.0
    %2880 = vmatprep.mubr.f32.mxu0 0.0
    %2881 = vmatmul.mubr.f32.gmra.mxu0 %v2814
    %v2882 = vpop.f32.mrf.mxu0
    %v2883 = vadd.f32 0.0, %v2882
    %v2884 = vpop.f32.mrf.mxu0
    %2885 = vdwg.mxu0
    %v2886 = vadd.f32 %v2506, %v2883
    %v2887 = vxor.u32 %v2886, 2147483648
    %v2888 = vmul.f32 %v2887, 1.442695
    %v2889 = vpow.pop %v2888
    %v2890 = vadd.f32 %v2889, 1.0
    %v2891 = vrcp.pop %v2890
    %v2892 = vmul.f32 1.0, %v2891
    %v2893 = vtanh.pop %v2886
    %v2894 = vmul.f32 %v2892, %v2804
    %2896 = vrot.lane.b32.xlu0 %v2893, 64
    %v2897 = vpop.permute.xlu0 %2896
    %v2899 = vmul.f32 %v2892, %v2897
    %2901 = vrot.lane.b32.xlu0 %v2899, 32
    %v2902 = vpop.permute.xlu0 %2901
    %v2904 = vadd.f32 %v2894, %v2902
    %v2905 = vtanh.pop %v2904
    %2907 = vrot.lane.b32.xlu0 %v2905, 64
    %v2908 = vpop.permute.xlu0 %2907
    %v2910 = vmul.f32 %v2892, %v2908
    %2912 = vrot.lane.b32.xlu0 %v2910, 32
    %v2913 = vpop.permute.xlu0 %2912
    %v2914 = vsel %vm566, %v2913, 0
    %2916 = vmatprep.subr.mxu0 0.0
    %2917 = vmatpush1.msra.mxu0 0.0
    %2918 = vmatprep.subr.mxu0 0.0
    %2919 = vmatpush1.msra.mxu0 0.0
    %2920 = vmatprep.subr.mxu0 0.0
    %2921 = vmatpush1.msra.mxu0 0.0
    %2922 = vmatprep.subr.mxu0 0.0
    %2923 = vmatpush1.msra.mxu0 0.0
    %2924 = vmatprep.subr.mxu0 0.0
    %2925 = vmatpush1.msra.mxu0 0.0
    %2926 = vmatprep.subr.mxu0 0.0
    %2927 = vmatpush1.msra.mxu0 0.0
    %2928 = vmatprep.subr.mxu0 0.0
    %2929 = vmatpush1.msra.mxu0 0.0
    %2930 = vmatprep.subr.mxu0 0.0
    %2931 = vmatpush1.msra.mxu0 0.0
    %2932 = vmatprep.subr.mxu0 0.0
    %2933 = vmatpush1.msra.mxu0 0.0
    %2934 = vmatprep.subr.mxu0 0.0
    %2935 = vmatpush1.msra.mxu0 0.0
    %2936 = vmatprep.subr.mxu0 0.0
    %2937 = vmatpush1.msra.mxu0 0.0
    %2938 = vmatprep.subr.mxu0 0.0
    %2939 = vmatpush1.msra.mxu0 0.0
    %2940 = vmatprep.subr.mxu0 0.0
    %2941 = vmatpush1.msra.mxu0 %v2515
    %2942 = vmatprep.subr.mxu0 0.0
    %2943 = vmatpush1.msra.mxu0 %v2514
    %2944 = vmatprep.subr.mxu0 0.0
    %2945 = vmatpush1.msra.mxu0 %v2513
    %2946 = vmatprep.subr.mxu0 0.0
    %2947 = vmatpush1.msra.mxu0 %v2512
    %2948 = vmatprep.subr.mxu0 0.0
    %2949 = vmatpush2.msra.mxu0 0.0
    %2950 = vmatprep.subr.mxu0 0.0
    %2951 = vmatpush2.msra.mxu0 0.0
    %2952 = vmatprep.subr.mxu0 0.0
    %2953 = vmatpush2.msra.mxu0 0.0
    %2954 = vmatprep.subr.mxu0 0.0
    %2955 = vmatpush2.msra.mxu0 0.0
    %2956 = vmatprep.subr.mxu0 0.0
    %2957 = vmatpush2.msra.mxu0 0.0
    %2958 = vmatprep.subr.mxu0 0.0
    %2959 = vmatpush2.msra.mxu0 0.0
    %2960 = vmatprep.subr.mxu0 0.0
    %2961 = vmatpush2.msra.mxu0 0.0
    %2962 = vmatprep.subr.mxu0 0.0
    %2963 = vmatpush2.msra.mxu0 0.0
    %2964 = vmatprep.subr.mxu0 0.0
    %2965 = vmatpush2.msra.mxu0 0.0
    %2966 = vmatprep.subr.mxu0 0.0
    %2967 = vmatpush2.msra.mxu0 0.0
    %2968 = vmatprep.subr.mxu0 0.0
    %2969 = vmatpush2.msra.mxu0 0.0
    %2970 = vmatprep.subr.mxu0 0.0
    %2971 = vmatpush2.msra.mxu0 0.0
    %2972 = vmatprep.subr.mxu0 0.0
    %2973 = vmatpush2.msra.mxu0 0.0
    %2974 = vmatprep.subr.mxu0 0.0
    %2975 = vmatpush2.msra.mxu0 0.0
    %2976 = vmatprep.subr.mxu0 0.0
    %2977 = vmatpush2.msra.mxu0 0.0
    %2978 = vmatprep.subr.mxu0 0.0
    %2979 = vmatpush2.msra.mxu0 0.0
    %2980 = vmatprep.mubr.f32.mxu0 0.0
    %2981 = vmatmul.mubr.f32.gmra.mxu0 %v2914
    %v2982 = vpop.f32.mrf.mxu0
    %v2983 = vadd.f32 0.0, %v2982
    %v2984 = vpop.f32.mrf.mxu0
    %2985 = vdwg.mxu0
    %v2986 = vadd.f32 %v2507, %v2983
    %v2987 = vxor.u32 %v2986, 2147483648
    %v2988 = vmul.f32 %v2987, 1.442695
    %v2989 = vpow.pop %v2988
    %v2990 = vadd.f32 %v2989, 1.0
    %v2991 = vrcp.pop %v2990
    %v2992 = vmul.f32 1.0, %v2991
    %v2993 = vtanh.pop %v2986
    %v2994 = vmul.f32 %v2992, %v2904
    %2996 = vrot.lane.b32.xlu0 %v2993, 64
    %v2997 = vpop.permute.xlu0 %2996
    %v2999 = vmul.f32 %v2992, %v2997
    %3001 = vrot.lane.b32.xlu0 %v2999, 32
    %v3002 = vpop.permute.xlu0 %3001
    %v3004 = vadd.f32 %v2994, %v3002
    %v3005 = vtanh.pop %v3004
    %3007 = vrot.lane.b32.xlu0 %v3005, 64
    %v3008 = vpop.permute.xlu0 %3007
    %v3010 = vmul.f32 %v2992, %v3008
    %3012 = vrot.lane.b32.xlu0 %v3010, 32
    %v3013 = vpop.permute.xlu0 %3012
    %v3014 = vsel %vm566, %v3013, 0
    %3016 = vmatprep.subr.mxu0 0.0
    %3017 = vmatpush1.msra.mxu0 0.0
    %3018 = vmatprep.subr.mxu0 0.0
    %3019 = vmatpush1.msra.mxu0 0.0
    %3020 = vmatprep.subr.mxu0 0.0
    %3021 = vmatpush1.msra.mxu0 0.0
    %3022 = vmatprep.subr.mxu0 0.0
    %3023 = vmatpush1.msra.mxu0 0.0
    %3024 = vmatprep.subr.mxu0 0.0
    %3025 = vmatpush1.msra.mxu0 0.0
    %3026 = vmatprep.subr.mxu0 0.0
    %3027 = vmatpush1.msra.mxu0 0.0
    %3028 = vmatprep.subr.mxu0 0.0
    %3029 = vmatpush1.msra.mxu0 0.0
    %3030 = vmatprep.subr.mxu0 0.0
    %3031 = vmatpush1.msra.mxu0 0.0
    %3032 = vmatprep.subr.mxu0 0.0
    %3033 = vmatpush1.msra.mxu0 0.0
    %3034 = vmatprep.subr.mxu0 0.0
    %3035 = vmatpush1.msra.mxu0 0.0
    %3036 = vmatprep.subr.mxu0 0.0
    %3037 = vmatpush1.msra.mxu0 0.0
    %3038 = vmatprep.subr.mxu0 0.0
    %3039 = vmatpush1.msra.mxu0 0.0
    %3040 = vmatprep.subr.mxu0 0.0
    %3041 = vmatpush1.msra.mxu0 %v2515
    %3042 = vmatprep.subr.mxu0 0.0
    %3043 = vmatpush1.msra.mxu0 %v2514
    %3044 = vmatprep.subr.mxu0 0.0
    %3045 = vmatpush1.msra.mxu0 %v2513
    %3046 = vmatprep.subr.mxu0 0.0
    %3047 = vmatpush1.msra.mxu0 %v2512
    %3048 = vmatprep.subr.mxu0 0.0
    %3049 = vmatpush2.msra.mxu0 0.0
    %3050 = vmatprep.subr.mxu0 0.0
    %3051 = vmatpush2.msra.mxu0 0.0
    %3052 = vmatprep.subr.mxu0 0.0
    %3053 = vmatpush2.msra.mxu0 0.0
    %3054 = vmatprep.subr.mxu0 0.0
    %3055 = vmatpush2.msra.mxu0 0.0
    %3056 = vmatprep.subr.mxu0 0.0
    %3057 = vmatpush2.msra.mxu0 0.0
    %3058 = vmatprep.subr.mxu0 0.0
    %3059 = vmatpush2.msra.mxu0 0.0
    %3060 = vmatprep.subr.mxu0 0.0
    %3061 = vmatpush2.msra.mxu0 0.0
    %3062 = vmatprep.subr.mxu0 0.0
    %3063 = vmatpush2.msra.mxu0 0.0
    %3064 = vmatprep.subr.mxu0 0.0
    %3065 = vmatpush2.msra.mxu0 0.0
    %3066 = vmatprep.subr.mxu0 0.0
    %3067 = vmatpush2.msra.mxu0 0.0
    %3068 = vmatprep.subr.mxu0 0.0
    %3069 = vmatpush2.msra.mxu0 0.0
    %3070 = vmatprep.subr.mxu0 0.0
    %3071 = vmatpush2.msra.mxu0 0.0
    %3072 = vmatprep.subr.mxu0 0.0
    %3073 = vmatpush2.msra.mxu0 0.0
    %3074 = vmatprep.subr.mxu0 0.0
    %3075 = vmatpush2.msra.mxu0 0.0
    %3076 = vmatprep.subr.mxu0 0.0
    %3077 = vmatpush2.msra.mxu0 0.0
    %3078 = vmatprep.subr.mxu0 0.0
    %3079 = vmatpush2.msra.mxu0 0.0
    %3080 = vmatprep.mubr.f32.mxu0 0.0
    %3081 = vmatmul.mubr.f32.gmra.mxu0 %v3014
    %v3082 = vpop.f32.mrf.mxu0
    %v3083 = vadd.f32 0.0, %v3082
    %v3084 = vpop.f32.mrf.mxu0
    %3085 = vdwg.mxu0
    %v3086 = vadd.f32 %v2508, %v3083
    %v3087 = vxor.u32 %v3086, 2147483648
    %v3088 = vmul.f32 %v3087, 1.442695
    %v3089 = vpow.pop %v3088
    %v3090 = vadd.f32 %v3089, 1.0
    %v3091 = vrcp.pop %v3090
    %v3092 = vmul.f32 1.0, %v3091
    %v3093 = vtanh.pop %v3086
    %v3094 = vmul.f32 %v3092, %v3004
    %3096 = vrot.lane.b32.xlu0 %v3093, 64
    %v3097 = vpop.permute.xlu0 %3096
    %v3099 = vmul.f32 %v3092, %v3097
    %3101 = vrot.lane.b32.xlu0 %v3099, 32
    %v3102 = vpop.permute.xlu0 %3101
    %v3104 = vadd.f32 %v3094, %v3102
    %v3105 = vtanh.pop %v3104
    %3107 = vrot.lane.b32.xlu0 %v3105, 64
    %v3108 = vpop.permute.xlu0 %3107
    %v3110 = vmul.f32 %v3092, %v3108
    %3112 = vrot.lane.b32.xlu0 %v3110, 32
    %v3113 = vpop.permute.xlu0 %3112
    %v3114 = vsel %vm566, %v3113, 0
    %3116 = vmatprep.subr.mxu0 0.0
    %3117 = vmatpush1.msra.mxu0 0.0
    %3118 = vmatprep.subr.mxu0 0.0
    %3119 = vmatpush1.msra.mxu0 0.0
    %3120 = vmatprep.subr.mxu0 0.0
    %3121 = vmatpush1.msra.mxu0 0.0
    %3122 = vmatprep.subr.mxu0 0.0
    %3123 = vmatpush1.msra.mxu0 0.0
    %3124 = vmatprep.subr.mxu0 0.0
    %3125 = vmatpush1.msra.mxu0 0.0
    %3126 = vmatprep.subr.mxu0 0.0
    %3127 = vmatpush1.msra.mxu0 0.0
    %3128 = vmatprep.subr.mxu0 0.0
    %3129 = vmatpush1.msra.mxu0 0.0
    %3130 = vmatprep.subr.mxu0 0.0
    %3131 = vmatpush1.msra.mxu0 0.0
    %3132 = vmatprep.subr.mxu0 0.0
    %3133 = vmatpush1.msra.mxu0 0.0
    %3134 = vmatprep.subr.mxu0 0.0
    %3135 = vmatpush1.msra.mxu0 0.0
    %3136 = vmatprep.subr.mxu0 0.0
    %3137 = vmatpush1.msra.mxu0 0.0
    %3138 = vmatprep.subr.mxu0 0.0
    %3139 = vmatpush1.msra.mxu0 0.0
    %3140 = vmatprep.subr.mxu0 0.0
    %3141 = vmatpush1.msra.mxu0 %v2515
    %3142 = vmatprep.subr.mxu0 0.0
    %3143 = vmatpush1.msra.mxu0 %v2514
    %3144 = vmatprep.subr.mxu0 0.0
    %3145 = vmatpush1.msra.mxu0 %v2513
    %3146 = vmatprep.subr.mxu0 0.0
    %3147 = vmatpush1.msra.mxu0 %v2512
    %3148 = vmatprep.subr.mxu0 0.0
    %3149 = vmatpush2.msra.mxu0 0.0
    %3150 = vmatprep.subr.mxu0 0.0
    %3151 = vmatpush2.msra.mxu0 0.0
    %3152 = vmatprep.subr.mxu0 0.0
    %3153 = vmatpush2.msra.mxu0 0.0
    %3154 = vmatprep.subr.mxu0 0.0
    %3155 = vmatpush2.msra.mxu0 0.0
    %3156 = vmatprep.subr.mxu0 0.0
    %3157 = vmatpush2.msra.mxu0 0.0
    %3158 = vmatprep.subr.mxu0 0.0
    %3159 = vmatpush2.msra.mxu0 0.0
    %3160 = vmatprep.subr.mxu0 0.0
    %3161 = vmatpush2.msra.mxu0 0.0
    %3162 = vmatprep.subr.mxu0 0.0
    %3163 = vmatpush2.msra.mxu0 0.0
    %3164 = vmatprep.subr.mxu0 0.0
    %3165 = vmatpush2.msra.mxu0 0.0
    %3166 = vmatprep.subr.mxu0 0.0
    %3167 = vmatpush2.msra.mxu0 0.0
    %3168 = vmatprep.subr.mxu0 0.0
    %3169 = vmatpush2.msra.mxu0 0.0
    %3170 = vmatprep.subr.mxu0 0.0
    %3171 = vmatpush2.msra.mxu0 0.0
    %3172 = vmatprep.subr.mxu0 0.0
    %3173 = vmatpush2.msra.mxu0 0.0
    %3174 = vmatprep.subr.mxu0 0.0
    %3175 = vmatpush2.msra.mxu0 0.0
    %3176 = vmatprep.subr.mxu0 0.0
    %3177 = vmatpush2.msra.mxu0 0.0
    %3178 = vmatprep.subr.mxu0 0.0
    %3179 = vmatpush2.msra.mxu0 0.0
    %3180 = vmatprep.mubr.f32.mxu0 0.0
    %3181 = vmatmul.mubr.f32.gmra.mxu0 %v3114
    %v3182 = vpop.f32.mrf.mxu0
    %v3183 = vadd.f32 0.0, %v3182
    %v3184 = vpop.f32.mrf.mxu0
    %3185 = vdwg.mxu0
    %v3186 = vadd.f32 %v2509, %v3183
    %v3187 = vxor.u32 %v3186, 2147483648
    %v3188 = vmul.f32 %v3187, 1.442695
    %v3189 = vpow.pop %v3188
    %v3190 = vadd.f32 %v3189, 1.0
    %v3191 = vrcp.pop %v3190
    %v3192 = vmul.f32 1.0, %v3191
    %v3193 = vtanh.pop %v3186
    %v3194 = vmul.f32 %v3192, %v3104
    %3196 = vrot.lane.b32.xlu0 %v3193, 64
    %v3197 = vpop.permute.xlu0 %3196
    %v3199 = vmul.f32 %v3192, %v3197
    %3201 = vrot.lane.b32.xlu0 %v3199, 32
    %v3202 = vpop.permute.xlu0 %3201
    %v3204 = vadd.f32 %v3194, %v3202
    %v3205 = vtanh.pop %v3204
    %3207 = vrot.lane.b32.xlu0 %v3205, 64
    %v3208 = vpop.permute.xlu0 %3207
    %v3210 = vmul.f32 %v3192, %v3208
    %3212 = vrot.lane.b32.xlu0 %v3210, 32
    %v3213 = vpop.permute.xlu0 %3212
    %v3214 = vsel %vm566, %v3213, 0
    %3216 = vmatprep.subr.mxu0 0.0
    %3217 = vmatpush1.msra.mxu0 0.0
    %3218 = vmatprep.subr.mxu0 0.0
    %3219 = vmatpush1.msra.mxu0 0.0
    %3220 = vmatprep.subr.mxu0 0.0
    %3221 = vmatpush1.msra.mxu0 0.0
    %3222 = vmatprep.subr.mxu0 0.0
    %3223 = vmatpush1.msra.mxu0 0.0
    %3224 = vmatprep.subr.mxu0 0.0
    %3225 = vmatpush1.msra.mxu0 0.0
    %3226 = vmatprep.subr.mxu0 0.0
    %3227 = vmatpush1.msra.mxu0 0.0
    %3228 = vmatprep.subr.mxu0 0.0
    %3229 = vmatpush1.msra.mxu0 0.0
    %3230 = vmatprep.subr.mxu0 0.0
    %3231 = vmatpush1.msra.mxu0 0.0
    %3232 = vmatprep.subr.mxu0 0.0
    %3233 = vmatpush1.msra.mxu0 0.0
    %3234 = vmatprep.subr.mxu0 0.0
    %3235 = vmatpush1.msra.mxu0 0.0
    %3236 = vmatprep.subr.mxu0 0.0
    %3237 = vmatpush1.msra.mxu0 0.0
    %3238 = vmatprep.subr.mxu0 0.0
    %3239 = vmatpush1.msra.mxu0 0.0
    %3240 = vmatprep.subr.mxu0 0.0
    %3241 = vmatpush1.msra.mxu0 %v2515
    %3242 = vmatprep.subr.mxu0 0.0
    %3243 = vmatpush1.msra.mxu0 %v2514
    %3244 = vmatprep.subr.mxu0 0.0
    %3245 = vmatpush1.msra.mxu0 %v2513
    %3246 = vmatprep.subr.mxu0 0.0
    %3247 = vmatpush1.msra.mxu0 %v2512
    %3248 = vmatprep.subr.mxu0 0.0
    %3249 = vmatpush2.msra.mxu0 0.0
    %3250 = vmatprep.subr.mxu0 0.0
    %3251 = vmatpush2.msra.mxu0 0.0
    %3252 = vmatprep.subr.mxu0 0.0
    %3253 = vmatpush2.msra.mxu0 0.0
    %3254 = vmatprep.subr.mxu0 0.0
    %3255 = vmatpush2.msra.mxu0 0.0
    %3256 = vmatprep.subr.mxu0 0.0
    %3257 = vmatpush2.msra.mxu0 0.0
    %3258 = vmatprep.subr.mxu0 0.0
    %3259 = vmatpush2.msra.mxu0 0.0
    %3260 = vmatprep.subr.mxu0 0.0
    %3261 = vmatpush2.msra.mxu0 0.0
    %3262 = vmatprep.subr.mxu0 0.0
    %3263 = vmatpush2.msra.mxu0 0.0
    %3264 = vmatprep.subr.mxu0 0.0
    %3265 = vmatpush2.msra.mxu0 0.0
    %3266 = vmatprep.subr.mxu0 0.0
    %3267 = vmatpush2.msra.mxu0 0.0
    %3268 = vmatprep.subr.mxu0 0.0
    %3269 = vmatpush2.msra.mxu0 0.0
    %3270 = vmatprep.subr.mxu0 0.0
    %3271 = vmatpush2.msra.mxu0 0.0
    %3272 = vmatprep.subr.mxu0 0.0
    %3273 = vmatpush2.msra.mxu0 0.0
    %3274 = vmatprep.subr.mxu0 0.0
    %3275 = vmatpush2.msra.mxu0 0.0
    %3276 = vmatprep.subr.mxu0 0.0
    %3277 = vmatpush2.msra.mxu0 0.0
    %3278 = vmatprep.subr.mxu0 0.0
    %3279 = vmatpush2.msra.mxu0 0.0
    %3280 = vmatprep.mubr.f32.mxu0 0.0
    %3281 = vmatmul.mubr.f32.gmra.mxu0 %v3214
    %v3282 = vpop.f32.mrf.mxu0
    %v3283 = vadd.f32 0.0, %v3282
    %v3284 = vpop.f32.mrf.mxu0
    %3285 = vdwg.mxu0
    %v3286 = vadd.f32 %v2510, %v3283
    %v3287 = vxor.u32 %v3286, 2147483648
    %v3288 = vmul.f32 %v3287, 1.442695
    %v3289 = vpow.pop %v3288
    %v3290 = vadd.f32 %v3289, 1.0
    %v3291 = vrcp.pop %v3290
    %v3292 = vmul.f32 1.0, %v3291
    %v3293 = vtanh.pop %v3286
    %v3294 = vmul.f32 %v3292, %v3204
    %3296 = vrot.lane.b32.xlu0 %v3293, 64
    %v3297 = vpop.permute.xlu0 %3296
    %v3299 = vmul.f32 %v3292, %v3297
    %3301 = vrot.lane.b32.xlu0 %v3299, 32
    %v3302 = vpop.permute.xlu0 %3301
    %v3304 = vadd.f32 %v3294, %v3302
    %v3305 = vtanh.pop %v3304
    %3307 = vrot.lane.b32.xlu0 %v3305, 64
    %v3308 = vpop.permute.xlu0 %3307
    %v3310 = vmul.f32 %v3292, %v3308
    %v3311 = vxor.u32 %v2511, 2147483648
    %v3312 = vmul.f32 %v3311, 1.442695
    %v3313 = vpow.pop %v3312
    %v3314 = vadd.f32 %v3313, 1.0
    %v3315 = vrcp.pop %v3314
    %v3316 = vmul.f32 1.0, %v3315
    %v3317 = vtanh.pop %v2511
    %v3318 = vmul.f32 %v3316, 0.0
    %3320 = vrot.lane.b32.xlu0 %v3317, 64
    %v3321 = vpop.permute.xlu0 %3320
    %v3323 = vmul.f32 %v3316, %v3321
    %3325 = vrot.lane.b32.xlu0 %v3323, 32
    %v3326 = vpop.permute.xlu0 %3325
    %v3328 = vadd.f32 %v3318, %v3326
    %v3329 = vtanh.pop %v3328
    %3331 = vrot.lane.b32.xlu0 %v3329, 64
    %v3332 = vpop.permute.xlu0 %3331
    %v3334 = vmul.f32 %v3316, %v3332
    %v3335 = vld [vmem:[#allocation4 + $0x168] sm:$0xff]
    %v3336 = vld [vmem:[#allocation4 + $0x170] sm:$0xff]
    %v3337 = vld [vmem:[#allocation4 + $0x178] sm:$0xff]
    %v3338 = vld [vmem:[#allocation4 + $0x180] sm:$0xff]
    %v3339 = vld [vmem:[#allocation4 + $0x188] sm:$0xff]
    %v3340 = vld [vmem:[#allocation4 + $0x190] sm:$0xff]
    %v3341 = vld [vmem:[#allocation4 + $0x198] sm:$0xff]
    %v3342 = vld [vmem:[#allocation4 + $0x1a0] sm:$0xff]
    %3344 = vrot.lane.b32.xlu0 %v3334, 32
    %v3345 = vpop.permute.xlu0 %3344
    %v3346 = vsel %vm566, %v3345, 0
    %3348 = vmatprep.subr.mxu0 0.0
    %3349 = vmatpush1.msra.mxu0 0.0
    %3350 = vmatprep.subr.mxu0 0.0
    %3351 = vmatpush1.msra.mxu0 0.0
    %3352 = vmatprep.subr.mxu0 0.0
    %3353 = vmatpush1.msra.mxu0 0.0
    %3354 = vmatprep.subr.mxu0 0.0
    %3355 = vmatpush1.msra.mxu0 0.0
    %3356 = vmatprep.subr.mxu0 0.0
    %3357 = vmatpush1.msra.mxu0 0.0
    %3358 = vmatprep.subr.mxu0 0.0
    %3359 = vmatpush1.msra.mxu0 0.0
    %3360 = vmatprep.subr.mxu0 0.0
    %3361 = vmatpush1.msra.mxu0 0.0
    %3362 = vmatprep.subr.mxu0 0.0
    %3363 = vmatpush1.msra.mxu0 0.0
    %3364 = vmatprep.subr.mxu0 0.0
    %3365 = vmatpush1.msra.mxu0 0.0
    %3366 = vmatprep.subr.mxu0 0.0
    %3367 = vmatpush1.msra.mxu0 0.0
    %3368 = vmatprep.subr.mxu0 0.0
    %3369 = vmatpush1.msra.mxu0 0.0
    %3370 = vmatprep.subr.mxu0 0.0
    %3371 = vmatpush1.msra.mxu0 0.0
    %3372 = vmatprep.subr.mxu0 0.0
    %3373 = vmatpush1.msra.mxu0 %v3342
    %3374 = vmatprep.subr.mxu0 0.0
    %3375 = vmatpush1.msra.mxu0 %v3341
    %3376 = vmatprep.subr.mxu0 0.0
    %3377 = vmatpush1.msra.mxu0 %v3340
    %3378 = vmatprep.subr.mxu0 0.0
    %3379 = vmatpush1.msra.mxu0 %v3339
    %3380 = vmatprep.subr.mxu0 0.0
    %3381 = vmatpush2.msra.mxu0 0.0
    %3382 = vmatprep.subr.mxu0 0.0
    %3383 = vmatpush2.msra.mxu0 0.0
    %3384 = vmatprep.subr.mxu0 0.0
    %3385 = vmatpush2.msra.mxu0 0.0
    %3386 = vmatprep.subr.mxu0 0.0
    %3387 = vmatpush2.msra.mxu0 0.0
    %3388 = vmatprep.subr.mxu0 0.0
    %3389 = vmatpush2.msra.mxu0 0.0
    %3390 = vmatprep.subr.mxu0 0.0
    %3391 = vmatpush2.msra.mxu0 0.0
    %3392 = vmatprep.subr.mxu0 0.0
    %3393 = vmatpush2.msra.mxu0 0.0
    %3394 = vmatprep.subr.mxu0 0.0
    %3395 = vmatpush2.msra.mxu0 0.0
    %3396 = vmatprep.subr.mxu0 0.0
    %3397 = vmatpush2.msra.mxu0 0.0
    %3398 = vmatprep.subr.mxu0 0.0
    %3399 = vmatpush2.msra.mxu0 0.0
    %3400 = vmatprep.subr.mxu0 0.0
    %3401 = vmatpush2.msra.mxu0 0.0
    %3402 = vmatprep.subr.mxu0 0.0
    %3403 = vmatpush2.msra.mxu0 0.0
    %3404 = vmatprep.subr.mxu0 0.0
    %3405 = vmatpush2.msra.mxu0 0.0
    %3406 = vmatprep.subr.mxu0 0.0
    %3407 = vmatpush2.msra.mxu0 0.0
    %3408 = vmatprep.subr.mxu0 0.0
    %3409 = vmatpush2.msra.mxu0 0.0
    %3410 = vmatprep.subr.mxu0 0.0
    %3411 = vmatpush2.msra.mxu0 0.0
    %3412 = vmatprep.mubr.f32.mxu0 0.0
    %3413 = vmatmul.mubr.f32.gmra.mxu0 %v3346
    %v3414 = vpop.f32.mrf.mxu0
    %v3415 = vadd.f32 0.0, %v3414
    %v3416 = vpop.f32.mrf.mxu0
    %3417 = vdwg.mxu0
    %3419 = vrot.lane.b32.xlu0 %v3310, 32
    %v3420 = vpop.permute.xlu0 %3419
    %v3421 = vsel %vm566, %v3420, 0
    %3423 = vmatprep.subr.mxu0 0.0
    %3424 = vmatpush1.msra.mxu0 0.0
    %3425 = vmatprep.subr.mxu0 0.0
    %3426 = vmatpush1.msra.mxu0 0.0
    %3427 = vmatprep.subr.mxu0 0.0
    %3428 = vmatpush1.msra.mxu0 0.0
    %3429 = vmatprep.subr.mxu0 0.0
    %3430 = vmatpush1.msra.mxu0 0.0
    %3431 = vmatprep.subr.mxu0 0.0
    %3432 = vmatpush1.msra.mxu0 0.0
    %3433 = vmatprep.subr.mxu0 0.0
    %3434 = vmatpush1.msra.mxu0 0.0
    %3435 = vmatprep.subr.mxu0 0.0
    %3436 = vmatpush1.msra.mxu0 0.0
    %3437 = vmatprep.subr.mxu0 0.0
    %3438 = vmatpush1.msra.mxu0 0.0
    %3439 = vmatprep.subr.mxu0 0.0
    %3440 = vmatpush1.msra.mxu0 0.0
    %3441 = vmatprep.subr.mxu0 0.0
    %3442 = vmatpush1.msra.mxu0 0.0
    %3443 = vmatprep.subr.mxu0 0.0
    %3444 = vmatpush1.msra.mxu0 0.0
    %3445 = vmatprep.subr.mxu0 0.0
    %3446 = vmatpush1.msra.mxu0 0.0
    %3447 = vmatprep.subr.mxu0 0.0
    %3448 = vmatpush1.msra.mxu0 %v3338
    %3449 = vmatprep.subr.mxu0 0.0
    %3450 = vmatpush1.msra.mxu0 %v3337
    %3451 = vmatprep.subr.mxu0 0.0
    %3452 = vmatpush1.msra.mxu0 %v3336
    %3453 = vmatprep.subr.mxu0 0.0
    %3454 = vmatpush1.msra.mxu0 %v3335
    %3455 = vmatprep.subr.mxu0 0.0
    %3456 = vmatpush2.msra.mxu0 0.0
    %3457 = vmatprep.subr.mxu0 0.0
    %3458 = vmatpush2.msra.mxu0 0.0
    %3459 = vmatprep.subr.mxu0 0.0
    %3460 = vmatpush2.msra.mxu0 0.0
    %3461 = vmatprep.subr.mxu0 0.0
    %3462 = vmatpush2.msra.mxu0 0.0
    %3463 = vmatprep.subr.mxu0 0.0
    %3464 = vmatpush2.msra.mxu0 0.0
    %3465 = vmatprep.subr.mxu0 0.0
    %3466 = vmatpush2.msra.mxu0 0.0
    %3467 = vmatprep.subr.mxu0 0.0
    %3468 = vmatpush2.msra.mxu0 0.0
    %3469 = vmatprep.subr.mxu0 0.0
    %3470 = vmatpush2.msra.mxu0 0.0
    %3471 = vmatprep.subr.mxu0 0.0
    %3472 = vmatpush2.msra.mxu0 0.0
    %3473 = vmatprep.subr.mxu0 0.0
    %3474 = vmatpush2.msra.mxu0 0.0
    %3475 = vmatprep.subr.mxu0 0.0
    %3476 = vmatpush2.msra.mxu0 0.0
    %3477 = vmatprep.subr.mxu0 0.0
    %3478 = vmatpush2.msra.mxu0 0.0
    %3479 = vmatprep.subr.mxu0 0.0
    %3480 = vmatpush2.msra.mxu0 0.0
    %3481 = vmatprep.subr.mxu0 0.0
    %3482 = vmatpush2.msra.mxu0 0.0
    %3483 = vmatprep.subr.mxu0 0.0
    %3484 = vmatpush2.msra.mxu0 0.0
    %3485 = vmatprep.subr.mxu0 0.0
    %3486 = vmatpush2.msra.mxu0 0.0
    %3487 = vmatprep.mubr.f32.mxu0 0.0
    %3488 = vmatmul.mubr.f32.gmra.mxu0 %v3421
    %v3489 = vpop.f32.mrf.mxu0
    %v3490 = vadd.f32 %v3415, %v3489
    %v3491 = vpop.f32.mrf.mxu0
    %3492 = vdwg.mxu0
    %v3493 = vld [vmem:[#allocation4 + $0x1a8] sm:$0x1]
    %v3494 = vlaneseq
    %v3495 = vshrl.u32 %v3494, 7
    %v3496 = vsub.s32 0, %v3495
    %v3497 = vrot.slane %v3493, %v3496
    %v3498 = vadd.f32 %v3490, %v3497
    %v3499 = vmax.f32 %v3498, 0.0
    %v3500 = vld [vmem:[#allocation4 + $0x1b0] sm:$0xff]
    %v3501 = vld [vmem:[#allocation4 + $0x1b8] sm:$0xff]
    %v3502 = vld [vmem:[#allocation4 + $0x1c0] sm:$0xff]
    %v3503 = vld [vmem:[#allocation4 + $0x1c8] sm:$0xff]
    %v3504 = vld [vmem:[#allocation4 + $0x1d0] sm:$0xff]
    %v3505 = vld [vmem:[#allocation4 + $0x1d8] sm:$0xff]
    %v3506 = vld [vmem:[#allocation4 + $0x1e0] sm:$0xff]
    %v3507 = vld [vmem:[#allocation4 + $0x1e8] sm:$0xff]
    %v3508 = vld [vmem:[#allocation4 + $0x1f0] sm:$0xff]
    %v3509 = vld [vmem:[#allocation4 + $0x1f8] sm:$0xff]
    %v3510 = vld [vmem:[#allocation4 + $0x200] sm:$0xff]
    %v3511 = vld [vmem:[#allocation4 + $0x208] sm:$0xff]
    %v3512 = vld [vmem:[#allocation4 + $0x210] sm:$0xff]
    %v3513 = vld [vmem:[#allocation4 + $0x218] sm:$0xff]
    %v3514 = vld [vmem:[#allocation4 + $0x220] sm:$0xff]
    %v3515 = vld [vmem:[#allocation4 + $0x228] sm:$0xff]
    %v3516 = vld [vmem:[#allocation4 + $0x230] sm:$0x1]
    %v3517 = vlaneseq
    %v3518 = vshrl.u32 %v3517, 7
    %v3519 = vsub.s32 0, %v3518
    %v3520 = vrot.slane %v3516, %v3519
    %3521 = vmatprep.subr.mxu0 0.0
    %3522 = vmatpush1.msra.mxu0 %v3515
    %3523 = vmatprep.subr.mxu0 0.0
    %3524 = vmatpush1.msra.mxu0 %v3514
    %3525 = vmatprep.subr.mxu0 0.0
    %3526 = vmatpush1.msra.mxu0 %v3513
    %3527 = vmatprep.subr.mxu0 0.0
    %3528 = vmatpush1.msra.mxu0 %v3512
    %3529 = vmatprep.subr.mxu0 0.0
    %3530 = vmatpush1.msra.mxu0 %v3511
    %3531 = vmatprep.subr.mxu0 0.0
    %3532 = vmatpush1.msra.mxu0 %v3510
    %3533 = vmatprep.subr.mxu0 0.0
    %3534 = vmatpush1.msra.mxu0 %v3509
    %3535 = vmatprep.subr.mxu0 0.0
    %3536 = vmatpush1.msra.mxu0 %v3508
    %3537 = vmatprep.subr.mxu0 0.0
    %3538 = vmatpush1.msra.mxu0 %v3507
    %3539 = vmatprep.subr.mxu0 0.0
    %3540 = vmatpush1.msra.mxu0 %v3506
    %3541 = vmatprep.subr.mxu0 0.0
    %3542 = vmatpush1.msra.mxu0 %v3505
    %3543 = vmatprep.subr.mxu0 0.0
    %3544 = vmatpush1.msra.mxu0 %v3504
    %3545 = vmatprep.subr.mxu0 0.0
    %3546 = vmatpush1.msra.mxu0 %v3503
    %3547 = vmatprep.subr.mxu0 0.0
    %3548 = vmatpush1.msra.mxu0 %v3502
    %3549 = vmatprep.subr.mxu0 0.0
    %3550 = vmatpush1.msra.mxu0 %v3501
    %3551 = vmatprep.subr.mxu0 0.0
    %3552 = vmatpush1.msra.mxu0 %v3500
    %3553 = vmatprep.subr.mxu0 0.0
    %3554 = vmatpush2.msra.mxu0 0.0
    %3555 = vmatprep.subr.mxu0 0.0
    %3556 = vmatpush2.msra.mxu0 0.0
    %3557 = vmatprep.subr.mxu0 0.0
    %3558 = vmatpush2.msra.mxu0 0.0
    %3559 = vmatprep.subr.mxu0 0.0
    %3560 = vmatpush2.msra.mxu0 0.0
    %3561 = vmatprep.subr.mxu0 0.0
    %3562 = vmatpush2.msra.mxu0 0.0
    %3563 = vmatprep.subr.mxu0 0.0
    %3564 = vmatpush2.msra.mxu0 0.0
    %3565 = vmatprep.subr.mxu0 0.0
    %3566 = vmatpush2.msra.mxu0 0.0
    %3567 = vmatprep.subr.mxu0 0.0
    %3568 = vmatpush2.msra.mxu0 0.0
    %3569 = vmatprep.subr.mxu0 0.0
    %3570 = vmatpush2.msra.mxu0 0.0
    %3571 = vmatprep.subr.mxu0 0.0
    %3572 = vmatpush2.msra.mxu0 0.0
    %3573 = vmatprep.subr.mxu0 0.0
    %3574 = vmatpush2.msra.mxu0 0.0
    %3575 = vmatprep.subr.mxu0 0.0
    %3576 = vmatpush2.msra.mxu0 0.0
    %3577 = vmatprep.subr.mxu0 0.0
    %3578 = vmatpush2.msra.mxu0 0.0
    %3579 = vmatprep.subr.mxu0 0.0
    %3580 = vmatpush2.msra.mxu0 0.0
    %3581 = vmatprep.subr.mxu0 0.0
    %3582 = vmatpush2.msra.mxu0 0.0
    %3583 = vmatprep.subr.mxu0 0.0
    %3584 = vmatpush2.msra.mxu0 0.0
    %3585 = vmatprep.mubr.f32.mxu0 0.0
    %3586 = vmatmul.mubr.f32.gmra.mxu0 %v3499
    %v3587 = vpop.f32.mrf.mxu0
    %v3588 = vadd.f32 %v3520, %v3587
    %v3589 = vpop.f32.mrf.mxu0
    %3590 = vdwg.mxu0
    %3591 = vst [vmem:[%s3] sm:$0xff] %v3588
    // Predicated region
    $region18: #{keypoint_lstm_forward.1} parent=1 // pred_check
      _
    $region19: #{keypoint_lstm_forward.1} parent=1 // pred_check_branch
      %3593 = sbr.rel (0) target = $region21
    $region20: #{keypoint_lstm_forward.1} parent=1 // pred_region
      _
    $region21: #{keypoint_lstm_forward.1} parent=1 // pred_fallthru
      _
    // Predicated region
    $region22: #{keypoint_lstm_forward.1} parent=1 // pred_check
      _
    $region23: #{keypoint_lstm_forward.1} parent=1 // pred_check_branch
      %3595 = sbr.rel (0) target = $region25
    $region24: #{keypoint_lstm_forward.1} parent=1 // pred_region
      _
    $region25: #{keypoint_lstm_forward.1} parent=1 // pred_fallthru
      _
    %3596 = vsyncpa [#allocation5], 1

</llo_original>
